<compile_context>
chip_gen: v6e
topology: v6e:2x2x1
jax: 0.10.0
libtpu: 0.0.40
codegen_flags: <defaults>
</compile_context>

<pallas_src>
import functools

import numpy as np
import jax
import jax.numpy as jnp
from jax.experimental import pallas as pl
from jax.experimental.pallas import tpu as pltpu

LANE = 128
VMEM_LIMIT = 32 * 1024 * 1024   # <= 48 MiB so tiles also fit v7x's 64 MiB VMEM


def _round_up(x, m):
    return ((x + m - 1) // m) * m


def _pick_tile_n(n_pad, preferred=512):
    """Row (node) tile: largest multiple of 128 dividing n_pad, preferring
    >=2 row programs so both v7x TensorCores get work."""
    for t in (preferred, 256, 128):
        if n_pad % t == 0 and n_pad // t >= 2:
            return t
    for t in (preferred, 256, 128):
        if n_pad % t == 0:
            return t
    return n_pad


def _pick_tile_k(n_pad, preferred=2048):
    """Reduction (node) tile for the conv kernels; n_pad is a multiple of 128."""
    for t in (preferred, 1024, 512, 256, 128):
        if n_pad % t == 0:
            return t
    return n_pad


# ---------------------------------------------------------------------------
# Kernel 1: Linear (+ fused ReLU)   y = relu(x @ W + b)    (bf16 in / bf16 out)
# ---------------------------------------------------------------------------
def _linear_kernel(x_ref, w_ref, b_ref, o_ref, *, relu):
    y = jnp.dot(x_ref[...], w_ref[...], preferred_element_type=jnp.float32)
    y = y + b_ref[...]
    if relu:
        y = jnp.maximum(y, 0.0)
    o_ref[...] = y.astype(o_ref.dtype)


def linear(x, w, b, *, relu=False, tile_n, out_dtype=jnp.bfloat16):
    n, cin = x.shape
    cout = w.shape[1]
    return pl.pallas_call(
        functools.partial(_linear_kernel, relu=relu),
        out_shape=jax.ShapeDtypeStruct((n, cout), out_dtype),
        grid=(n // tile_n,),
        in_specs=[
            pl.BlockSpec((tile_n, cin), lambda i: (i, 0)),
            pl.BlockSpec((cin, cout), lambda i: (0, 0)),
            pl.BlockSpec((1, cout), lambda i: (0, 0)),
        ],
        out_specs=pl.BlockSpec((tile_n, cout), lambda i: (i, 0)),
        compiler_params=pltpu.CompilerParams(
            dimension_semantics=("parallel",),
            vmem_limit_bytes=VMEM_LIMIT,
        ),
    )(x, w, b.reshape(1, cout))


# ---------------------------------------------------------------------------
# Kernel 2: H2GCNConv + BatchNorm (eval) fused, K-tiled over the node dim.
#   adj_pair : [2, N, N] bf16   (adj, adj2)
#   x        : [N, C]    bf16
#   out      : [N, 2C]   bf16   (cols [0:C] = BN(adj@x), cols [C:2C] = BN(adj2@x))
# BN is applied as precomputed scale/shift (host side): y = acc * scale + shift
# ---------------------------------------------------------------------------
def _conv_bn_kernel(adjs_ref, x_ref, scale_ref, shift_ref, o_ref, acc_ref):
    k = pl.program_id(1)

    @pl.when(k == 0)
    def _init():
        acc_ref[...] = jnp.zeros_like(acc_ref)

    xb = x_ref[...]                                   # bf16 (tile_k, C)
    acc_ref[0] += jnp.dot(adjs_ref[0], xb, preferred_element_type=jnp.float32)
    acc_ref[1] += jnp.dot(adjs_ref[1], xb, preferred_element_type=jnp.float32)

    @pl.when(k == pl.num_programs(1) - 1)
    def _finalize():
        c = acc_ref.shape[2]
        o_ref[:, :c] = (acc_ref[0] * scale_ref[:, :c] + shift_ref[:, :c]).astype(o_ref.dtype)
        o_ref[:, c:] = (acc_ref[1] * scale_ref[:, c:] + shift_ref[:, c:]).astype(o_ref.dtype)


def h2gcn_conv_bn(x, adj_pair, bn_scale, bn_shift, *, tile_n, tile_k,
                  out_dtype=jnp.bfloat16):
    n, c = x.shape
    assert n % tile_n == 0 and n % tile_k == 0
    return pl.pallas_call(
        _conv_bn_kernel,
        out_shape=jax.ShapeDtypeStruct((n, 2 * c), out_dtype),
        grid=(n // tile_n, n // tile_k),
        in_specs=[
            pl.BlockSpec((2, tile_n, tile_k), lambda i, k: (0, i, k)),  # adj / adj2 pair
            pl.BlockSpec((tile_k, c), lambda i, k: (k, 0)),             # x (reduction stream)
            pl.BlockSpec((1, 2 * c), lambda i, k: (0, 0)),              # BN scale
            pl.BlockSpec((1, 2 * c), lambda i, k: (0, 0)),              # BN shift
        ],
        out_specs=pl.BlockSpec((tile_n, 2 * c), lambda i, k: (i, 0)),
        scratch_shapes=[pltpu.VMEM((2, tile_n, c), jnp.float32)],
        compiler_params=pltpu.CompilerParams(
            dimension_semantics=("parallel", "arbitrary"),
            vmem_limit_bytes=VMEM_LIMIT,
        ),
    )(adj_pair, x, bn_scale.reshape(1, 2 * c), bn_shift.reshape(1, 2 * c))


# ---------------------------------------------------------------------------
# Kernel 3: second H2GCNConv + JumpingKnowledge('cat') + final Linear, fused.
#   out = x @ W0 + x1 @ W1 + (adj @ x1) @ W2a + (adj2 @ x1) @ W2b + b
# (W0/W1/W2a/W2b are row-splits of the final projection weight; the [N, 7H]
#  concat and x2 are never written to HBM.)
# ---------------------------------------------------------------------------
def _conv_final_kernel(adjs_ref, x1k_ref, x0_ref, x1i_ref,
                       w0_ref, w1_ref, w2a_ref, w2b_ref, b_ref,
                       o_ref, acc_ref):
    k = pl.program_id(1)

    @pl.when(k == 0)
    def _init():
        acc_ref[...] = jnp.zeros_like(acc_ref)

    xb = x1k_ref[...]                                 # bf16 (tile_k, C1)
    acc_ref[0] += jnp.dot(adjs_ref[0], xb, preferred_element_type=jnp.float32)
    acc_ref[1] += jnp.dot(adjs_ref[1], xb, preferred_element_type=jnp.float32)

    @pl.when(k == pl.num_programs(1) - 1)
    def _finalize():
        out = jnp.dot(x0_ref[...], w0_ref[...], preferred_element_type=jnp.float32)
        out = out + jnp.dot(x1i_ref[...], w1_ref[...], preferred_element_type=jnp.float32)
        out = out + jnp.dot(acc_ref[0].astype(jnp.bfloat16), w2a_ref[...],
                            preferred_element_type=jnp.float32)
        out = out + jnp.dot(acc_ref[1].astype(jnp.bfloat16), w2b_ref[...],
                            preferred_element_type=jnp.float32)
        out = out + b_ref[...]
        o_ref[...] = out.astype(o_ref.dtype)


def h2gcn_conv_final(x1, x0, adj_pair, w0, w1, w2a, w2b, b_final, *,
                     tile_n, tile_k):
    n, c1 = x1.shape
    c0 = x0.shape[1]
    out_pad = w0.shape[1]
    assert n % tile_n == 0 and n % tile_k == 0
    return pl.pallas_call(
        _conv_final_kernel,
        out_shape=jax.ShapeDtypeStruct((n, out_pad), jnp.float32),
        grid=(n // tile_n, n // tile_k),
        in_specs=[
            pl.BlockSpec((2, tile_n, tile_k), lambda i, k: (0, i, k)),  # adj / adj2 pair
            pl.BlockSpec((tile_k, c1), lambda i, k: (k, 0)),            # x1 (reduction stream)
            pl.BlockSpec((tile_n, c0), lambda i, k: (i, 0)),            # x  row tile (direct term)
            pl.BlockSpec((tile_n, c1), lambda i, k: (i, 0)),            # x1 row tile (direct term)
            pl.BlockSpec((c0, out_pad), lambda i, k: (0, 0)),           # W0
            pl.BlockSpec((c1, out_pad), lambda i, k: (0, 0)),           # W1
            pl.BlockSpec((c1, out_pad), lambda i, k: (0, 0)),           # W2a
            pl.BlockSpec((c1, out_pad), lambda i, k: (0, 0)),           # W2b
            pl.BlockSpec((1, out_pad), lambda i, k: (0, 0)),            # bias
        ],
        out_specs=pl.BlockSpec((tile_n, out_pad), lambda i, k: (i, 0)),
        scratch_shapes=[pltpu.VMEM((2, tile_n, c1), jnp.float32)],
        compiler_params=pltpu.CompilerParams(
            dimension_semantics=("parallel", "arbitrary"),
            vmem_limit_bytes=VMEM_LIMIT,
        ),
    )(adj_pair, x1, x0, x1, w0, w1, w2a, w2b, b_final.reshape(1, out_pad))


# ---------------------------------------------------------------------------
# Graph preprocessing (replicates H2GCN.init_adj; plain numpy, not the hot path)
# ---------------------------------------------------------------------------
def build_normalized_adjs(edge_index, n):
    row, col = edge_index
    adj = np.zeros((n, n), dtype=np.float32)
    adj[col, row] = 1.0          # SparseTensor(row=col, col=row, value=None)
    np.fill_diagonal(adj, 0.0)   # remove_diag

    adj2 = adj @ adj             # two-hop
    np.fill_diagonal(adj2, 0.0)  # remove_diag
    adj2 = adj2 - adj            # strict two-hop
    adj2 = (adj2 > 0).astype(np.float32)

    def gcn_norm(m):             # D^{-1/2} A D^{-1/2}, no self-loops
        deg = m.sum(axis=1)
        dinv = np.where(deg > 0, deg ** -0.5, 0.0).astype(np.float32)
        return (dinv[:, None] * m) * dinv[None, :]

    return gcn_norm(adj), gcn_norm(adj2)


# ---------------------------------------------------------------------------
# Parameter / adjacency padding + packing (one-time, numpy, off the hot path)
# ---------------------------------------------------------------------------
def _pad_segments_1d(v, seg_real, seg_pad, fill):
    v = np.asarray(v, np.float32)
    nseg = v.shape[0] // seg_real
    out = np.full((nseg, seg_pad), fill, np.float32)
    out[:, :seg_real] = v.reshape(nseg, seg_real)
    return out.reshape(nseg * seg_pad)


def _pad_segments_rows(w, seg_real, seg_pad, cols_pad):
    w = np.asarray(w, np.float32)
    nseg = w.shape[0] // seg_real
    out = np.zeros((nseg, seg_pad, cols_pad), np.float32)
    out[:, :seg_real, :w.shape[1]] = w.reshape(nseg, seg_real, w.shape[1])
    return out.reshape(nseg * seg_pad, cols_pad)


def prepare_h2gcn(params, adj_np, adj2_np, *, n, in_c, hid, out_c, eps=1e-5):
    n_pad = _round_up(n, LANE)
    in_pad = _round_up(in_c, LANE)
    h_pad = _round_up(hid, LANE)
    out_pad = _round_up(out_c, LANE)

    # zero-pad adjacencies; tile-independent [2, N, N] layout, bf16
    adj_pair = np.zeros((2, n_pad, n_pad), np.float32)
    adj_pair[0, :n, :n] = adj_np
    adj_pair[1, :n, :n] = adj2_np

    w_embed = np.zeros((in_pad, h_pad), np.float32)
    w_embed[:in_c, :hid] = np.asarray(params["w_embed"])
    b_embed = np.zeros((h_pad,), np.float32)
    b_embed[:hid] = np.asarray(params["b_embed"])

    # BatchNorm (eval): precompute scale = gamma * rsqrt(var+eps), shift = beta - mean*scale.
    # 2*hid real channels -> two hid-segments placed at offsets 0, h_pad; padded
    # channels get scale=0, shift=0 so padded columns of x1 stay exactly zero.
    g = np.asarray(params["bn0_gamma"], np.float32)
    b_ = np.asarray(params["bn0_beta"], np.float32)
    m = np.asarray(params["bn0_mean"], np.float32)
    v = np.asarray(params["bn0_var"], np.float32)
    scale = g / np.sqrt(v + eps)
    shift = b_ - m * scale
    bn_scale = _pad_segments_1d(scale, hid, h_pad, 0.0)
    bn_shift = _pad_segments_1d(shift, hid, h_pad, 0.0)

    # final projection weight split row-wise: rows [0:H]->x, [H:3H]->x1,
    # [3H:5H]->adj@x1, [5H:7H]->adj2@x1; repack to the padded column layout.
    wf = np.asarray(params["w_final"], np.float32)
    w0 = _pad_segments_rows(wf[0:hid], hid, h_pad, out_pad)
    w1 = _pad_segments_rows(wf[hid:3 * hid], hid, h_pad, out_pad)
    w2a = _pad_segments_rows(wf[3 * hid:5 * hid], hid, h_pad, out_pad)
    w2b = _pad_segments_rows(wf[5 * hid:7 * hid], hid, h_pad, out_pad)
    b_final = np.zeros((out_pad,), np.float32)
    b_final[:out_c] = np.asarray(params["b_final"])

    arrays = dict(
        adj_pair=jnp.asarray(adj_pair, dtype=jnp.bfloat16),
        w_embed=jnp.asarray(w_embed, dtype=jnp.bfloat16),
        b_embed=jnp.asarray(b_embed),
        bn_scale=jnp.asarray(bn_scale), bn_shift=jnp.asarray(bn_shift),
        w0=jnp.asarray(w0, dtype=jnp.bfloat16), w1=jnp.asarray(w1, dtype=jnp.bfloat16),
        w2a=jnp.asarray(w2a, dtype=jnp.bfloat16), w2b=jnp.asarray(w2b, dtype=jnp.bfloat16),
        b_final=jnp.asarray(b_final),
    )
    dims = dict(n_pad=n_pad, in_pad=in_pad, h_pad=h_pad, out_pad=out_pad)
    return arrays, dims


# ---------------------------------------------------------------------------
# Full forward (eval mode; dropout = identity).  3 pallas_calls total.
# ---------------------------------------------------------------------------
def h2gcn_forward(node_feat_p, prep, *, tile_n, tile_k):
    # feature_embed (1-layer MLP) + ReLU  -> bf16 activations
    x = linear(node_feat_p, prep["w_embed"], prep["b_embed"], relu=True, tile_n=tile_n)
    # conv0 + BatchNorm1d (eval, running stats) fused -> bf16 activations
    x1 = h2gcn_conv_bn(x, prep["adj_pair"], prep["bn_scale"], prep["bn_shift"],
                       tile_n=tile_n, tile_k=tile_k)
    # conv1 + JumpingKnowledge('cat') + final_project fused
    out = h2gcn_conv_final(x1, x, prep["adj_pair"], prep["w0"], prep["w1"],
                           prep["w2a"], prep["w2b"], prep["b_final"],
                           tile_n=tile_n, tile_k=tile_k)
    return out


# ---------------------------------------------------------------------------
# Pure-JAX reference (unpadded, f32) for correctness checking
# ---------------------------------------------------------------------------
def h2gcn_reference(node_feat, adj, adj2, params, eps=1e-5):
    x = jnp.maximum(node_feat @ params["w_embed"] + params["b_embed"], 0.0)
    x1 = jnp.concatenate([adj @ x, adj2 @ x], axis=1)
    inv = jax.lax.rsqrt(params["bn0_var"] + eps)
    x1 = (x1 - params["bn0_mean"]) * inv * params["bn0_gamma"] + params["bn0_beta"]
    x2 = jnp.concatenate([adj @ x1, adj2 @ x1], axis=1)
    h = jnp.concatenate([x, x1, x2], axis=1)
    return h @ params["w_final"] + params["b_final"]


if __name__ == "__main__":
    # Small, deterministic problem: N=64 nodes, in=16, hidden=32, out=8, num_layers=2
    N, IN_C, HID, OUT_C = 64, 16, 32, 8
    NUM_LAYERS = 2
    LAST_DIM = HID * (2 ** (NUM_LAYERS + 1) - 1)  # = 7 * HID = 224

    key = jax.random.PRNGKey(0)
    (k_feat, k_er, k_ec, k_we, k_be, k_g, k_b, k_m, k_v, k_wf, k_bf) = jax.random.split(key, 11)

    node_feat = jax.random.normal(k_feat, (N, IN_C), dtype=jnp.float32)

    # random edge_index (directed pairs), preprocessed into dense normalized adjacencies
    rows = np.asarray(jax.random.randint(k_er, (256,), 0, N))
    cols = np.asarray(jax.random.randint(k_ec, (256,), 0, N))
    adj_np, adj2_np = build_normalized_adjs((rows, cols), N)

    params = {
        "w_embed": 0.1 * jax.random.normal(k_we, (IN_C, HID), dtype=jnp.float32),
        "b_embed": 0.1 * jax.random.normal(k_be, (HID,), dtype=jnp.float32),
        "bn0_gamma": 1.0 + 0.1 * jax.random.normal(k_g, (2 * HID,), dtype=jnp.float32),
        "bn0_beta": 0.1 * jax.random.normal(k_b, (2 * HID,), dtype=jnp.float32),
        "bn0_mean": 0.05 * jax.random.normal(k_m, (2 * HID,), dtype=jnp.float32),
        "bn0_var": 1.0 + 0.1 * jnp.abs(jax.random.normal(k_v, (2 * HID,), dtype=jnp.float32)),
        "w_final": 0.1 * jax.random.normal(k_wf, (LAST_DIM, OUT_C), dtype=jnp.float32),
        "b_final": 0.1 * jax.random.normal(k_bf, (OUT_C,), dtype=jnp.float32),
    }

    prep, dims = prepare_h2gcn(params, adj_np, adj2_np, n=N, in_c=IN_C, hid=HID, out_c=OUT_C)

    # tile selection is decoupled from the (tile-independent) adjacency layout
    tile_n = _pick_tile_n(dims["n_pad"])
    tile_k = _pick_tile_k(dims["n_pad"])

    node_feat_p = np.zeros((dims["n_pad"], dims["in_pad"]), np.float32)
    node_feat_p[:N, :IN_C] = np.asarray(node_feat)
    node_feat_p = jnp.asarray(node_feat_p, dtype=jnp.bfloat16)

    fwd = jax.jit(functools.partial(h2gcn_forward, tile_n=tile_n, tile_k=tile_k))
    out_p = fwd(node_feat_p, prep)
    jax.block_until_ready(out_p)

    out = np.asarray(out_p)[:N, :OUT_C]
    assert out.shape == (N, OUT_C)

    # correctness vs. unpadded f32 reference (bf16 adjacency/activations/weights
    # introduce ~0.5-1% relative noise)
    ref = np.asarray(h2gcn_reference(node_feat, jnp.asarray(adj_np),
                                     jnp.asarray(adj2_np), params))
    max_err = float(np.max(np.abs(out - ref)))
    assert np.allclose(out, ref, rtol=3e-2, atol=3e-2), f"max abs err = {max_err}"

    # TODO(synk): dropout / BN batch-statistics (training mode) intentionally omitted (eval semantics).
    print("KERNEL_OK")
</pallas_src>

<mosaic_0001>
module attributes {stable_mosaic.version = 11 : i64} {
  func.func @_linear_kernel(%arg0: i32, %arg1: memref<128x128xbf16, #tpu.memory_space<vmem>>, %arg2: memref<128x128xbf16, #tpu.memory_space<vmem>>, %arg3: memref<1x128xf32, #tpu.memory_space<vmem>>, %arg4: memref<128x128xbf16, #tpu.memory_space<vmem>>) attributes {dimension_semantics = [#tpu.dimension_semantics<parallel>], iteration_bounds = array<i64: 1>, scalar_prefetch = 0 : i64, scratch_operands = 0 : i64, tpu.core_type = #tpu.core_type<tc>, window_params = [{transform_indices = @transform_0, window_bounds = array<i64: 128, 128>}, {pipeline_mode = #tpu.pipeline_mode<synchronous>, transform_indices = @transform_1, window_bounds = array<i64: 128, 128>}, {pipeline_mode = #tpu.pipeline_mode<synchronous>, transform_indices = @transform_2, window_bounds = array<i64: 1, 128>}, {transform_indices = @transform_3, window_bounds = array<i64: 128, 128>}]} {
    %c0 = arith.constant 0 : index
    %c0_0 = arith.constant 0 : index
    %0 = vector.load %arg1[%c0, %c0_0] : memref<128x128xbf16, #tpu.memory_space<vmem>>, vector<128x128xbf16>
    %c0_1 = arith.constant 0 : index
    %c0_2 = arith.constant 0 : index
    %1 = vector.load %arg2[%c0_1, %c0_2] : memref<128x128xbf16, #tpu.memory_space<vmem>>, vector<128x128xbf16>
    %cst = arith.constant dense<0.000000e+00> : vector<128x128xf32>
    %2 = tpu.matmul %0, %1, %cst {dimension_numbers = #tpu.dot_dimension_numbers<[1], [0], [0], [1], [0, 0, 1, 1], [], []>} : vector<128x128xbf16>, vector<128x128xbf16>, vector<128x128xf32> -> vector<128x128xf32>
    %c0_3 = arith.constant 0 : index
    %c0_4 = arith.constant 0 : index
    %3 = vector.load %arg3[%c0_3, %c0_4] : memref<1x128xf32, #tpu.memory_space<vmem>>, vector<1x128xf32>
    %4 = vector.broadcast %3 : vector<1x128xf32> to vector<128x128xf32>
    %5 = arith.addf %2, %4 : vector<128x128xf32>
    %cst_5 = arith.constant 0.000000e+00 : f32
    %6 = vector.broadcast %cst_5 : f32 to vector<128x128xf32>
    %7 = arith.maximumf %5, %6 : vector<128x128xf32>
    %8 = arith.truncf %7 : vector<128x128xf32> to vector<128x128xbf16>
    %c0_6 = arith.constant 0 : index
    %c0_7 = arith.constant 0 : index
    %9 = vector.load %arg4[%c0_6, %c0_7] : memref<128x128xbf16, #tpu.memory_space<vmem>>, vector<128x128xbf16>
    tpu.vector_store %arg4[%c0_6, %c0_7], %8 {strides = array<i32>} : memref<128x128xbf16, #tpu.memory_space<vmem>>, vector<128x128xbf16>,
    return
  }
  func.func @transform_0(%arg0: i32) -> (i32, i32) {
    %c0_i32 = arith.constant 0 : i32
    %c0_i32_0 = arith.constant 0 : i32
    return %arg0, %c0_i32 : i32, i32
  }
  func.func @transform_1(%arg0: i32) -> (i32, i32) {
    %c0_i32 = arith.constant 0 : i32
    %c0_i32_0 = arith.constant 0 : i32
    %c0_i32_1 = arith.constant 0 : i32
    return %c0_i32, %c0_i32_0 : i32, i32
  }
  func.func @transform_2(%arg0: i32) -> (i32, i32) {
    %c0_i32 = arith.constant 0 : i32
    %c0_i32_0 = arith.constant 0 : i32
    %c0_i32_1 = arith.constant 0 : i32
    return %c0_i32, %c0_i32_0 : i32, i32
  }
  func.func @transform_3(%arg0: i32) -> (i32, i32) {
    %c0_i32 = arith.constant 0 : i32
    %c0_i32_0 = arith.constant 0 : i32
    return %arg0, %c0_i32 : i32, i32
  }
}

module attributes {stable_mosaic.version = 11 : i64} {
  func.func @_conv_bn_kernel(%arg0: i32, %arg1: i32, %arg2: memref<2x128x128xbf16, #tpu.memory_space<vmem>>, %arg3: memref<128x128xbf16, #tpu.memory_space<vmem>>, %arg4: memref<1x256xf32, #tpu.memory_space<vmem>>, %arg5: memref<1x256xf32, #tpu.memory_space<vmem>>, %arg6: memref<128x256xbf16, #tpu.memory_space<vmem>>, %arg7: memref<2x128x128xf32, #tpu.memory_space<vmem>>) attributes {dimension_semantics = [#tpu.dimension_semantics<parallel>, #tpu.dimension_semantics<arbitrary>], iteration_bounds = array<i64: 1, 1>, scalar_prefetch = 0 : i64, scratch_operands = 1 : i64, tpu.core_type = #tpu.core_type<tc>, window_params = [{transform_indices = @transform_0, window_bounds = array<i64: 2, 128, 128>}, {transform_indices = @transform_1, window_bounds = array<i64: 128, 128>}, {pipeline_mode = #tpu.pipeline_mode<synchronous>, transform_indices = @transform_2, window_bounds = array<i64: 1, 256>}, {pipeline_mode = #tpu.pipeline_mode<synchronous>, transform_indices = @transform_3, window_bounds = array<i64: 1, 256>}, {transform_indices = @transform_4, window_bounds = array<i64: 128, 256>}]} {
    %c0_i32 = arith.constant 0 : i32
    %0 = arith.cmpi eq, %arg1, %c0_i32 : i32
    %1 = arith.extui %0 : i1 to i32
    %c0_i32_0 = arith.constant 0 : i32
    %2 = arith.cmpi ne, %1, %c0_i32_0 : i32
    scf.if %2 {
      %cst_22 = arith.constant 0.000000e+00 : f32
      %25 = vector.broadcast %cst_22 : f32 to vector<2x128x128xf32>
      %c0_23 = arith.constant 0 : index
      %c0_24 = arith.constant 0 : index
      %c0_25 = arith.constant 0 : index
      %26 = vector.load %arg7[%c0_23, %c0_24, %c0_25] : memref<2x128x128xf32, #tpu.memory_space<vmem>>, vector<2x128x128xf32>
      tpu.vector_store %arg7[%c0_23, %c0_24, %c0_25], %25 {strides = array<i32>} : memref<2x128x128xf32, #tpu.memory_space<vmem>>, vector<2x128x128xf32>,
    } else {
    }
    %c0 = arith.constant 0 : index
    %c0_1 = arith.constant 0 : index
    %3 = vector.load %arg3[%c0, %c0_1] : memref<128x128xbf16, #tpu.memory_space<vmem>>, vector<128x128xbf16>
    %c0_2 = arith.constant 0 : index
    %c0_3 = arith.constant 0 : index
    %c0_4 = arith.constant 0 : index
    %4 = vector.load %arg7[%c0_2, %c0_3, %c0_4] : memref<2x128x128xf32, #tpu.memory_space<vmem>>, vector<1x128x128xf32>
    %5 = vector.shape_cast %4 : vector<1x128x128xf32> to vector<128x128xf32>
    %c0_5 = arith.constant 0 : index
    %c0_6 = arith.constant 0 : index
    %c0_7 = arith.constant 0 : index
    %6 = vector.load %arg2[%c0_5, %c0_6, %c0_7] : memref<2x128x128xbf16, #tpu.memory_space<vmem>>, vector<1x128x128xbf16>
    %7 = vector.shape_cast %6 : vector<1x128x128xbf16> to vector<128x128xbf16>
    %cst = arith.constant dense<0.000000e+00> : vector<128x128xf32>
    %8 = tpu.matmul %7, %3, %cst {dimension_numbers = #tpu.dot_dimension_numbers<[1], [0], [0], [1], [0, 0, 1, 1], [], []>} : vector<128x128xbf16>, vector<128x128xbf16>, vector<128x128xf32> -> vector<128x128xf32>
    %9 = arith.addf %5, %8 : vector<128x128xf32>
    %c0_8 = arith.constant 0 : index
    %c0_9 = arith.constant 0 : index
    %c0_10 = arith.constant 0 : index
    %10 = vector.load %arg7[%c0_8, %c0_9, %c0_10] : memref<2x128x128xf32, #tpu.memory_space<vmem>>, vector<1x128x128xf32>
    %11 = vector.shape_cast %10 : vector<1x128x128xf32> to vector<128x128xf32>
    %12 = vector.shape_cast %9 : vector<128x128xf32> to vector<1x128x128xf32>
    tpu.vector_store %arg7[%c0_8, %c0_9, %c0_10], %12 {strides = array<i32>} : memref<2x128x128xf32, #tpu.memory_space<vmem>>, vector<1x128x128xf32>,
    %c1 = arith.constant 1 : index
    %c0_11 = arith.constant 0 : index
    %c0_12 = arith.constant 0 : index
    %13 = vector.load %arg7[%c1, %c0_11, %c0_12] : memref<2x128x128xf32, #tpu.memory_space<vmem>>, vector<1x128x128xf32>
    %14 = vector.shape_cast %13 : vector<1x128x128xf32> to vector<128x128xf32>
    %c1_13 = arith.constant 1 : index
    %c0_14 = arith.constant 0 : index
    %c0_15 = arith.constant 0 : index
    %15 = vector.load %arg2[%c1_13, %c0_14, %c0_15] : memref<2x128x128xbf16, #tpu.memory_space<vmem>>, vector<1x128x128xbf16>
    %16 = vector.shape_cast %15 : vector<1x128x128xbf16> to vector<128x128xbf16>
    %cst_16 = arith.constant dense<0.000000e+00> : vector<128x128xf32>
    %17 = tpu.matmul %16, %3, %cst_16 {dimension_numbers = #tpu.dot_dimension_numbers<[1], [0], [0], [1], [0, 0, 1, 1], [], []>} : vector<128x128xbf16>, vector<128x128xbf16>, vector<128x128xf32> -> vector<128x128xf32>
    %18 = arith.addf %14, %17 : vector<128x128xf32>
    %c1_17 = arith.constant 1 : index
    %c0_18 = arith.constant 0 : index
    %c0_19 = arith.constant 0 : index
    %19 = vector.load %arg7[%c1_17, %c0_18, %c0_19] : memref<2x128x128xf32, #tpu.memory_space<vmem>>, vector<1x128x128xf32>
    %20 = vector.shape_cast %19 : vector<1x128x128xf32> to vector<128x128xf32>
    %21 = vector.shape_cast %18 : vector<128x128xf32> to vector<1x128x128xf32>
    tpu.vector_store %arg7[%c1_17, %c0_18, %c0_19], %21 {strides = array<i32>} : memref<2x128x128xf32, #tpu.memory_space<vmem>>, vector<1x128x128xf32>,
    %c0_i32_20 = arith.constant 0 : i32
    %22 = arith.cmpi eq, %arg1, %c0_i32_20 : i32
    %23 = arith.extui %22 : i1 to i32
    %c0_i32_21 = arith.constant 0 : i32
    %24 = arith.cmpi ne, %23, %c0_i32_21 : i32
    scf.if %24 {
      %c0_22 = arith.constant 0 : index
      %c0_23 = arith.constant 0 : index
      %c0_24 = arith.constant 0 : index
      %25 = vector.load %arg7[%c0_22, %c0_23, %c0_24] : memref<2x128x128xf32, #tpu.memory_space<vmem>>, vector<1x128x128xf32>
      %26 = vector.shape_cast %25 : vector<1x128x128xf32> to vector<128x128xf32>
      %c0_25 = arith.constant 0 : index
      %c0_26 = arith.constant 0 : index
      %27 = vector.load %arg4[%c0_25, %c0_26] : memref<1x256xf32, #tpu.memory_space<vmem>>, vector<1x128xf32>
      %28 = vector.broadcast %27 : vector<1x128xf32> to vector<128x128xf32>
      %29 = arith.mulf %26, %28 : vector<128x128xf32>
      %c0_27 = arith.constant 0 : index
      %c0_28 = arith.constant 0 : index
      %30 = vector.load %arg5[%c0_27, %c0_28] : memref<1x256xf32, #tpu.memory_space<vmem>>, vector<1x128xf32>
      %31 = vector.broadcast %30 : vector<1x128xf32> to vector<128x128xf32>
      %32 = arith.addf %29, %31 : vector<128x128xf32>
      %33 = arith.truncf %32 : vector<128x128xf32> to vector<128x128xbf16>
      %c0_29 = arith.constant 0 : index
      %c0_30 = arith.constant 0 : index
      %34 = vector.load %arg6[%c0_29, %c0_30] : memref<128x256xbf16, #tpu.memory_space<vmem>>, vector<128x128xbf16>
      tpu.vector_store %arg6[%c0_29, %c0_30], %33 {strides = array<i32>} : memref<128x256xbf16, #tpu.memory_space<vmem>>, vector<128x128xbf16>,
      %c1_31 = arith.constant 1 : index
      %c0_32 = arith.constant 0 : index
      %c0_33 = arith.constant 0 : index
      %35 = vector.load %arg7[%c1_31, %c0_32, %c0_33] : memref<2x128x128xf32, #tpu.memory_space<vmem>>, vector<1x128x128xf32>
      %36 = vector.shape_cast %35 : vector<1x128x128xf32> to vector<128x128xf32>
      %c0_34 = arith.constant 0 : index
      %c128 = arith.constant 128 : index
      %37 = vector.load %arg4[%c0_34, %c128] : memref<1x256xf32, #tpu.memory_space<vmem>>, vector<1x128xf32>
      %38 = vector.broadcast %37 : vector<1x128xf32> to vector<128x128xf32>
      %39 = arith.mulf %36, %38 : vector<128x128xf32>
      %c0_35 = arith.constant 0 : index
      %c128_36 = arith.constant 128 : index
      %40 = vector.load %arg5[%c0_35, %c128_36] : memref<1x256xf32, #tpu.memory_space<vmem>>, vector<1x128xf32>
      %41 = vector.broadcast %40 : vector<1x128xf32> to vector<128x128xf32>
      %42 = arith.addf %39, %41 : vector<128x128xf32>
      %43 = arith.truncf %42 : vector<128x128xf32> to vector<128x128xbf16>
      %c0_37 = arith.constant 0 : index
      %c128_38 = arith.constant 128 : index
      %44 = vector.load %arg6[%c0_37, %c128_38] : memref<128x256xbf16, #tpu.memory_space<vmem>>, vector<128x128xbf16>
      tpu.vector_store %arg6[%c0_37, %c128_38], %43 {strides = array<i32>} : memref<128x256xbf16, #tpu.memory_space<vmem>>, vector<128x128xbf16>,
    } else {
    }
    return
  }
  func.func @transform_0(%arg0: i32, %arg1: i32) -> (i32, i32, i32) {
    %c0_i32 = arith.constant 0 : i32
    %c0_i32_0 = arith.constant 0 : i32
    return %c0_i32, %arg0, %arg1 : i32, i32, i32
  }
  func.func @transform_1(%arg0: i32, %arg1: i32) -> (i32, i32) {
    %c0_i32 = arith.constant 0 : i32
    %c0_i32_0 = arith.constant 0 : i32
    return %arg1, %c0_i32 : i32, i32
  }
  func.func @transform_2(%arg0: i32, %arg1: i32) -> (i32, i32) {
    %c0_i32 = arith.constant 0 : i32
    %c0_i32_0 = arith.constant 0 : i32
    %c0_i32_1 = arith.constant 0 : i32
    return %c0_i32, %c0_i32_0 : i32, i32
  }
  func.func @transform_3(%arg0: i32, %arg1: i32) -> (i32, i32) {
    %c0_i32 = arith.constant 0 : i32
    %c0_i32_0 = arith.constant 0 : i32
    %c0_i32_1 = arith.constant 0 : i32
    return %c0_i32, %c0_i32_0 : i32, i32
  }
  func.func @transform_4(%arg0: i32, %arg1: i32) -> (i32, i32) {
    %c0_i32 = arith.constant 0 : i32
    %c0_i32_0 = arith.constant 0 : i32
    return %arg0, %c0_i32 : i32, i32
  }
}

module attributes {stable_mosaic.version = 11 : i64} {
  func.func @_conv_final_kernel(%arg0: i32, %arg1: i32, %arg2: memref<2x128x128xbf16, #tpu.memory_space<vmem>>, %arg3: memref<128x256xbf16, #tpu.memory_space<vmem>>, %arg4: memref<128x128xbf16, #tpu.memory_space<vmem>>, %arg5: memref<128x256xbf16, #tpu.memory_space<vmem>>, %arg6: memref<128x128xbf16, #tpu.memory_space<vmem>>, %arg7: memref<256x128xbf16, #tpu.memory_space<vmem>>, %arg8: memref<256x128xbf16, #tpu.memory_space<vmem>>, %arg9: memref<256x128xbf16, #tpu.memory_space<vmem>>, %arg10: memref<1x128xf32, #tpu.memory_space<vmem>>, %arg11: memref<128x128xf32, #tpu.memory_space<vmem>>, %arg12: memref<2x128x256xf32, #tpu.memory_space<vmem>>) attributes {dimension_semantics = [#tpu.dimension_semantics<parallel>, #tpu.dimension_semantics<arbitrary>], iteration_bounds = array<i64: 1, 1>, scalar_prefetch = 0 : i64, scratch_operands = 1 : i64, tpu.core_type = #tpu.core_type<tc>, window_params = [{transform_indices = @transform_0, window_bounds = array<i64: 2, 128, 128>}, {transform_indices = @transform_1, window_bounds = array<i64: 128, 256>}, {transform_indices = @transform_2, window_bounds = array<i64: 128, 128>}, {transform_indices = @transform_3, window_bounds = array<i64: 128, 256>}, {pipeline_mode = #tpu.pipeline_mode<synchronous>, transform_indices = @transform_4, window_bounds = array<i64: 128, 128>}, {pipeline_mode = #tpu.pipeline_mode<synchronous>, transform_indices = @transform_5, window_bounds = array<i64: 256, 128>}, {pipeline_mode = #tpu.pipeline_mode<synchronous>, transform_indices = @transform_6, window_bounds = array<i64: 256, 128>}, {pipeline_mode = #tpu.pipeline_mode<synchronous>, transform_indices = @transform_7, window_bounds = array<i64: 256, 128>}, {pipeline_mode = #tpu.pipeline_mode<synchronous>, transform_indices = @transform_8, window_bounds = array<i64: 1, 128>}, {transform_indices = @transform_9, window_bounds = array<i64: 128, 128>}]} {
    %c0_i32 = arith.constant 0 : i32
    %0 = arith.cmpi eq, %arg1, %c0_i32 : i32
    %1 = arith.extui %0 : i1 to i32
    %c0_i32_0 = arith.constant 0 : i32
    %2 = arith.cmpi ne, %1, %c0_i32_0 : i32
    scf.if %2 {
      %cst_22 = arith.constant 0.000000e+00 : f32
      %25 = vector.broadcast %cst_22 : f32 to vector<2x128x256xf32>
      %c0_23 = arith.constant 0 : index
      %c0_24 = arith.constant 0 : index
      %c0_25 = arith.constant 0 : index
      %26 = vector.load %arg12[%c0_23, %c0_24, %c0_25] : memref<2x128x256xf32, #tpu.memory_space<vmem>>, vector<2x128x256xf32>
      tpu.vector_store %arg12[%c0_23, %c0_24, %c0_25], %25 {strides = array<i32>} : memref<2x128x256xf32, #tpu.memory_space<vmem>>, vector<2x128x256xf32>,
    } else {
    }
    %c0 = arith.constant 0 : index
    %c0_1 = arith.constant 0 : index
    %3 = vector.load %arg3[%c0, %c0_1] : memref<128x256xbf16, #tpu.memory_space<vmem>>, vector<128x256xbf16>
    %c0_2 = arith.constant 0 : index
    %c0_3 = arith.constant 0 : index
    %c0_4 = arith.constant 0 : index
    %4 = vector.load %arg12[%c0_2, %c0_3, %c0_4] : memref<2x128x256xf32, #tpu.memory_space<vmem>>, vector<1x128x256xf32>
    %5 = vector.shape_cast %4 : vector<1x128x256xf32> to vector<128x256xf32>
    %c0_5 = arith.constant 0 : index
    %c0_6 = arith.constant 0 : index
    %c0_7 = arith.constant 0 : index
    %6 = vector.load %arg2[%c0_5, %c0_6, %c0_7] : memref<2x128x128xbf16, #tpu.memory_space<vmem>>, vector<1x128x128xbf16>
    %7 = vector.shape_cast %6 : vector<1x128x128xbf16> to vector<128x128xbf16>
    %cst = arith.constant dense<0.000000e+00> : vector<128x256xf32>
    %8 = tpu.matmul %7, %3, %cst {dimension_numbers = #tpu.dot_dimension_numbers<[1], [0], [0], [1], [0, 0, 1, 1], [], []>} : vector<128x128xbf16>, vector<128x256xbf16>, vector<128x256xf32> -> vector<128x256xf32>
    %9 = arith.addf %5, %8 : vector<128x256xf32>
    %c0_8 = arith.constant 0 : index
    %c0_9 = arith.constant 0 : index
    %c0_10 = arith.constant 0 : index
    %10 = vector.load %arg12[%c0_8, %c0_9, %c0_10] : memref<2x128x256xf32, #tpu.memory_space<vmem>>, vector<1x128x256xf32>
    %11 = vector.shape_cast %10 : vector<1x128x256xf32> to vector<128x256xf32>
    %12 = vector.shape_cast %9 : vector<128x256xf32> to vector<1x128x256xf32>
    tpu.vector_store %arg12[%c0_8, %c0_9, %c0_10], %12 {strides = array<i32>} : memref<2x128x256xf32, #tpu.memory_space<vmem>>, vector<1x128x256xf32>,
    %c1 = arith.constant 1 : index
    %c0_11 = arith.constant 0 : index
    %c0_12 = arith.constant 0 : index
    %13 = vector.load %arg12[%c1, %c0_11, %c0_12] : memref<2x128x256xf32, #tpu.memory_space<vmem>>, vector<1x128x256xf32>
    %14 = vector.shape_cast %13 : vector<1x128x256xf32> to vector<128x256xf32>
    %c1_13 = arith.constant 1 : index
    %c0_14 = arith.constant 0 : index
    %c0_15 = arith.constant 0 : index
    %15 = vector.load %arg2[%c1_13, %c0_14, %c0_15] : memref<2x128x128xbf16, #tpu.memory_space<vmem>>, vector<1x128x128xbf16>
    %16 = vector.shape_cast %15 : vector<1x128x128xbf16> to vector<128x128xbf16>
    %cst_16 = arith.constant dense<0.000000e+00> : vector<128x256xf32>
    %17 = tpu.matmul %16, %3, %cst_16 {dimension_numbers = #tpu.dot_dimension_numbers<[1], [0], [0], [1], [0, 0, 1, 1], [], []>} : vector<128x128xbf16>, vector<128x256xbf16>, vector<128x256xf32> -> vector<128x256xf32>
    %18 = arith.addf %14, %17 : vector<128x256xf32>
    %c1_17 = arith.constant 1 : index
    %c0_18 = arith.constant 0 : index
    %c0_19 = arith.constant 0 : index
    %19 = vector.load %arg12[%c1_17, %c0_18, %c0_19] : memref<2x128x256xf32, #tpu.memory_space<vmem>>, vector<1x128x256xf32>
    %20 = vector.shape_cast %19 : vector<1x128x256xf32> to vector<128x256xf32>
    %21 = vector.shape_cast %18 : vector<128x256xf32> to vector<1x128x256xf32>
    tpu.vector_store %arg12[%c1_17, %c0_18, %c0_19], %21 {strides = array<i32>} : memref<2x128x256xf32, #tpu.memory_space<vmem>>, vector<1x128x256xf32>,
    %c0_i32_20 = arith.constant 0 : i32
    %22 = arith.cmpi eq, %arg1, %c0_i32_20 : i32
    %23 = arith.extui %22 : i1 to i32
    %c0_i32_21 = arith.constant 0 : i32
    %24 = arith.cmpi ne, %23, %c0_i32_21 : i32
    scf.if %24 {
      %c0_22 = arith.constant 0 : index
      %c0_23 = arith.constant 0 : index
      %25 = vector.load %arg4[%c0_22, %c0_23] : memref<128x128xbf16, #tpu.memory_space<vmem>>, vector<128x128xbf16>
      %c0_24 = arith.constant 0 : index
      %c0_25 = arith.constant 0 : index
      %26 = vector.load %arg6[%c0_24, %c0_25] : memref<128x128xbf16, #tpu.memory_space<vmem>>, vector<128x128xbf16>
      %cst_26 = arith.constant dense<0.000000e+00> : vector<128x128xf32>
      %27 = tpu.matmul %25, %26, %cst_26 {dimension_numbers = #tpu.dot_dimension_numbers<[1], [0], [0], [1], [0, 0, 1, 1], [], []>} : vector<128x128xbf16>, vector<128x128xbf16>, vector<128x128xf32> -> vector<128x128xf32>
      %c0_27 = arith.constant 0 : index
      %c0_28 = arith.constant 0 : index
      %28 = vector.load %arg5[%c0_27, %c0_28] : memref<128x256xbf16, #tpu.memory_space<vmem>>, vector<128x256xbf16>
      %c0_29 = arith.constant 0 : index
      %c0_30 = arith.constant 0 : index
      %29 = vector.load %arg7[%c0_29, %c0_30] : memref<256x128xbf16, #tpu.memory_space<vmem>>, vector<256x128xbf16>
      %cst_31 = arith.constant dense<0.000000e+00> : vector<128x128xf32>
      %30 = tpu.matmul %28, %29, %cst_31 {dimension_numbers = #tpu.dot_dimension_numbers<[1], [0], [0], [1], [0, 0, 1, 1], [], []>} : vector<128x256xbf16>, vector<256x128xbf16>, vector<128x128xf32> -> vector<128x128xf32>
      %31 = arith.addf %27, %30 : vector<128x128xf32>
      %c0_32 = arith.constant 0 : index
      %c0_33 = arith.constant 0 : index
      %c0_34 = arith.constant 0 : index
      %32 = vector.load %arg12[%c0_32, %c0_33, %c0_34] : memref<2x128x256xf32, #tpu.memory_space<vmem>>, vector<1x128x256xf32>
      %33 = vector.shape_cast %32 : vector<1x128x256xf32> to vector<128x256xf32>
      %34 = arith.truncf %33 : vector<128x256xf32> to vector<128x256xbf16>
      %c0_35 = arith.constant 0 : index
      %c0_36 = arith.constant 0 : index
      %35 = vector.load %arg8[%c0_35, %c0_36] : memref<256x128xbf16, #tpu.memory_space<vmem>>, vector<256x128xbf16>
      %cst_37 = arith.constant dense<0.000000e+00> : vector<128x128xf32>
      %36 = tpu.matmul %34, %35, %cst_37 {dimension_numbers = #tpu.dot_dimension_numbers<[1], [0], [0], [1], [0, 0, 1, 1], [], []>} : vector<128x256xbf16>, vector<256x128xbf16>, vector<128x128xf32> -> vector<128x128xf32>
      %37 = arith.addf %31, %36 : vector<128x128xf32>
      %c1_38 = arith.constant 1 : index
      %c0_39 = arith.constant 0 : index
      %c0_40 = arith.constant 0 : index
      %38 = vector.load %arg12[%c1_38, %c0_39, %c0_40] : memref<2x128x256xf32, #tpu.memory_space<vmem>>, vector<1x128x256xf32>
      %39 = vector.shape_cast %38 : vector<1x128x256xf32> to vector<128x256xf32>
      %40 = arith.truncf %39 : vector<128x256xf32> to vector<128x256xbf16>
      %c0_41 = arith.constant 0 : index
      %c0_42 = arith.constant 0 : index
      %41 = vector.load %arg9[%c0_41, %c0_42] : memref<256x128xbf16, #tpu.memory_space<vmem>>, vector<256x128xbf16>
      %cst_43 = arith.constant dense<0.000000e+00> : vector<128x128xf32>
      %42 = tpu.matmul %40, %41, %cst_43 {dimension_numbers = #tpu.dot_dimension_numbers<[1], [0], [0], [1], [0, 0, 1, 1], [], []>} : vector<128x256xbf16>, vector<256x128xbf16>, vector<128x128xf32> -> vector<128x128xf32>
      %43 = arith.addf %37, %42 : vector<128x128xf32>
      %c0_44 = arith.constant 0 : index
      %c0_45 = arith.constant 0 : index
      %44 = vector.load %arg10[%c0_44, %c0_45] : memref<1x128xf32, #tpu.memory_space<vmem>>, vector<1x128xf32>
      %45 = vector.broadcast %44 : vector<1x128xf32> to vector<128x128xf32>
      %46 = arith.addf %43, %45 : vector<128x128xf32>
      %c0_46 = arith.constant 0 : index
      %c0_47 = arith.constant 0 : index
      %47 = vector.load %arg11[%c0_46, %c0_47] : memref<128x128xf32, #tpu.memory_space<vmem>>, vector<128x128xf32>
      tpu.vector_store %arg11[%c0_46, %c0_47], %46 {strides = array<i32>} : memref<128x128xf32, #tpu.memory_space<vmem>>, vector<128x128xf32>,
    } else {
    }
    return
  }
  func.func @transform_0(%arg0: i32, %arg1: i32) -> (i32, i32, i32) {
    %c0_i32 = arith.constant 0 : i32
    %c0_i32_0 = arith.constant 0 : i32
    return %c0_i32, %arg0, %arg1 : i32, i32, i32
  }
  func.func @transform_1(%arg0: i32, %arg1: i32) -> (i32, i32) {
    %c0_i32 = arith.constant 0 : i32
    %c0_i32_0 = arith.constant 0 : i32
    return %arg1, %c0_i32 : i32, i32
  }
  func.func @transform_2(%arg0: i32, %arg1: i32) -> (i32, i32) {
    %c0_i32 = arith.constant 0 : i32
    %c0_i32_0 = arith.constant 0 : i32
    return %arg0, %c0_i32 : i32, i32
  }
  func.func @transform_3(%arg0: i32, %arg1: i32) -> (i32, i32) {
    %c0_i32 = arith.constant 0 : i32
    %c0_i32_0 = arith.constant 0 : i32
    return %arg0, %c0_i32 : i32, i32
  }
  func.func @transform_4(%arg0: i32, %arg1: i32) -> (i32, i32) {
    %c0_i32 = arith.constant 0 : i32
    %c0_i32_0 = arith.constant 0 : i32
    %c0_i32_1 = arith.constant 0 : i32
    return %c0_i32, %c0_i32_0 : i32, i32
  }
  func.func @transform_5(%arg0: i32, %arg1: i32) -> (i32, i32) {
    %c0_i32 = arith.constant 0 : i32
    %c0_i32_0 = arith.constant 0 : i32
    %c0_i32_1 = arith.constant 0 : i32
    return %c0_i32, %c0_i32_0 : i32, i32
  }
  func.func @transform_6(%arg0: i32, %arg1: i32) -> (i32, i32) {
    %c0_i32 = arith.constant 0 : i32
    %c0_i32_0 = arith.constant 0 : i32
    %c0_i32_1 = arith.constant 0 : i32
    return %c0_i32, %c0_i32_0 : i32, i32
  }
  func.func @transform_7(%arg0: i32, %arg1: i32) -> (i32, i32) {
    %c0_i32 = arith.constant 0 : i32
    %c0_i32_0 = arith.constant 0 : i32
    %c0_i32_1 = arith.constant 0 : i32
    return %c0_i32, %c0_i32_0 : i32, i32
  }
  func.func @transform_8(%arg0: i32, %arg1: i32) -> (i32, i32) {
    %c0_i32 = arith.constant 0 : i32
    %c0_i32_0 = arith.constant 0 : i32
    %c0_i32_1 = arith.constant 0 : i32
    return %c0_i32, %c0_i32_0 : i32, i32
  }
  func.func @transform_9(%arg0: i32, %arg1: i32) -> (i32, i32) {
    %c0_i32 = arith.constant 0 : i32
    %c0_i32_0 = arith.constant 0 : i32
    return %arg0, %c0_i32 : i32, i32
  }
}

</mosaic_0001>

<llo_original>
// kernel: h2gcn_forward.3
$region0: #{h2gcn_forward.3}
  #allocation0 [shape = 'u32[]', space=smem, size = 0x4, offset = 0x4, fixed_abs, tag = 'smem constant byte address 0x4 - core index']
  #allocation1 [shape = 'u32[144,128]{1,0:T(1,128)}', space=vmem, size = 0x12000, scoped, tag = 'internal scratch']
  %s0 = inlined_call_operand.hbm [shape: bf16[128,128], index: 0, kind: input, shape index: {}]
  %s1 = inlined_call_operand.hbm [shape: bf16[128,128], index: 1, kind: input, shape index: {}]
  %s2 = inlined_call_operand.hbm [shape: f32[1,128], index: 2, kind: input, shape index: {}]
  %s3 = inlined_call_operand.vmem [shape: bf16[128,128], index: 3, kind: output, shape index: {}]
  %s4 = sld [smem:[#allocation0]]
  $region34: #{h2gcn_forward.3} parent=0
    _
  %s6 = ssub.s32 1, %s4
  %s7 = scalar_select 0, %s6, %s4
  $region1: #{h2gcn_forward.3} parent=0
    #allocation2 [shape = 'u8[32768]{0}', space=vmem, size = 0x8000, scoped, tag = 'input window, operand 0, single buffered']
    #allocation3 [shape = 's32[1]{0}', space=sflag, size = 0x4, scoped, tag = 'scoped memory for h2gcn_forward.3']
    #allocation4 [shape = 'u8[32768]{0}', space=vmem, size = 0x8000, scoped, tag = 'input window, operand 1, single buffered']
    #allocation5 [shape = 's32[1]{0}', space=sflag, size = 0x4, scoped, tag = 'scoped memory for h2gcn_forward.3']
    #allocation6 [shape = 'u8[512]{0}', space=vmem, size = 0x400, scoped, tag = 'input window, operand 2, single buffered']
    %8 = vsyncpa [#allocation3], 0
    %9 = vsyncpa [#allocation5], 0
    // Predicated region
    $region2: #{h2gcn_forward.3} parent=1 // pred_check
      _
    $region3: #{h2gcn_forward.3} parent=1 // pred_check_branch
      %11 = sbr.rel (0) target = $region5
    $region4: #{h2gcn_forward.3} parent=1 // pred_region
      %s13 = ssub.s32 1024, 1024
      %14 = vsyncadd [#allocation3], %s13
      %s15 = sshll.u32 [#allocation2], 4
      %s16 = int_to_ptr.vmem [resolvable:$true] %s15
      %21 = dma.hbm_to_vmem [thread:$0]  %s0, 1024, %s16, [#allocation3], 64, 64, 4
    $region5: #{h2gcn_forward.3} parent=1 // pred_fallthru
      _
    // Predicated region
    $region6: #{h2gcn_forward.3} parent=1 // pred_check
      _
    $region7: #{h2gcn_forward.3} parent=1 // pred_check_branch
      %23 = sbr.rel (0) target = $region9
    $region8: #{h2gcn_forward.3} parent=1 // pred_region
      %s25 = ssub.s32 1024, 1024
      %26 = vsyncadd [#allocation5], %s25
      %s27 = sshll.u32 [#allocation4], 4
      %s28 = int_to_ptr.vmem [resolvable:$true] %s27
      %33 = dma.hbm_to_vmem [thread:$0]  %s1, 1024, %s28, [#allocation5], 64, 64, 4
    $region9: #{h2gcn_forward.3} parent=1 // pred_fallthru
      _
    // Predicated region
    $region10: #{h2gcn_forward.3} parent=1 // pred_check
      _
    $region11: #{h2gcn_forward.3} parent=1 // pred_check_branch
      %35 = sbr.rel (0) target = $region13
    $region12: #{h2gcn_forward.3} parent=1 // pred_region
      %s37 = ssub.s32 16, 16
      %38 = vsyncadd [#allocation5], %s37
      %s40 = sshll.u32 [#allocation6], 4
      %s41 = int_to_ptr.vmem [resolvable:$true] %s40
      %43 = dma.hbm_to_vmem [thread:$0]  %s2, 16, %s41, [#allocation5]
    $region13: #{h2gcn_forward.3} parent=1 // pred_fallthru
      _
    // Predicated region
    $region14: #{h2gcn_forward.3} parent=1 // pred_check
      _
    $region15: #{h2gcn_forward.3} parent=1 // pred_check_branch
      %45 = sbr.rel (0) target = $region17
    $region16: #{h2gcn_forward.3} parent=1 // pred_region
      %46 = dma.done [#allocation3], 1024
    $region17: #{h2gcn_forward.3} parent=1 // pred_fallthru
      _
    // Predicated region
    $region18: #{h2gcn_forward.3} parent=1 // pred_check
      _
    $region19: #{h2gcn_forward.3} parent=1 // pred_check_branch
      %48 = sbr.rel (0) target = $region21
    $region20: #{h2gcn_forward.3} parent=1 // pred_region
      %49 = dma.done [#allocation5], 1024
    $region21: #{h2gcn_forward.3} parent=1 // pred_fallthru
      _
    // Predicated region
    $region22: #{h2gcn_forward.3} parent=1 // pred_check
      _
    $region23: #{h2gcn_forward.3} parent=1 // pred_check_branch
      %51 = sbr.rel (0) target = $region25
    $region24: #{h2gcn_forward.3} parent=1 // pred_region
      %52 = dma.done [#allocation5], 16
    $region25: #{h2gcn_forward.3} parent=1 // pred_fallthru
      _
    %v54 = vld [vmem:[#allocation2] sm:$0xf]
    %v55 = vld [vmem:[#allocation2 + $0x4] sm:$0xf]
    %v56 = vld [vmem:[#allocation2 + $0x8] sm:$0xf]
    %v57 = vld [vmem:[#allocation2 + $0xc] sm:$0xf]
    %v58 = vld [vmem:[#allocation2 + $0x10] sm:$0xf]
    %v59 = vld [vmem:[#allocation2 + $0x14] sm:$0xf]
    %v60 = vld [vmem:[#allocation2 + $0x18] sm:$0xf]
    %v61 = vld [vmem:[#allocation2 + $0x1c] sm:$0xf]
    %v62 = vld [vmem:[#allocation2 + $0x20] sm:$0xf]
    %v63 = vld [vmem:[#allocation2 + $0x24] sm:$0xf]
    %v64 = vld [vmem:[#allocation2 + $0x28] sm:$0xf]
    %v65 = vld [vmem:[#allocation2 + $0x2c] sm:$0xf]
    %v66 = vld [vmem:[#allocation2 + $0x30] sm:$0xf]
    %v67 = vld [vmem:[#allocation2 + $0x34] sm:$0xf]
    %v68 = vld [vmem:[#allocation2 + $0x38] sm:$0xf]
    %v69 = vld [vmem:[#allocation2 + $0x3c] sm:$0xf]
    %v70 = vld [vmem:[#allocation4] sm:$0xf]
    %v71 = vld [vmem:[#allocation4 + $0x4] sm:$0xf]
    %v72 = vld [vmem:[#allocation4 + $0x8] sm:$0xf]
    %v73 = vld [vmem:[#allocation4 + $0xc] sm:$0xf]
    %v74 = vld [vmem:[#allocation4 + $0x10] sm:$0xf]
    %v75 = vld [vmem:[#allocation4 + $0x14] sm:$0xf]
    %v76 = vld [vmem:[#allocation4 + $0x18] sm:$0xf]
    %v77 = vld [vmem:[#allocation4 + $0x1c] sm:$0xf]
    %v78 = vld [vmem:[#allocation4 + $0x20] sm:$0xf]
    %v79 = vld [vmem:[#allocation4 + $0x24] sm:$0xf]
    %v80 = vld [vmem:[#allocation4 + $0x28] sm:$0xf]
    %v81 = vld [vmem:[#allocation4 + $0x2c] sm:$0xf]
    %v82 = vld [vmem:[#allocation4 + $0x30] sm:$0xf]
    %v83 = vld [vmem:[#allocation4 + $0x34] sm:$0xf]
    %v84 = vld [vmem:[#allocation4 + $0x38] sm:$0xf]
    %v85 = vld [vmem:[#allocation4 + $0x3c] sm:$0xf]
    %v86 = vld [vmem:[#allocation6] sm:$0x1]
    %v88 = vlaneseq
    %v89 = vshrl.u32 %v88, 7
    %v90 = vsub.s32 0, %v89
    %v91 = vrot.slane %v86, %v90
    %v109 = vunpack.c.l.b16 %v54
    %v110 = vunpack.c.l.b16 %v55
    %v111 = vunpack.c.l.b16 %v56
    %v112 = vunpack.c.l.b16 %v57
    %v113 = vunpack.c.l.b16 %v58
    %v114 = vunpack.c.l.b16 %v59
    %v115 = vunpack.c.l.b16 %v60
    %v116 = vunpack.c.l.b16 %v61
    %v117 = vunpack.c.l.b16 %v62
    %v118 = vunpack.c.l.b16 %v63
    %v119 = vunpack.c.l.b16 %v64
    %v120 = vunpack.c.l.b16 %v65
    %v121 = vunpack.c.l.b16 %v66
    %v122 = vunpack.c.l.b16 %v67
    %v123 = vunpack.c.l.b16 %v68
    %v124 = vunpack.c.l.b16 %v69
    %v125 = vpack.c.b16 %v110, %v109
    %v126 = vpack.c.b16 %v112, %v111
    %v127 = vpack.c.b16 %v114, %v113
    %v128 = vpack.c.b16 %v116, %v115
    %v129 = vpack.c.b16 %v118, %v117
    %v130 = vpack.c.b16 %v120, %v119
    %v131 = vpack.c.b16 %v122, %v121
    %v132 = vpack.c.b16 %v124, %v123
    %v157 = vunpack.c.l.b16 %v70
    %v158 = vunpack.c.l.b16 %v71
    %v159 = vunpack.c.l.b16 %v72
    %v160 = vunpack.c.l.b16 %v73
    %v161 = vunpack.c.l.b16 %v74
    %v162 = vunpack.c.l.b16 %v75
    %v163 = vunpack.c.l.b16 %v76
    %v164 = vunpack.c.l.b16 %v77
    %v165 = vunpack.c.l.b16 %v78
    %v166 = vunpack.c.l.b16 %v79
    %v167 = vunpack.c.l.b16 %v80
    %v168 = vunpack.c.l.b16 %v81
    %v169 = vunpack.c.l.b16 %v82
    %v170 = vunpack.c.l.b16 %v83
    %v171 = vunpack.c.l.b16 %v84
    %v172 = vunpack.c.l.b16 %v85
    %v173 = vpack.c.b16 %v158, %v157
    %v174 = vpack.c.b16 %v160, %v159
    %v175 = vpack.c.b16 %v162, %v161
    %v176 = vpack.c.b16 %v164, %v163
    %v177 = vpack.c.b16 %v166, %v165
    %v178 = vpack.c.b16 %v168, %v167
    %v179 = vpack.c.b16 %v170, %v169
    %v180 = vpack.c.b16 %v172, %v171
    %189 = vmatprep.subr.bf16.mxu0 0
    %190 = vmatpush1.bf16.msra.mxu0 %v180
    %191 = vmatprep.subr.bf16.mxu0 0
    %192 = vmatpush1.bf16.msra.mxu0 %v179
    %193 = vmatprep.subr.bf16.mxu0 0
    %194 = vmatpush1.bf16.msra.mxu0 %v178
    %195 = vmatprep.subr.bf16.mxu0 0
    %196 = vmatpush1.bf16.msra.mxu0 %v177
    %197 = vmatprep.subr.bf16.mxu0 0
    %198 = vmatpush1.bf16.msra.mxu0 %v176
    %199 = vmatprep.subr.bf16.mxu0 0
    %200 = vmatpush1.bf16.msra.mxu0 %v175
    %201 = vmatprep.subr.bf16.mxu0 0
    %202 = vmatpush1.bf16.msra.mxu0 %v174
    %203 = vmatprep.subr.bf16.mxu0 0
    %204 = vmatpush1.bf16.msra.mxu0 %v173
    %205 = vmatprep.subr.bf16.mxu0 0
    %206 = vmatpush2.bf16.msra.mxu0 0
    %207 = vmatprep.subr.bf16.mxu0 0
    %208 = vmatpush2.bf16.msra.mxu0 0
    %209 = vmatprep.subr.bf16.mxu0 0
    %210 = vmatpush2.bf16.msra.mxu0 0
    %211 = vmatprep.subr.bf16.mxu0 0
    %212 = vmatpush2.bf16.msra.mxu0 0
    %213 = vmatprep.subr.bf16.mxu0 0
    %214 = vmatpush2.bf16.msra.mxu0 0
    %215 = vmatprep.subr.bf16.mxu0 0
    %216 = vmatpush2.bf16.msra.mxu0 0
    %217 = vmatprep.subr.bf16.mxu0 0
    %218 = vmatpush2.bf16.msra.mxu0 0
    %219 = vmatprep.subr.bf16.mxu0 0
    %220 = vmatpush2.bf16.msra.mxu0 0
    %221 = vmatprep.mubr.bf16.mxu0 0
    %222 = vmatmul.mubr.bf16.gmra.mxu0 %v125
    %v223 = vpop.f32.mrf.mxu0
    %v224 = vadd.f32 %v91, %v223
    %v225 = vpop.f32.mrf.mxu0
    %v226 = vpop.f32.mrf.mxu0
    %v227 = vadd.f32 %v91, %v226
    %v228 = vpop.f32.mrf.mxu0
    %229 = vmatprep.mubr.bf16.mxu0 0
    %230 = vmatmul.mubr.bf16.gmra.mxu0 %v126
    %v231 = vpop.f32.mrf.mxu0
    %v232 = vadd.f32 %v91, %v231
    %v233 = vpop.f32.mrf.mxu0
    %v234 = vpop.f32.mrf.mxu0
    %v235 = vadd.f32 %v91, %v234
    %v236 = vpop.f32.mrf.mxu0
    %237 = vmatprep.mubr.bf16.mxu0 0
    %238 = vmatmul.mubr.bf16.gmra.mxu0 %v127
    %v239 = vpop.f32.mrf.mxu0
    %v240 = vadd.f32 %v91, %v239
    %v241 = vpop.f32.mrf.mxu0
    %v242 = vpop.f32.mrf.mxu0
    %v243 = vadd.f32 %v91, %v242
    %v244 = vpop.f32.mrf.mxu0
    %245 = vmatprep.mubr.bf16.mxu0 0
    %246 = vmatmul.mubr.bf16.gmra.mxu0 %v128
    %v247 = vpop.f32.mrf.mxu0
    %v248 = vadd.f32 %v91, %v247
    %v249 = vpop.f32.mrf.mxu0
    %v250 = vpop.f32.mrf.mxu0
    %v251 = vadd.f32 %v91, %v250
    %v252 = vpop.f32.mrf.mxu0
    %253 = vmatprep.mubr.bf16.mxu0 0
    %254 = vmatmul.mubr.bf16.gmra.mxu0 %v129
    %v255 = vpop.f32.mrf.mxu0
    %v256 = vadd.f32 %v91, %v255
    %v257 = vpop.f32.mrf.mxu0
    %v258 = vpop.f32.mrf.mxu0
    %v259 = vadd.f32 %v91, %v258
    %v260 = vpop.f32.mrf.mxu0
    %261 = vmatprep.mubr.bf16.mxu0 0
    %262 = vmatmul.mubr.bf16.gmra.mxu0 %v130
    %v263 = vpop.f32.mrf.mxu0
    %v264 = vadd.f32 %v91, %v263
    %v265 = vpop.f32.mrf.mxu0
    %v266 = vpop.f32.mrf.mxu0
    %v267 = vadd.f32 %v91, %v266
    %v268 = vpop.f32.mrf.mxu0
    %269 = vmatprep.mubr.bf16.mxu0 0
    %270 = vmatmul.mubr.bf16.gmra.mxu0 %v131
    %v271 = vpop.f32.mrf.mxu0
    %v272 = vadd.f32 %v91, %v271
    %v273 = vpop.f32.mrf.mxu0
    %v274 = vpop.f32.mrf.mxu0
    %v275 = vadd.f32 %v91, %v274
    %v276 = vpop.f32.mrf.mxu0
    %277 = vmatprep.mubr.bf16.mxu0 0
    %278 = vmatmul.mubr.bf16.gmra.mxu0 %v132
    %v279 = vpop.f32.mrf.mxu0
    %v280 = vadd.f32 %v91, %v279
    %v281 = vpop.f32.mrf.mxu0
    %v282 = vpop.f32.mrf.mxu0
    %v283 = vadd.f32 %v91, %v282
    %v284 = vpop.f32.mrf.mxu0
    %285 = vdwg.mxu0
    %v286 = vmax.f32 %v224, 0.0
    %v287 = vmax.f32 %v227, 0.0
    %v288 = vmax.f32 %v232, 0.0
    %v289 = vmax.f32 %v235, 0.0
    %v290 = vmax.f32 %v240, 0.0
    %v291 = vmax.f32 %v243, 0.0
    %v292 = vmax.f32 %v248, 0.0
    %v293 = vmax.f32 %v251, 0.0
    %v294 = vmax.f32 %v256, 0.0
    %v295 = vmax.f32 %v259, 0.0
    %v296 = vmax.f32 %v264, 0.0
    %v297 = vmax.f32 %v267, 0.0
    %v298 = vmax.f32 %v272, 0.0
    %v299 = vmax.f32 %v275, 0.0
    %v300 = vmax.f32 %v280, 0.0
    %v301 = vmax.f32 %v283, 0.0
    %v302 = vpack.c.bf16 %v287, %v286
    %v303 = vpack.c.bf16 %v289, %v288
    %v304 = vpack.c.bf16 %v291, %v290
    %v305 = vpack.c.bf16 %v293, %v292
    %v306 = vpack.c.bf16 %v295, %v294
    %v307 = vpack.c.bf16 %v297, %v296
    %v308 = vpack.c.bf16 %v299, %v298
    %v309 = vpack.c.bf16 %v301, %v300
    %v318 = vunpack.c.l.b16 %v302
    %v319 = vunpack.c.h.b16 %v302
    %v320 = vunpack.c.l.b16 %v303
    %v321 = vunpack.c.h.b16 %v303
    %v322 = vunpack.c.l.b16 %v304
    %v323 = vunpack.c.h.b16 %v304
    %v324 = vunpack.c.l.b16 %v305
    %v325 = vunpack.c.h.b16 %v305
    %v326 = vunpack.c.l.b16 %v306
    %v327 = vunpack.c.h.b16 %v306
    %v328 = vunpack.c.l.b16 %v307
    %v329 = vunpack.c.h.b16 %v307
    %v330 = vunpack.c.l.b16 %v308
    %v331 = vunpack.c.h.b16 %v308
    %v332 = vunpack.c.l.b16 %v309
    %v333 = vunpack.c.h.b16 %v309
    %v334 = vpack.c.b16 %v318, %v318
    %v335 = vpack.c.b16 %v319, %v319
    %v336 = vpack.c.b16 %v320, %v320
    %v337 = vpack.c.b16 %v321, %v321
    %v338 = vpack.c.b16 %v322, %v322
    %v339 = vpack.c.b16 %v323, %v323
    %v340 = vpack.c.b16 %v324, %v324
    %v341 = vpack.c.b16 %v325, %v325
    %v342 = vpack.c.b16 %v326, %v326
    %v343 = vpack.c.b16 %v327, %v327
    %v344 = vpack.c.b16 %v328, %v328
    %v345 = vpack.c.b16 %v329, %v329
    %v346 = vpack.c.b16 %v330, %v330
    %v347 = vpack.c.b16 %v331, %v331
    %v348 = vpack.c.b16 %v332, %v332
    %v349 = vpack.c.b16 %v333, %v333
    %366 = vst [vmem:[%s3] sm:$0xf] %v334
    %367 = vst [vmem:[%s3 + $0x4] sm:$0xf] %v335
    %368 = vst [vmem:[%s3 + $0x8] sm:$0xf] %v336
    %369 = vst [vmem:[%s3 + $0xc] sm:$0xf] %v337
    %370 = vst [vmem:[%s3 + $0x10] sm:$0xf] %v338
    %371 = vst [vmem:[%s3 + $0x14] sm:$0xf] %v339
    %372 = vst [vmem:[%s3 + $0x18] sm:$0xf] %v340
    %373 = vst [vmem:[%s3 + $0x1c] sm:$0xf] %v341
    %374 = vst [vmem:[%s3 + $0x20] sm:$0xf] %v342
    %375 = vst [vmem:[%s3 + $0x24] sm:$0xf] %v343
    %376 = vst [vmem:[%s3 + $0x28] sm:$0xf] %v344
    %377 = vst [vmem:[%s3 + $0x2c] sm:$0xf] %v345
    %378 = vst [vmem:[%s3 + $0x30] sm:$0xf] %v346
    %379 = vst [vmem:[%s3 + $0x34] sm:$0xf] %v347
    %380 = vst [vmem:[%s3 + $0x38] sm:$0xf] %v348
    %381 = vst [vmem:[%s3 + $0x3c] sm:$0xf] %v349
    // Predicated region
    $region26: #{h2gcn_forward.3} parent=1 // pred_check
      _
    $region27: #{h2gcn_forward.3} parent=1 // pred_check_branch
      %383 = sbr.rel (0) target = $region29
    $region28: #{h2gcn_forward.3} parent=1 // pred_region
      _
    $region29: #{h2gcn_forward.3} parent=1 // pred_fallthru
      _
    // Predicated region
    $region30: #{h2gcn_forward.3} parent=1 // pred_check
      _
    $region31: #{h2gcn_forward.3} parent=1 // pred_check_branch
      %385 = sbr.rel (0) target = $region33
    $region32: #{h2gcn_forward.3} parent=1 // pred_region
      _
    $region33: #{h2gcn_forward.3} parent=1 // pred_fallthru
      _
    %386 = vsyncpa [#allocation3], 1
    %387 = vsyncpa [#allocation5], 1

// kernel: h2gcn_forward.4
$region0: #{h2gcn_forward.4}
  #allocation0 [shape = 'u32[]', space=smem, size = 0x4, offset = 0x4, fixed_abs, tag = 'smem constant byte address 0x4 - core index']
  #allocation1 [shape = 'u32[144,128]{1,0:T(1,128)}', space=vmem, size = 0x12000, scoped, tag = 'internal scratch']
  #allocation2 [shape = 'f32[2,128,128]{2,1,0:T(8,128)}', space=vmem, size = 0x20000, scoped, tag = 'scratch operand']
  %s0 = inlined_call_operand.vmem [shape: bf16[2,128,128], index: 0, kind: input, shape index: {}]
  %s1 = inlined_call_operand.vmem [shape: bf16[128,128], index: 1, kind: input, shape index: {}]
  %s2 = inlined_call_operand.vmem [shape: f32[1,256], index: 2, kind: input, shape index: {}]
  %s3 = inlined_call_operand.vmem [shape: f32[1,256], index: 3, kind: input, shape index: {}]
  %s4 = inlined_call_operand.vmem [shape: bf16[128,256], index: 4, kind: output, shape index: {}]
  %s5 = sld [smem:[#allocation0]]
  $region34: #{h2gcn_forward.4} parent=0
    _
  %s7 = ssub.s32 1, %s5
  %s8 = scalar_select 0, %s7, %s5
  // Predicated region
  $region2: #{h2gcn_forward.4} parent=0 // pred_check
    _
  $region3: #{h2gcn_forward.4} parent=0 // pred_check_branch
    %10 = sbr.rel (0) target = $region5
  $region4: #{h2gcn_forward.4} parent=0 // pred_region
    _
  $region5: #{h2gcn_forward.4} parent=0 // pred_fallthru
    _
  // Predicated region
  $region6: #{h2gcn_forward.4} parent=0 // pred_check
    _
  $region7: #{h2gcn_forward.4} parent=0 // pred_check_branch
    %12 = sbr.rel (0) target = $region9
  $region8: #{h2gcn_forward.4} parent=0 // pred_region
    _
  $region9: #{h2gcn_forward.4} parent=0 // pred_fallthru
    _
  // Predicated region
  $region10: #{h2gcn_forward.4} parent=0 // pred_check
    _
  $region11: #{h2gcn_forward.4} parent=0 // pred_check_branch
    %14 = sbr.rel (0) target = $region13
  $region12: #{h2gcn_forward.4} parent=0 // pred_region
    _
  $region13: #{h2gcn_forward.4} parent=0 // pred_fallthru
    _
  // Predicated region
  $region14: #{h2gcn_forward.4} parent=0 // pred_check
    _
  $region15: #{h2gcn_forward.4} parent=0 // pred_check_branch
    %16 = sbr.rel (0) target = $region17
  $region16: #{h2gcn_forward.4} parent=0 // pred_region
    _
  $region17: #{h2gcn_forward.4} parent=0 // pred_fallthru
    _
  %p18 = scmp.eq.s32.totalorder 0, 0
  // Predicated region
  $region18: #{h2gcn_forward.4} parent=0 // pred_check
    %p19 = pneg %p18
  $region19: #{h2gcn_forward.4} parent=0 // pred_check_branch
    %21 = sbr.rel (%p19) target = $region21
  $region20: #{h2gcn_forward.4} parent=0 // pred_region
    %22 = vst [vmem:[#allocation2] sm:$0xff] 0.0
    %23 = vst [vmem:[#allocation2 + $0x8] sm:$0xff] 0.0
    %24 = vst [vmem:[#allocation2 + $0x10] sm:$0xff] 0.0
    %25 = vst [vmem:[#allocation2 + $0x18] sm:$0xff] 0.0
    %26 = vst [vmem:[#allocation2 + $0x20] sm:$0xff] 0.0
    %27 = vst [vmem:[#allocation2 + $0x28] sm:$0xff] 0.0
    %28 = vst [vmem:[#allocation2 + $0x30] sm:$0xff] 0.0
    %29 = vst [vmem:[#allocation2 + $0x38] sm:$0xff] 0.0
    %30 = vst [vmem:[#allocation2 + $0x40] sm:$0xff] 0.0
    %31 = vst [vmem:[#allocation2 + $0x48] sm:$0xff] 0.0
    %32 = vst [vmem:[#allocation2 + $0x50] sm:$0xff] 0.0
    %33 = vst [vmem:[#allocation2 + $0x58] sm:$0xff] 0.0
    %34 = vst [vmem:[#allocation2 + $0x60] sm:$0xff] 0.0
    %35 = vst [vmem:[#allocation2 + $0x68] sm:$0xff] 0.0
    %36 = vst [vmem:[#allocation2 + $0x70] sm:$0xff] 0.0
    %37 = vst [vmem:[#allocation2 + $0x78] sm:$0xff] 0.0
    %38 = vst [vmem:[#allocation2 + $0x80] sm:$0xff] 0.0
    %39 = vst [vmem:[#allocation2 + $0x88] sm:$0xff] 0.0
    %40 = vst [vmem:[#allocation2 + $0x90] sm:$0xff] 0.0
    %41 = vst [vmem:[#allocation2 + $0x98] sm:$0xff] 0.0
    %42 = vst [vmem:[#allocation2 + $0xa0] sm:$0xff] 0.0
    %43 = vst [vmem:[#allocation2 + $0xa8] sm:$0xff] 0.0
    %44 = vst [vmem:[#allocation2 + $0xb0] sm:$0xff] 0.0
    %45 = vst [vmem:[#allocation2 + $0xb8] sm:$0xff] 0.0
    %46 = vst [vmem:[#allocation2 + $0xc0] sm:$0xff] 0.0
    %47 = vst [vmem:[#allocation2 + $0xc8] sm:$0xff] 0.0
    %48 = vst [vmem:[#allocation2 + $0xd0] sm:$0xff] 0.0
    %49 = vst [vmem:[#allocation2 + $0xd8] sm:$0xff] 0.0
    %50 = vst [vmem:[#allocation2 + $0xe0] sm:$0xff] 0.0
    %51 = vst [vmem:[#allocation2 + $0xe8] sm:$0xff] 0.0
    %52 = vst [vmem:[#allocation2 + $0xf0] sm:$0xff] 0.0
    %53 = vst [vmem:[#allocation2 + $0xf8] sm:$0xff] 0.0
  $region21: #{h2gcn_forward.4} parent=0 // pred_fallthru
    _
  %v54 = vld [vmem:[%s1] sm:$0xf]
  %v55 = vld [vmem:[%s1 + $0x4] sm:$0xf]
  %v56 = vld [vmem:[%s1 + $0x8] sm:$0xf]
  %v57 = vld [vmem:[%s1 + $0xc] sm:$0xf]
  %v58 = vld [vmem:[%s1 + $0x10] sm:$0xf]
  %v59 = vld [vmem:[%s1 + $0x14] sm:$0xf]
  %v60 = vld [vmem:[%s1 + $0x18] sm:$0xf]
  %v61 = vld [vmem:[%s1 + $0x1c] sm:$0xf]
  %v62 = vld [vmem:[%s1 + $0x20] sm:$0xf]
  %v63 = vld [vmem:[%s1 + $0x24] sm:$0xf]
  %v64 = vld [vmem:[%s1 + $0x28] sm:$0xf]
  %v65 = vld [vmem:[%s1 + $0x2c] sm:$0xf]
  %v66 = vld [vmem:[%s1 + $0x30] sm:$0xf]
  %v67 = vld [vmem:[%s1 + $0x34] sm:$0xf]
  %v68 = vld [vmem:[%s1 + $0x38] sm:$0xf]
  %v69 = vld [vmem:[%s1 + $0x3c] sm:$0xf]
  %v70 = vld [vmem:[#allocation2] sm:$0xff]
  %v71 = vld [vmem:[#allocation2 + $0x8] sm:$0xff]
  %v72 = vld [vmem:[#allocation2 + $0x10] sm:$0xff]
  %v73 = vld [vmem:[#allocation2 + $0x18] sm:$0xff]
  %v74 = vld [vmem:[#allocation2 + $0x20] sm:$0xff]
  %v75 = vld [vmem:[#allocation2 + $0x28] sm:$0xff]
  %v76 = vld [vmem:[#allocation2 + $0x30] sm:$0xff]
  %v77 = vld [vmem:[#allocation2 + $0x38] sm:$0xff]
  %v78 = vld [vmem:[#allocation2 + $0x40] sm:$0xff]
  %v79 = vld [vmem:[#allocation2 + $0x48] sm:$0xff]
  %v80 = vld [vmem:[#allocation2 + $0x50] sm:$0xff]
  %v81 = vld [vmem:[#allocation2 + $0x58] sm:$0xff]
  %v82 = vld [vmem:[#allocation2 + $0x60] sm:$0xff]
  %v83 = vld [vmem:[#allocation2 + $0x68] sm:$0xff]
  %v84 = vld [vmem:[#allocation2 + $0x70] sm:$0xff]
  %v85 = vld [vmem:[#allocation2 + $0x78] sm:$0xff]
  %v86 = vld [vmem:[%s0] sm:$0xf]
  %v87 = vld [vmem:[%s0 + $0x4] sm:$0xf]
  %v88 = vld [vmem:[%s0 + $0x8] sm:$0xf]
  %v89 = vld [vmem:[%s0 + $0xc] sm:$0xf]
  %v90 = vld [vmem:[%s0 + $0x10] sm:$0xf]
  %v91 = vld [vmem:[%s0 + $0x14] sm:$0xf]
  %v92 = vld [vmem:[%s0 + $0x18] sm:$0xf]
  %v93 = vld [vmem:[%s0 + $0x1c] sm:$0xf]
  %v94 = vld [vmem:[%s0 + $0x20] sm:$0xf]
  %v95 = vld [vmem:[%s0 + $0x24] sm:$0xf]
  %v96 = vld [vmem:[%s0 + $0x28] sm:$0xf]
  %v97 = vld [vmem:[%s0 + $0x2c] sm:$0xf]
  %v98 = vld [vmem:[%s0 + $0x30] sm:$0xf]
  %v99 = vld [vmem:[%s0 + $0x34] sm:$0xf]
  %v100 = vld [vmem:[%s0 + $0x38] sm:$0xf]
  %v101 = vld [vmem:[%s0 + $0x3c] sm:$0xf]
  %v118 = vunpack.c.l.b16 %v86
  %v119 = vunpack.c.l.b16 %v87
  %v120 = vunpack.c.l.b16 %v88
  %v121 = vunpack.c.l.b16 %v89
  %v122 = vunpack.c.l.b16 %v90
  %v123 = vunpack.c.l.b16 %v91
  %v124 = vunpack.c.l.b16 %v92
  %v125 = vunpack.c.l.b16 %v93
  %v126 = vunpack.c.l.b16 %v94
  %v127 = vunpack.c.l.b16 %v95
  %v128 = vunpack.c.l.b16 %v96
  %v129 = vunpack.c.l.b16 %v97
  %v130 = vunpack.c.l.b16 %v98
  %v131 = vunpack.c.l.b16 %v99
  %v132 = vunpack.c.l.b16 %v100
  %v133 = vunpack.c.l.b16 %v101
  %v134 = vpack.c.b16 %v119, %v118
  %v135 = vpack.c.b16 %v121, %v120
  %v136 = vpack.c.b16 %v123, %v122
  %v137 = vpack.c.b16 %v125, %v124
  %v138 = vpack.c.b16 %v127, %v126
  %v139 = vpack.c.b16 %v129, %v128
  %v140 = vpack.c.b16 %v131, %v130
  %v141 = vpack.c.b16 %v133, %v132
  %v166 = vunpack.c.l.b16 %v54
  %v167 = vunpack.c.l.b16 %v55
  %v168 = vunpack.c.l.b16 %v56
  %v169 = vunpack.c.l.b16 %v57
  %v170 = vunpack.c.l.b16 %v58
  %v171 = vunpack.c.l.b16 %v59
  %v172 = vunpack.c.l.b16 %v60
  %v173 = vunpack.c.l.b16 %v61
  %v174 = vunpack.c.l.b16 %v62
  %v175 = vunpack.c.l.b16 %v63
  %v176 = vunpack.c.l.b16 %v64
  %v177 = vunpack.c.l.b16 %v65
  %v178 = vunpack.c.l.b16 %v66
  %v179 = vunpack.c.l.b16 %v67
  %v180 = vunpack.c.l.b16 %v68
  %v181 = vunpack.c.l.b16 %v69
  %v182 = vpack.c.b16 %v167, %v166
  %v183 = vpack.c.b16 %v169, %v168
  %v184 = vpack.c.b16 %v171, %v170
  %v185 = vpack.c.b16 %v173, %v172
  %v186 = vpack.c.b16 %v175, %v174
  %v187 = vpack.c.b16 %v177, %v176
  %v188 = vpack.c.b16 %v179, %v178
  %v189 = vpack.c.b16 %v181, %v180
  %198 = vmatprep.subr.bf16.mxu0 0
  %199 = vmatpush1.bf16.msra.mxu0 %v189
  %200 = vmatprep.subr.bf16.mxu0 0
  %201 = vmatpush1.bf16.msra.mxu0 %v188
  %202 = vmatprep.subr.bf16.mxu0 0
  %203 = vmatpush1.bf16.msra.mxu0 %v187
  %204 = vmatprep.subr.bf16.mxu0 0
  %205 = vmatpush1.bf16.msra.mxu0 %v186
  %206 = vmatprep.subr.bf16.mxu0 0
  %207 = vmatpush1.bf16.msra.mxu0 %v185
  %208 = vmatprep.subr.bf16.mxu0 0
  %209 = vmatpush1.bf16.msra.mxu0 %v184
  %210 = vmatprep.subr.bf16.mxu0 0
  %211 = vmatpush1.bf16.msra.mxu0 %v183
  %212 = vmatprep.subr.bf16.mxu0 0
  %213 = vmatpush1.bf16.msra.mxu0 %v182
  %214 = vmatprep.subr.bf16.mxu0 0
  %215 = vmatpush2.bf16.msra.mxu0 0
  %216 = vmatprep.subr.bf16.mxu0 0
  %217 = vmatpush2.bf16.msra.mxu0 0
  %218 = vmatprep.subr.bf16.mxu0 0
  %219 = vmatpush2.bf16.msra.mxu0 0
  %220 = vmatprep.subr.bf16.mxu0 0
  %221 = vmatpush2.bf16.msra.mxu0 0
  %222 = vmatprep.subr.bf16.mxu0 0
  %223 = vmatpush2.bf16.msra.mxu0 0
  %224 = vmatprep.subr.bf16.mxu0 0
  %225 = vmatpush2.bf16.msra.mxu0 0
  %226 = vmatprep.subr.bf16.mxu0 0
  %227 = vmatpush2.bf16.msra.mxu0 0
  %228 = vmatprep.subr.bf16.mxu0 0
  %229 = vmatpush2.bf16.msra.mxu0 0
  %230 = vmatprep.mubr.bf16.mxu0 0
  %231 = vmatmul.mubr.bf16.gmra.mxu0 %v134
  %v232 = vpop.f32.mrf.mxu0
  %v233 = vadd.f32 0.0, %v232
  %v234 = vpop.f32.mrf.mxu0
  %v235 = vpop.f32.mrf.mxu0
  %v236 = vadd.f32 0.0, %v235
  %v237 = vpop.f32.mrf.mxu0
  %238 = vmatprep.mubr.bf16.mxu0 0
  %239 = vmatmul.mubr.bf16.gmra.mxu0 %v135
  %v240 = vpop.f32.mrf.mxu0
  %v241 = vadd.f32 0.0, %v240
  %v242 = vpop.f32.mrf.mxu0
  %v243 = vpop.f32.mrf.mxu0
  %v244 = vadd.f32 0.0, %v243
  %v245 = vpop.f32.mrf.mxu0
  %246 = vmatprep.mubr.bf16.mxu0 0
  %247 = vmatmul.mubr.bf16.gmra.mxu0 %v136
  %v248 = vpop.f32.mrf.mxu0
  %v249 = vadd.f32 0.0, %v248
  %v250 = vpop.f32.mrf.mxu0
  %v251 = vpop.f32.mrf.mxu0
  %v252 = vadd.f32 0.0, %v251
  %v253 = vpop.f32.mrf.mxu0
  %254 = vmatprep.mubr.bf16.mxu0 0
  %255 = vmatmul.mubr.bf16.gmra.mxu0 %v137
  %v256 = vpop.f32.mrf.mxu0
  %v257 = vadd.f32 0.0, %v256
  %v258 = vpop.f32.mrf.mxu0
  %v259 = vpop.f32.mrf.mxu0
  %v260 = vadd.f32 0.0, %v259
  %v261 = vpop.f32.mrf.mxu0
  %262 = vmatprep.mubr.bf16.mxu0 0
  %263 = vmatmul.mubr.bf16.gmra.mxu0 %v138
  %v264 = vpop.f32.mrf.mxu0
  %v265 = vadd.f32 0.0, %v264
  %v266 = vpop.f32.mrf.mxu0
  %v267 = vpop.f32.mrf.mxu0
  %v268 = vadd.f32 0.0, %v267
  %v269 = vpop.f32.mrf.mxu0
  %270 = vmatprep.mubr.bf16.mxu0 0
  %271 = vmatmul.mubr.bf16.gmra.mxu0 %v139
  %v272 = vpop.f32.mrf.mxu0
  %v273 = vadd.f32 0.0, %v272
  %v274 = vpop.f32.mrf.mxu0
  %v275 = vpop.f32.mrf.mxu0
  %v276 = vadd.f32 0.0, %v275
  %v277 = vpop.f32.mrf.mxu0
  %278 = vmatprep.mubr.bf16.mxu0 0
  %279 = vmatmul.mubr.bf16.gmra.mxu0 %v140
  %v280 = vpop.f32.mrf.mxu0
  %v281 = vadd.f32 0.0, %v280
  %v282 = vpop.f32.mrf.mxu0
  %v283 = vpop.f32.mrf.mxu0
  %v284 = vadd.f32 0.0, %v283
  %v285 = vpop.f32.mrf.mxu0
  %286 = vmatprep.mubr.bf16.mxu0 0
  %287 = vmatmul.mubr.bf16.gmra.mxu0 %v141
  %v288 = vpop.f32.mrf.mxu0
  %v289 = vadd.f32 0.0, %v288
  %v290 = vpop.f32.mrf.mxu0
  %v291 = vpop.f32.mrf.mxu0
  %v292 = vadd.f32 0.0, %v291
  %v293 = vpop.f32.mrf.mxu0
  %294 = vdwg.mxu0
  %v295 = vadd.f32 %v70, %v233
  %v296 = vadd.f32 %v71, %v236
  %v297 = vadd.f32 %v72, %v241
  %v298 = vadd.f32 %v73, %v244
  %v299 = vadd.f32 %v74, %v249
  %v300 = vadd.f32 %v75, %v252
  %v301 = vadd.f32 %v76, %v257
  %v302 = vadd.f32 %v77, %v260
  %v303 = vadd.f32 %v78, %v265
  %v304 = vadd.f32 %v79, %v268
  %v305 = vadd.f32 %v80, %v273
  %v306 = vadd.f32 %v81, %v276
  %v307 = vadd.f32 %v82, %v281
  %v308 = vadd.f32 %v83, %v284
  %v309 = vadd.f32 %v84, %v289
  %v310 = vadd.f32 %v85, %v292
  %311 = vst [vmem:[#allocation2] sm:$0xff] %v295
  %312 = vst [vmem:[#allocation2 + $0x8] sm:$0xff] %v296
  %313 = vst [vmem:[#allocation2 + $0x10] sm:$0xff] %v297
  %314 = vst [vmem:[#allocation2 + $0x18] sm:$0xff] %v298
  %315 = vst [vmem:[#allocation2 + $0x20] sm:$0xff] %v299
  %316 = vst [vmem:[#allocation2 + $0x28] sm:$0xff] %v300
  %317 = vst [vmem:[#allocation2 + $0x30] sm:$0xff] %v301
  %318 = vst [vmem:[#allocation2 + $0x38] sm:$0xff] %v302
  %319 = vst [vmem:[#allocation2 + $0x40] sm:$0xff] %v303
  %320 = vst [vmem:[#allocation2 + $0x48] sm:$0xff] %v304
  %321 = vst [vmem:[#allocation2 + $0x50] sm:$0xff] %v305
  %322 = vst [vmem:[#allocation2 + $0x58] sm:$0xff] %v306
  %323 = vst [vmem:[#allocation2 + $0x60] sm:$0xff] %v307
  %324 = vst [vmem:[#allocation2 + $0x68] sm:$0xff] %v308
  %325 = vst [vmem:[#allocation2 + $0x70] sm:$0xff] %v309
  %326 = vst [vmem:[#allocation2 + $0x78] sm:$0xff] %v310
  %s327 = scalar_lea.vmem [#allocation2], 128
  %v328 = vld [vmem:[%s327] sm:$0xff]
  %v329 = vld [vmem:[%s327 + $0x8] sm:$0xff]
  %v330 = vld [vmem:[%s327 + $0x10] sm:$0xff]
  %v331 = vld [vmem:[%s327 + $0x18] sm:$0xff]
  %v332 = vld [vmem:[%s327 + $0x20] sm:$0xff]
  %v333 = vld [vmem:[%s327 + $0x28] sm:$0xff]
  %v334 = vld [vmem:[%s327 + $0x30] sm:$0xff]
  %v335 = vld [vmem:[%s327 + $0x38] sm:$0xff]
  %v336 = vld [vmem:[%s327 + $0x40] sm:$0xff]
  %v337 = vld [vmem:[%s327 + $0x48] sm:$0xff]
  %v338 = vld [vmem:[%s327 + $0x50] sm:$0xff]
  %v339 = vld [vmem:[%s327 + $0x58] sm:$0xff]
  %v340 = vld [vmem:[%s327 + $0x60] sm:$0xff]
  %v341 = vld [vmem:[%s327 + $0x68] sm:$0xff]
  %v342 = vld [vmem:[%s327 + $0x70] sm:$0xff]
  %v343 = vld [vmem:[%s327 + $0x78] sm:$0xff]
  %s344 = scalar_lea.vmem %s0, 64
  %v345 = vld [vmem:[%s344] sm:$0xf]
  %v346 = vld [vmem:[%s344 + $0x4] sm:$0xf]
  %v347 = vld [vmem:[%s344 + $0x8] sm:$0xf]
  %v348 = vld [vmem:[%s344 + $0xc] sm:$0xf]
  %v349 = vld [vmem:[%s344 + $0x10] sm:$0xf]
  %v350 = vld [vmem:[%s344 + $0x14] sm:$0xf]
  %v351 = vld [vmem:[%s344 + $0x18] sm:$0xf]
  %v352 = vld [vmem:[%s344 + $0x1c] sm:$0xf]
  %v353 = vld [vmem:[%s344 + $0x20] sm:$0xf]
  %v354 = vld [vmem:[%s344 + $0x24] sm:$0xf]
  %v355 = vld [vmem:[%s344 + $0x28] sm:$0xf]
  %v356 = vld [vmem:[%s344 + $0x2c] sm:$0xf]
  %v357 = vld [vmem:[%s344 + $0x30] sm:$0xf]
  %v358 = vld [vmem:[%s344 + $0x34] sm:$0xf]
  %v359 = vld [vmem:[%s344 + $0x38] sm:$0xf]
  %v360 = vld [vmem:[%s344 + $0x3c] sm:$0xf]
  %v377 = vunpack.c.l.b16 %v345
  %v378 = vunpack.c.l.b16 %v346
  %v379 = vunpack.c.l.b16 %v347
  %v380 = vunpack.c.l.b16 %v348
  %v381 = vunpack.c.l.b16 %v349
  %v382 = vunpack.c.l.b16 %v350
  %v383 = vunpack.c.l.b16 %v351
  %v384 = vunpack.c.l.b16 %v352
  %v385 = vunpack.c.l.b16 %v353
  %v386 = vunpack.c.l.b16 %v354
  %v387 = vunpack.c.l.b16 %v355
  %v388 = vunpack.c.l.b16 %v356
  %v389 = vunpack.c.l.b16 %v357
  %v390 = vunpack.c.l.b16 %v358
  %v391 = vunpack.c.l.b16 %v359
  %v392 = vunpack.c.l.b16 %v360
  %v393 = vpack.c.b16 %v378, %v377
  %v394 = vpack.c.b16 %v380, %v379
  %v395 = vpack.c.b16 %v382, %v381
  %v396 = vpack.c.b16 %v384, %v383
  %v397 = vpack.c.b16 %v386, %v385
  %v398 = vpack.c.b16 %v388, %v387
  %v399 = vpack.c.b16 %v390, %v389
  %v400 = vpack.c.b16 %v392, %v391
  %409 = vmatprep.subr.bf16.mxu0 0
  %410 = vmatpush1.bf16.msra.mxu0 %v189
  %411 = vmatprep.subr.bf16.mxu0 0
  %412 = vmatpush1.bf16.msra.mxu0 %v188
  %413 = vmatprep.subr.bf16.mxu0 0
  %414 = vmatpush1.bf16.msra.mxu0 %v187
  %415 = vmatprep.subr.bf16.mxu0 0
  %416 = vmatpush1.bf16.msra.mxu0 %v186
  %417 = vmatprep.subr.bf16.mxu0 0
  %418 = vmatpush1.bf16.msra.mxu0 %v185
  %419 = vmatprep.subr.bf16.mxu0 0
  %420 = vmatpush1.bf16.msra.mxu0 %v184
  %421 = vmatprep.subr.bf16.mxu0 0
  %422 = vmatpush1.bf16.msra.mxu0 %v183
  %423 = vmatprep.subr.bf16.mxu0 0
  %424 = vmatpush1.bf16.msra.mxu0 %v182
  %425 = vmatprep.subr.bf16.mxu0 0
  %426 = vmatpush2.bf16.msra.mxu0 0
  %427 = vmatprep.subr.bf16.mxu0 0
  %428 = vmatpush2.bf16.msra.mxu0 0
  %429 = vmatprep.subr.bf16.mxu0 0
  %430 = vmatpush2.bf16.msra.mxu0 0
  %431 = vmatprep.subr.bf16.mxu0 0
  %432 = vmatpush2.bf16.msra.mxu0 0
  %433 = vmatprep.subr.bf16.mxu0 0
  %434 = vmatpush2.bf16.msra.mxu0 0
  %435 = vmatprep.subr.bf16.mxu0 0
  %436 = vmatpush2.bf16.msra.mxu0 0
  %437 = vmatprep.subr.bf16.mxu0 0
  %438 = vmatpush2.bf16.msra.mxu0 0
  %439 = vmatprep.subr.bf16.mxu0 0
  %440 = vmatpush2.bf16.msra.mxu0 0
  %441 = vmatprep.mubr.bf16.mxu0 0
  %442 = vmatmul.mubr.bf16.gmra.mxu0 %v393
  %v443 = vpop.f32.mrf.mxu0
  %v444 = vadd.f32 0.0, %v443
  %v445 = vpop.f32.mrf.mxu0
  %v446 = vpop.f32.mrf.mxu0
  %v447 = vadd.f32 0.0, %v446
  %v448 = vpop.f32.mrf.mxu0
  %449 = vmatprep.mubr.bf16.mxu0 0
  %450 = vmatmul.mubr.bf16.gmra.mxu0 %v394
  %v451 = vpop.f32.mrf.mxu0
  %v452 = vadd.f32 0.0, %v451
  %v453 = vpop.f32.mrf.mxu0
  %v454 = vpop.f32.mrf.mxu0
  %v455 = vadd.f32 0.0, %v454
  %v456 = vpop.f32.mrf.mxu0
  %457 = vmatprep.mubr.bf16.mxu0 0
  %458 = vmatmul.mubr.bf16.gmra.mxu0 %v395
  %v459 = vpop.f32.mrf.mxu0
  %v460 = vadd.f32 0.0, %v459
  %v461 = vpop.f32.mrf.mxu0
  %v462 = vpop.f32.mrf.mxu0
  %v463 = vadd.f32 0.0, %v462
  %v464 = vpop.f32.mrf.mxu0
  %465 = vmatprep.mubr.bf16.mxu0 0
  %466 = vmatmul.mubr.bf16.gmra.mxu0 %v396
  %v467 = vpop.f32.mrf.mxu0
  %v468 = vadd.f32 0.0, %v467
  %v469 = vpop.f32.mrf.mxu0
  %v470 = vpop.f32.mrf.mxu0
  %v471 = vadd.f32 0.0, %v470
  %v472 = vpop.f32.mrf.mxu0
  %473 = vmatprep.mubr.bf16.mxu0 0
  %474 = vmatmul.mubr.bf16.gmra.mxu0 %v397
  %v475 = vpop.f32.mrf.mxu0
  %v476 = vadd.f32 0.0, %v475
  %v477 = vpop.f32.mrf.mxu0
  %v478 = vpop.f32.mrf.mxu0
  %v479 = vadd.f32 0.0, %v478
  %v480 = vpop.f32.mrf.mxu0
  %481 = vmatprep.mubr.bf16.mxu0 0
  %482 = vmatmul.mubr.bf16.gmra.mxu0 %v398
  %v483 = vpop.f32.mrf.mxu0
  %v484 = vadd.f32 0.0, %v483
  %v485 = vpop.f32.mrf.mxu0
  %v486 = vpop.f32.mrf.mxu0
  %v487 = vadd.f32 0.0, %v486
  %v488 = vpop.f32.mrf.mxu0
  %489 = vmatprep.mubr.bf16.mxu0 0
  %490 = vmatmul.mubr.bf16.gmra.mxu0 %v399
  %v491 = vpop.f32.mrf.mxu0
  %v492 = vadd.f32 0.0, %v491
  %v493 = vpop.f32.mrf.mxu0
  %v494 = vpop.f32.mrf.mxu0
  %v495 = vadd.f32 0.0, %v494
  %v496 = vpop.f32.mrf.mxu0
  %497 = vmatprep.mubr.bf16.mxu0 0
  %498 = vmatmul.mubr.bf16.gmra.mxu0 %v400
  %v499 = vpop.f32.mrf.mxu0
  %v500 = vadd.f32 0.0, %v499
  %v501 = vpop.f32.mrf.mxu0
  %v502 = vpop.f32.mrf.mxu0
  %v503 = vadd.f32 0.0, %v502
  %v504 = vpop.f32.mrf.mxu0
  %505 = vdwg.mxu0
  %v506 = vadd.f32 %v328, %v444
  %v507 = vadd.f32 %v329, %v447
  %v508 = vadd.f32 %v330, %v452
  %v509 = vadd.f32 %v331, %v455
  %v510 = vadd.f32 %v332, %v460
  %v511 = vadd.f32 %v333, %v463
  %v512 = vadd.f32 %v334, %v468
  %v513 = vadd.f32 %v335, %v471
  %v514 = vadd.f32 %v336, %v476
  %v515 = vadd.f32 %v337, %v479
  %v516 = vadd.f32 %v338, %v484
  %v517 = vadd.f32 %v339, %v487
  %v518 = vadd.f32 %v340, %v492
  %v519 = vadd.f32 %v341, %v495
  %v520 = vadd.f32 %v342, %v500
  %v521 = vadd.f32 %v343, %v503
  %522 = vst [vmem:[%s327] sm:$0xff] %v506
  %523 = vst [vmem:[%s327 + $0x8] sm:$0xff] %v507
  %524 = vst [vmem:[%s327 + $0x10] sm:$0xff] %v508
  %525 = vst [vmem:[%s327 + $0x18] sm:$0xff] %v509
  %526 = vst [vmem:[%s327 + $0x20] sm:$0xff] %v510
  %527 = vst [vmem:[%s327 + $0x28] sm:$0xff] %v511
  %528 = vst [vmem:[%s327 + $0x30] sm:$0xff] %v512
  %529 = vst [vmem:[%s327 + $0x38] sm:$0xff] %v513
  %530 = vst [vmem:[%s327 + $0x40] sm:$0xff] %v514
  %531 = vst [vmem:[%s327 + $0x48] sm:$0xff] %v515
  %532 = vst [vmem:[%s327 + $0x50] sm:$0xff] %v516
  %533 = vst [vmem:[%s327 + $0x58] sm:$0xff] %v517
  %534 = vst [vmem:[%s327 + $0x60] sm:$0xff] %v518
  %535 = vst [vmem:[%s327 + $0x68] sm:$0xff] %v519
  %536 = vst [vmem:[%s327 + $0x70] sm:$0xff] %v520
  %537 = vst [vmem:[%s327 + $0x78] sm:$0xff] %v521
  // Predicated region
  $region22: #{h2gcn_forward.4} parent=0 // pred_check
    %p538 = pneg %p18
  $region23: #{h2gcn_forward.4} parent=0 // pred_check_branch
    %540 = sbr.rel (%p538) target = $region25
  $region24: #{h2gcn_forward.4} parent=0 // pred_region
    %v541 = vld [vmem:[#allocation2] sm:$0xff]
    %v542 = vld [vmem:[#allocation2 + $0x8] sm:$0xff]
    %v543 = vld [vmem:[#allocation2 + $0x10] sm:$0xff]
    %v544 = vld [vmem:[#allocation2 + $0x18] sm:$0xff]
    %v545 = vld [vmem:[#allocation2 + $0x20] sm:$0xff]
    %v546 = vld [vmem:[#allocation2 + $0x28] sm:$0xff]
    %v547 = vld [vmem:[#allocation2 + $0x30] sm:$0xff]
    %v548 = vld [vmem:[#allocation2 + $0x38] sm:$0xff]
    %v549 = vld [vmem:[#allocation2 + $0x40] sm:$0xff]
    %v550 = vld [vmem:[#allocation2 + $0x48] sm:$0xff]
    %v551 = vld [vmem:[#allocation2 + $0x50] sm:$0xff]
    %v552 = vld [vmem:[#allocation2 + $0x58] sm:$0xff]
    %v553 = vld [vmem:[#allocation2 + $0x60] sm:$0xff]
    %v554 = vld [vmem:[#allocation2 + $0x68] sm:$0xff]
    %v555 = vld [vmem:[#allocation2 + $0x70] sm:$0xff]
    %v556 = vld [vmem:[#allocation2 + $0x78] sm:$0xff]
    %v557 = vld [vmem:[%s2] sm:$0x1]
    %v559 = vlaneseq
    %v560 = vshrl.u32 %v559, 7
    %v561 = vsub.s32 0, %v560
    %v562 = vrot.slane %v557, %v561
    %v564 = vmul.f32 %v541, %v562
    %v565 = vmul.f32 %v542, %v562
    %v566 = vmul.f32 %v543, %v562
    %v567 = vmul.f32 %v544, %v562
    %v568 = vmul.f32 %v545, %v562
    %v569 = vmul.f32 %v546, %v562
    %v570 = vmul.f32 %v547, %v562
    %v571 = vmul.f32 %v548, %v562
    %v572 = vmul.f32 %v549, %v562
    %v573 = vmul.f32 %v550, %v562
    %v574 = vmul.f32 %v551, %v562
    %v575 = vmul.f32 %v552, %v562
    %v576 = vmul.f32 %v553, %v562
    %v577 = vmul.f32 %v554, %v562
    %v578 = vmul.f32 %v555, %v562
    %v579 = vmul.f32 %v556, %v562
    %v580 = vld [vmem:[%s3] sm:$0x1]
    %v582 = vlaneseq
    %v583 = vshrl.u32 %v582, 7
    %v584 = vsub.s32 0, %v583
    %v585 = vrot.slane %v580, %v584
    %v587 = vadd.f32 %v564, %v585
    %v588 = vadd.f32 %v565, %v585
    %v589 = vadd.f32 %v566, %v585
    %v590 = vadd.f32 %v567, %v585
    %v591 = vadd.f32 %v568, %v585
    %v592 = vadd.f32 %v569, %v585
    %v593 = vadd.f32 %v570, %v585
    %v594 = vadd.f32 %v571, %v585
    %v595 = vadd.f32 %v572, %v585
    %v596 = vadd.f32 %v573, %v585
    %v597 = vadd.f32 %v574, %v585
    %v598 = vadd.f32 %v575, %v585
    %v599 = vadd.f32 %v576, %v585
    %v600 = vadd.f32 %v577, %v585
    %v601 = vadd.f32 %v578, %v585
    %v602 = vadd.f32 %v579, %v585
    %v603 = vpack.c.bf16 %v588, %v587
    %v604 = vpack.c.bf16 %v590, %v589
    %v605 = vpack.c.bf16 %v592, %v591
    %v606 = vpack.c.bf16 %v594, %v593
    %v607 = vpack.c.bf16 %v596, %v595
    %v608 = vpack.c.bf16 %v598, %v597
    %v609 = vpack.c.bf16 %v600, %v599
    %v610 = vpack.c.bf16 %v602, %v601
    %v619 = vunpack.c.l.b16 %v603
    %v620 = vunpack.c.h.b16 %v603
    %v621 = vunpack.c.l.b16 %v604
    %v622 = vunpack.c.h.b16 %v604
    %v623 = vunpack.c.l.b16 %v605
    %v624 = vunpack.c.h.b16 %v605
    %v625 = vunpack.c.l.b16 %v606
    %v626 = vunpack.c.h.b16 %v606
    %v627 = vunpack.c.l.b16 %v607
    %v628 = vunpack.c.h.b16 %v607
    %v629 = vunpack.c.l.b16 %v608
    %v630 = vunpack.c.h.b16 %v608
    %v631 = vunpack.c.l.b16 %v609
    %v632 = vunpack.c.h.b16 %v609
    %v633 = vunpack.c.l.b16 %v610
    %v634 = vunpack.c.h.b16 %v610
    %v635 = vpack.c.b16 %v619, %v619
    %v636 = vpack.c.b16 %v620, %v620
    %v637 = vpack.c.b16 %v621, %v621
    %v638 = vpack.c.b16 %v622, %v622
    %v639 = vpack.c.b16 %v623, %v623
    %v640 = vpack.c.b16 %v624, %v624
    %v641 = vpack.c.b16 %v625, %v625
    %v642 = vpack.c.b16 %v626, %v626
    %v643 = vpack.c.b16 %v627, %v627
    %v644 = vpack.c.b16 %v628, %v628
    %v645 = vpack.c.b16 %v629, %v629
    %v646 = vpack.c.b16 %v630, %v630
    %v647 = vpack.c.b16 %v631, %v631
    %v648 = vpack.c.b16 %v632, %v632
    %v649 = vpack.c.b16 %v633, %v633
    %v650 = vpack.c.b16 %v634, %v634
    %667 = vst [vmem:[%s4] sm:$0xf] %v635
    %668 = vst [vmem:[%s4 + $0x8] sm:$0xf] %v636
    %669 = vst [vmem:[%s4 + $0x10] sm:$0xf] %v637
    %670 = vst [vmem:[%s4 + $0x18] sm:$0xf] %v638
    %671 = vst [vmem:[%s4 + $0x20] sm:$0xf] %v639
    %672 = vst [vmem:[%s4 + $0x28] sm:$0xf] %v640
    %673 = vst [vmem:[%s4 + $0x30] sm:$0xf] %v641
    %674 = vst [vmem:[%s4 + $0x38] sm:$0xf] %v642
    %675 = vst [vmem:[%s4 + $0x40] sm:$0xf] %v643
    %676 = vst [vmem:[%s4 + $0x48] sm:$0xf] %v644
    %677 = vst [vmem:[%s4 + $0x50] sm:$0xf] %v645
    %678 = vst [vmem:[%s4 + $0x58] sm:$0xf] %v646
    %679 = vst [vmem:[%s4 + $0x60] sm:$0xf] %v647
    %680 = vst [vmem:[%s4 + $0x68] sm:$0xf] %v648
    %681 = vst [vmem:[%s4 + $0x70] sm:$0xf] %v649
    %682 = vst [vmem:[%s4 + $0x78] sm:$0xf] %v650
    %v683 = vld [vmem:[%s327] sm:$0xff]
    %v684 = vld [vmem:[%s327 + $0x8] sm:$0xff]
    %v685 = vld [vmem:[%s327 + $0x10] sm:$0xff]
    %v686 = vld [vmem:[%s327 + $0x18] sm:$0xff]
    %v687 = vld [vmem:[%s327 + $0x20] sm:$0xff]
    %v688 = vld [vmem:[%s327 + $0x28] sm:$0xff]
    %v689 = vld [vmem:[%s327 + $0x30] sm:$0xff]
    %v690 = vld [vmem:[%s327 + $0x38] sm:$0xff]
    %v691 = vld [vmem:[%s327 + $0x40] sm:$0xff]
    %v692 = vld [vmem:[%s327 + $0x48] sm:$0xff]
    %v693 = vld [vmem:[%s327 + $0x50] sm:$0xff]
    %v694 = vld [vmem:[%s327 + $0x58] sm:$0xff]
    %v695 = vld [vmem:[%s327 + $0x60] sm:$0xff]
    %v696 = vld [vmem:[%s327 + $0x68] sm:$0xff]
    %v697 = vld [vmem:[%s327 + $0x70] sm:$0xff]
    %v698 = vld [vmem:[%s327 + $0x78] sm:$0xff]
    %v699 = vld [vmem:[%s2 + $0x1] sm:$0x1]
    %v701 = vlaneseq
    %v702 = vshrl.u32 %v701, 7
    %v703 = vsub.s32 0, %v702
    %v704 = vrot.slane %v699, %v703
    %v706 = vmul.f32 %v683, %v704
    %v707 = vmul.f32 %v684, %v704
    %v708 = vmul.f32 %v685, %v704
    %v709 = vmul.f32 %v686, %v704
    %v710 = vmul.f32 %v687, %v704
    %v711 = vmul.f32 %v688, %v704
    %v712 = vmul.f32 %v689, %v704
    %v713 = vmul.f32 %v690, %v704
    %v714 = vmul.f32 %v691, %v704
    %v715 = vmul.f32 %v692, %v704
    %v716 = vmul.f32 %v693, %v704
    %v717 = vmul.f32 %v694, %v704
    %v718 = vmul.f32 %v695, %v704
    %v719 = vmul.f32 %v696, %v704
    %v720 = vmul.f32 %v697, %v704
    %v721 = vmul.f32 %v698, %v704
    %v722 = vld [vmem:[%s3 + $0x1] sm:$0x1]
    %v724 = vlaneseq
    %v725 = vshrl.u32 %v724, 7
    %v726 = vsub.s32 0, %v725
    %v727 = vrot.slane %v722, %v726
    %v729 = vadd.f32 %v706, %v727
    %v730 = vadd.f32 %v707, %v727
    %v731 = vadd.f32 %v708, %v727
    %v732 = vadd.f32 %v709, %v727
    %v733 = vadd.f32 %v710, %v727
    %v734 = vadd.f32 %v711, %v727
    %v735 = vadd.f32 %v712, %v727
    %v736 = vadd.f32 %v713, %v727
    %v737 = vadd.f32 %v714, %v727
    %v738 = vadd.f32 %v715, %v727
    %v739 = vadd.f32 %v716, %v727
    %v740 = vadd.f32 %v717, %v727
    %v741 = vadd.f32 %v718, %v727
    %v742 = vadd.f32 %v719, %v727
    %v743 = vadd.f32 %v720, %v727
    %v744 = vadd.f32 %v721, %v727
    %v745 = vpack.c.bf16 %v730, %v729
    %v746 = vpack.c.bf16 %v732, %v731
    %v747 = vpack.c.bf16 %v734, %v733
    %v748 = vpack.c.bf16 %v736, %v735
    %v749 = vpack.c.bf16 %v738, %v737
    %v750 = vpack.c.bf16 %v740, %v739
    %v751 = vpack.c.bf16 %v742, %v741
    %v752 = vpack.c.bf16 %v744, %v743
    %v761 = vunpack.c.l.b16 %v745
    %v762 = vunpack.c.h.b16 %v745
    %v763 = vunpack.c.l.b16 %v746
    %v764 = vunpack.c.h.b16 %v746
    %v765 = vunpack.c.l.b16 %v747
    %v766 = vunpack.c.h.b16 %v747
    %v767 = vunpack.c.l.b16 %v748
    %v768 = vunpack.c.h.b16 %v748
    %v769 = vunpack.c.l.b16 %v749
    %v770 = vunpack.c.h.b16 %v749
    %v771 = vunpack.c.l.b16 %v750
    %v772 = vunpack.c.h.b16 %v750
    %v773 = vunpack.c.l.b16 %v751
    %v774 = vunpack.c.h.b16 %v751
    %v775 = vunpack.c.l.b16 %v752
    %v776 = vunpack.c.h.b16 %v752
    %v777 = vpack.c.b16 %v761, %v761
    %v778 = vpack.c.b16 %v762, %v762
    %v779 = vpack.c.b16 %v763, %v763
    %v780 = vpack.c.b16 %v764, %v764
    %v781 = vpack.c.b16 %v765, %v765
    %v782 = vpack.c.b16 %v766, %v766
    %v783 = vpack.c.b16 %v767, %v767
    %v784 = vpack.c.b16 %v768, %v768
    %v785 = vpack.c.b16 %v769, %v769
    %v786 = vpack.c.b16 %v770, %v770
    %v787 = vpack.c.b16 %v771, %v771
    %v788 = vpack.c.b16 %v772, %v772
    %v789 = vpack.c.b16 %v773, %v773
    %v790 = vpack.c.b16 %v774, %v774
    %v791 = vpack.c.b16 %v775, %v775
    %v792 = vpack.c.b16 %v776, %v776
    %809 = vst [vmem:[%s4 + $0x4] sm:$0xf] %v777
    %810 = vst [vmem:[%s4 + $0xc] sm:$0xf] %v778
    %811 = vst [vmem:[%s4 + $0x14] sm:$0xf] %v779
    %812 = vst [vmem:[%s4 + $0x1c] sm:$0xf] %v780
    %813 = vst [vmem:[%s4 + $0x24] sm:$0xf] %v781
    %814 = vst [vmem:[%s4 + $0x2c] sm:$0xf] %v782
    %815 = vst [vmem:[%s4 + $0x34] sm:$0xf] %v783
    %816 = vst [vmem:[%s4 + $0x3c] sm:$0xf] %v784
    %817 = vst [vmem:[%s4 + $0x44] sm:$0xf] %v785
    %818 = vst [vmem:[%s4 + $0x4c] sm:$0xf] %v786
    %819 = vst [vmem:[%s4 + $0x54] sm:$0xf] %v787
    %820 = vst [vmem:[%s4 + $0x5c] sm:$0xf] %v788
    %821 = vst [vmem:[%s4 + $0x64] sm:$0xf] %v789
    %822 = vst [vmem:[%s4 + $0x6c] sm:$0xf] %v790
    %823 = vst [vmem:[%s4 + $0x74] sm:$0xf] %v791
    %824 = vst [vmem:[%s4 + $0x7c] sm:$0xf] %v792
  $region25: #{h2gcn_forward.4} parent=0 // pred_fallthru
    _
  // Predicated region
  $region26: #{h2gcn_forward.4} parent=0 // pred_check
    _
  $region27: #{h2gcn_forward.4} parent=0 // pred_check_branch
    %826 = sbr.rel (0) target = $region29
  $region28: #{h2gcn_forward.4} parent=0 // pred_region
    _
  $region29: #{h2gcn_forward.4} parent=0 // pred_fallthru
    _
  // Predicated region
  $region30: #{h2gcn_forward.4} parent=0 // pred_check
    _
  $region31: #{h2gcn_forward.4} parent=0 // pred_check_branch
    %828 = sbr.rel (0) target = $region33
  $region32: #{h2gcn_forward.4} parent=0 // pred_region
    _
  $region33: #{h2gcn_forward.4} parent=0 // pred_fallthru
    _

// kernel: h2gcn_forward.5
$region0: #{h2gcn_forward.5}
  #allocation0 [shape = 'u32[]', space=smem, size = 0x4, offset = 0x4, fixed_abs, tag = 'smem constant byte address 0x4 - core index']
  #allocation1 [shape = 'u32[144,128]{1,0:T(1,128)}', space=vmem, size = 0x12000, scoped, tag = 'internal scratch']
  #allocation2 [shape = 'f32[2,128,256]{2,1,0:T(8,128)}', space=vmem, size = 0x40000, scoped, tag = 'scratch operand']
  %s0 = inlined_call_operand.vmem [shape: bf16[2,128,128], index: 0, kind: input, shape index: {}]
  %s1 = inlined_call_operand.vmem [shape: bf16[128,256], index: 1, kind: input, shape index: {}, may-alias: {1,3}]
  %s2 = inlined_call_operand.vmem [shape: bf16[128,128], index: 2, kind: input, shape index: {}]
  %s3 = inlined_call_operand.vmem [shape: bf16[128,256], index: 3, kind: input, shape index: {}, may-alias: {1,3}]
  %s4 = inlined_call_operand.hbm [shape: bf16[128,128], index: 4, kind: input, shape index: {}]
  %s5 = inlined_call_operand.vmem [shape: bf16[256,128], index: 5, kind: input, shape index: {}]
  %s6 = inlined_call_operand.vmem [shape: bf16[256,128], index: 6, kind: input, shape index: {}]
  %s7 = inlined_call_operand.vmem [shape: bf16[256,128], index: 7, kind: input, shape index: {}]
  %s8 = inlined_call_operand.vmem [shape: f32[1,128], index: 8, kind: input, shape index: {}]
  %s9 = inlined_call_operand.hbm [shape: f32[128,128], index: 9, kind: output, shape index: {}]
  %s10 = sld [smem:[#allocation0]]
  $region58: #{h2gcn_forward.5} parent=0
    _
  %s12 = ssub.s32 1, %s10
  %s13 = scalar_select 0, %s12, %s10
  $region1: #{h2gcn_forward.5} parent=0
    #allocation3 [shape = 'u8[32768]{0}', space=vmem, size = 0x8000, scoped, tag = 'input window, operand 4, single buffered']
    #allocation4 [shape = 's32[1]{0}', space=sflag, size = 0x4, scoped, tag = 'scoped memory for h2gcn_forward.5']
    #allocation5 [shape = 's32[1]{0}', space=sflag, size = 0x4, scoped, tag = 'scoped memory for h2gcn_forward.5']
    #allocation6 [shape = 'u8[65536]{0}', space=vmem, size = 0x10000, scoped, tag = 'output window, operand 0, single buffered']
    %14 = vsyncpa [#allocation4], 0
    %15 = vsyncpa [#allocation5], 0
    // Predicated region
    $region2: #{h2gcn_forward.5} parent=1 // pred_check
      _
    $region3: #{h2gcn_forward.5} parent=1 // pred_check_branch
      %17 = sbr.rel (0) target = $region5
    $region4: #{h2gcn_forward.5} parent=1 // pred_region
      _
    $region5: #{h2gcn_forward.5} parent=1 // pred_fallthru
      _
    // Predicated region
    $region6: #{h2gcn_forward.5} parent=1 // pred_check
      _
    $region7: #{h2gcn_forward.5} parent=1 // pred_check_branch
      %19 = sbr.rel (0) target = $region9
    $region8: #{h2gcn_forward.5} parent=1 // pred_region
      _
    $region9: #{h2gcn_forward.5} parent=1 // pred_fallthru
      _
    // Predicated region
    $region10: #{h2gcn_forward.5} parent=1 // pred_check
      _
    $region11: #{h2gcn_forward.5} parent=1 // pred_check_branch
      %21 = sbr.rel (0) target = $region13
    $region12: #{h2gcn_forward.5} parent=1 // pred_region
      _
    $region13: #{h2gcn_forward.5} parent=1 // pred_fallthru
      _
    // Predicated region
    $region14: #{h2gcn_forward.5} parent=1 // pred_check
      _
    $region15: #{h2gcn_forward.5} parent=1 // pred_check_branch
      %23 = sbr.rel (0) target = $region17
    $region16: #{h2gcn_forward.5} parent=1 // pred_region
      _
    $region17: #{h2gcn_forward.5} parent=1 // pred_fallthru
      _
    // Predicated region
    $region18: #{h2gcn_forward.5} parent=1 // pred_check
      _
    $region19: #{h2gcn_forward.5} parent=1 // pred_check_branch
      %25 = sbr.rel (0) target = $region21
    $region20: #{h2gcn_forward.5} parent=1 // pred_region
      %s27 = ssub.s32 1024, 1024
      %28 = vsyncadd [#allocation4], %s27
      %s29 = sshll.u32 [#allocation3], 4
      %s30 = int_to_ptr.vmem [resolvable:$true] %s29
      %35 = dma.hbm_to_vmem [thread:$0]  %s4, 1024, %s30, [#allocation4], 64, 64, 4
    $region21: #{h2gcn_forward.5} parent=1 // pred_fallthru
      _
    // Predicated region
    $region22: #{h2gcn_forward.5} parent=1 // pred_check
      _
    $region23: #{h2gcn_forward.5} parent=1 // pred_check_branch
      %37 = sbr.rel (0) target = $region25
    $region24: #{h2gcn_forward.5} parent=1 // pred_region
      _
    $region25: #{h2gcn_forward.5} parent=1 // pred_fallthru
      _
    // Predicated region
    $region26: #{h2gcn_forward.5} parent=1 // pred_check
      _
    $region27: #{h2gcn_forward.5} parent=1 // pred_check_branch
      %39 = sbr.rel (0) target = $region29
    $region28: #{h2gcn_forward.5} parent=1 // pred_region
      _
    $region29: #{h2gcn_forward.5} parent=1 // pred_fallthru
      _
    // Predicated region
    $region30: #{h2gcn_forward.5} parent=1 // pred_check
      _
    $region31: #{h2gcn_forward.5} parent=1 // pred_check_branch
      %41 = sbr.rel (0) target = $region33
    $region32: #{h2gcn_forward.5} parent=1 // pred_region
      _
    $region33: #{h2gcn_forward.5} parent=1 // pred_fallthru
      _
    // Predicated region
    $region34: #{h2gcn_forward.5} parent=1 // pred_check
      _
    $region35: #{h2gcn_forward.5} parent=1 // pred_check_branch
      %43 = sbr.rel (0) target = $region37
    $region36: #{h2gcn_forward.5} parent=1 // pred_region
      _
    $region37: #{h2gcn_forward.5} parent=1 // pred_fallthru
      _
    // Predicated region
    $region38: #{h2gcn_forward.5} parent=1 // pred_check
      _
    $region39: #{h2gcn_forward.5} parent=1 // pred_check_branch
      %45 = sbr.rel (0) target = $region41
    $region40: #{h2gcn_forward.5} parent=1 // pred_region
      %46 = dma.done [#allocation4], 1024
    $region41: #{h2gcn_forward.5} parent=1 // pred_fallthru
      _
    %p48 = scmp.eq.s32.totalorder 0, 0
    // Predicated region
    $region42: #{h2gcn_forward.5} parent=1 // pred_check
      %p49 = pneg %p48
    $region43: #{h2gcn_forward.5} parent=1 // pred_check_branch
      %51 = sbr.rel (%p49) target = $region45
    $region44: #{h2gcn_forward.5} parent=1 // pred_region
      %52 = vst [vmem:[#allocation2] sm:$0xff] 0.0
      %53 = vst [vmem:[#allocation2 + $0x8] sm:$0xff] 0.0
      %54 = vst [vmem:[#allocation2 + $0x10] sm:$0xff] 0.0
      %55 = vst [vmem:[#allocation2 + $0x18] sm:$0xff] 0.0
      %56 = vst [vmem:[#allocation2 + $0x20] sm:$0xff] 0.0
      %57 = vst [vmem:[#allocation2 + $0x28] sm:$0xff] 0.0
      %58 = vst [vmem:[#allocation2 + $0x30] sm:$0xff] 0.0
      %59 = vst [vmem:[#allocation2 + $0x38] sm:$0xff] 0.0
      %60 = vst [vmem:[#allocation2 + $0x40] sm:$0xff] 0.0
      %61 = vst [vmem:[#allocation2 + $0x48] sm:$0xff] 0.0
      %62 = vst [vmem:[#allocation2 + $0x50] sm:$0xff] 0.0
      %63 = vst [vmem:[#allocation2 + $0x58] sm:$0xff] 0.0
      %64 = vst [vmem:[#allocation2 + $0x60] sm:$0xff] 0.0
      %65 = vst [vmem:[#allocation2 + $0x68] sm:$0xff] 0.0
      %66 = vst [vmem:[#allocation2 + $0x70] sm:$0xff] 0.0
      %67 = vst [vmem:[#allocation2 + $0x78] sm:$0xff] 0.0
      %68 = vst [vmem:[#allocation2 + $0x80] sm:$0xff] 0.0
      %69 = vst [vmem:[#allocation2 + $0x88] sm:$0xff] 0.0
      %70 = vst [vmem:[#allocation2 + $0x90] sm:$0xff] 0.0
      %71 = vst [vmem:[#allocation2 + $0x98] sm:$0xff] 0.0
      %72 = vst [vmem:[#allocation2 + $0xa0] sm:$0xff] 0.0
      %73 = vst [vmem:[#allocation2 + $0xa8] sm:$0xff] 0.0
      %74 = vst [vmem:[#allocation2 + $0xb0] sm:$0xff] 0.0
      %75 = vst [vmem:[#allocation2 + $0xb8] sm:$0xff] 0.0
      %76 = vst [vmem:[#allocation2 + $0xc0] sm:$0xff] 0.0
      %77 = vst [vmem:[#allocation2 + $0xc8] sm:$0xff] 0.0
      %78 = vst [vmem:[#allocation2 + $0xd0] sm:$0xff] 0.0
      %79 = vst [vmem:[#allocation2 + $0xd8] sm:$0xff] 0.0
      %80 = vst [vmem:[#allocation2 + $0xe0] sm:$0xff] 0.0
      %81 = vst [vmem:[#allocation2 + $0xe8] sm:$0xff] 0.0
      %82 = vst [vmem:[#allocation2 + $0xf0] sm:$0xff] 0.0
      %83 = vst [vmem:[#allocation2 + $0xf8] sm:$0xff] 0.0
      %84 = vst [vmem:[#allocation2 + $0x100] sm:$0xff] 0.0
      %85 = vst [vmem:[#allocation2 + $0x108] sm:$0xff] 0.0
      %86 = vst [vmem:[#allocation2 + $0x110] sm:$0xff] 0.0
      %87 = vst [vmem:[#allocation2 + $0x118] sm:$0xff] 0.0
      %88 = vst [vmem:[#allocation2 + $0x120] sm:$0xff] 0.0
      %89 = vst [vmem:[#allocation2 + $0x128] sm:$0xff] 0.0
      %90 = vst [vmem:[#allocation2 + $0x130] sm:$0xff] 0.0
      %91 = vst [vmem:[#allocation2 + $0x138] sm:$0xff] 0.0
      %92 = vst [vmem:[#allocation2 + $0x140] sm:$0xff] 0.0
      %93 = vst [vmem:[#allocation2 + $0x148] sm:$0xff] 0.0
      %94 = vst [vmem:[#allocation2 + $0x150] sm:$0xff] 0.0
      %95 = vst [vmem:[#allocation2 + $0x158] sm:$0xff] 0.0
      %96 = vst [vmem:[#allocation2 + $0x160] sm:$0xff] 0.0
      %97 = vst [vmem:[#allocation2 + $0x168] sm:$0xff] 0.0
      %98 = vst [vmem:[#allocation2 + $0x170] sm:$0xff] 0.0
      %99 = vst [vmem:[#allocation2 + $0x178] sm:$0xff] 0.0
      %100 = vst [vmem:[#allocation2 + $0x180] sm:$0xff] 0.0
      %101 = vst [vmem:[#allocation2 + $0x188] sm:$0xff] 0.0
      %102 = vst [vmem:[#allocation2 + $0x190] sm:$0xff] 0.0
      %103 = vst [vmem:[#allocation2 + $0x198] sm:$0xff] 0.0
      %104 = vst [vmem:[#allocation2 + $0x1a0] sm:$0xff] 0.0
      %105 = vst [vmem:[#allocation2 + $0x1a8] sm:$0xff] 0.0
      %106 = vst [vmem:[#allocation2 + $0x1b0] sm:$0xff] 0.0
      %107 = vst [vmem:[#allocation2 + $0x1b8] sm:$0xff] 0.0
      %108 = vst [vmem:[#allocation2 + $0x1c0] sm:$0xff] 0.0
      %109 = vst [vmem:[#allocation2 + $0x1c8] sm:$0xff] 0.0
      %110 = vst [vmem:[#allocation2 + $0x1d0] sm:$0xff] 0.0
      %111 = vst [vmem:[#allocation2 + $0x1d8] sm:$0xff] 0.0
      %112 = vst [vmem:[#allocation2 + $0x1e0] sm:$0xff] 0.0
      %113 = vst [vmem:[#allocation2 + $0x1e8] sm:$0xff] 0.0
      %114 = vst [vmem:[#allocation2 + $0x1f0] sm:$0xff] 0.0
      %115 = vst [vmem:[#allocation2 + $0x1f8] sm:$0xff] 0.0
    $region45: #{h2gcn_forward.5} parent=1 // pred_fallthru
      _
    %v116 = vld [vmem:[%s1] sm:$0xff]
    %v117 = vld [vmem:[%s1 + $0x8] sm:$0xff]
    %v118 = vld [vmem:[%s1 + $0x10] sm:$0xff]
    %v119 = vld [vmem:[%s1 + $0x18] sm:$0xff]
    %v120 = vld [vmem:[%s1 + $0x20] sm:$0xff]
    %v121 = vld [vmem:[%s1 + $0x28] sm:$0xff]
    %v122 = vld [vmem:[%s1 + $0x30] sm:$0xff]
    %v123 = vld [vmem:[%s1 + $0x38] sm:$0xff]
    %v124 = vld [vmem:[%s1 + $0x40] sm:$0xff]
    %v125 = vld [vmem:[%s1 + $0x48] sm:$0xff]
    %v126 = vld [vmem:[%s1 + $0x50] sm:$0xff]
    %v127 = vld [vmem:[%s1 + $0x58] sm:$0xff]
    %v128 = vld [vmem:[%s1 + $0x60] sm:$0xff]
    %v129 = vld [vmem:[%s1 + $0x68] sm:$0xff]
    %v130 = vld [vmem:[%s1 + $0x70] sm:$0xff]
    %v131 = vld [vmem:[%s1 + $0x78] sm:$0xff]
    %v132 = vld [vmem:[#allocation2] sm:$0xff]
    %v133 = vld [vmem:[#allocation2 + $0x8] sm:$0xff]
    %v134 = vld [vmem:[#allocation2 + $0x10] sm:$0xff]
    %v135 = vld [vmem:[#allocation2 + $0x18] sm:$0xff]
    %v136 = vld [vmem:[#allocation2 + $0x20] sm:$0xff]
    %v137 = vld [vmem:[#allocation2 + $0x28] sm:$0xff]
    %v138 = vld [vmem:[#allocation2 + $0x30] sm:$0xff]
    %v139 = vld [vmem:[#allocation2 + $0x38] sm:$0xff]
    %v140 = vld [vmem:[#allocation2 + $0x40] sm:$0xff]
    %v141 = vld [vmem:[#allocation2 + $0x48] sm:$0xff]
    %v142 = vld [vmem:[#allocation2 + $0x50] sm:$0xff]
    %v143 = vld [vmem:[#allocation2 + $0x58] sm:$0xff]
    %v144 = vld [vmem:[#allocation2 + $0x60] sm:$0xff]
    %v145 = vld [vmem:[#allocation2 + $0x68] sm:$0xff]
    %v146 = vld [vmem:[#allocation2 + $0x70] sm:$0xff]
    %v147 = vld [vmem:[#allocation2 + $0x78] sm:$0xff]
    %v148 = vld [vmem:[#allocation2 + $0x80] sm:$0xff]
    %v149 = vld [vmem:[#allocation2 + $0x88] sm:$0xff]
    %v150 = vld [vmem:[#allocation2 + $0x90] sm:$0xff]
    %v151 = vld [vmem:[#allocation2 + $0x98] sm:$0xff]
    %v152 = vld [vmem:[#allocation2 + $0xa0] sm:$0xff]
    %v153 = vld [vmem:[#allocation2 + $0xa8] sm:$0xff]
    %v154 = vld [vmem:[#allocation2 + $0xb0] sm:$0xff]
    %v155 = vld [vmem:[#allocation2 + $0xb8] sm:$0xff]
    %v156 = vld [vmem:[#allocation2 + $0xc0] sm:$0xff]
    %v157 = vld [vmem:[#allocation2 + $0xc8] sm:$0xff]
    %v158 = vld [vmem:[#allocation2 + $0xd0] sm:$0xff]
    %v159 = vld [vmem:[#allocation2 + $0xd8] sm:$0xff]
    %v160 = vld [vmem:[#allocation2 + $0xe0] sm:$0xff]
    %v161 = vld [vmem:[#allocation2 + $0xe8] sm:$0xff]
    %v162 = vld [vmem:[#allocation2 + $0xf0] sm:$0xff]
    %v163 = vld [vmem:[#allocation2 + $0xf8] sm:$0xff]
    %v164 = vld [vmem:[%s0] sm:$0xf]
    %v165 = vld [vmem:[%s0 + $0x4] sm:$0xf]
    %v166 = vld [vmem:[%s0 + $0x8] sm:$0xf]
    %v167 = vld [vmem:[%s0 + $0xc] sm:$0xf]
    %v168 = vld [vmem:[%s0 + $0x10] sm:$0xf]
    %v169 = vld [vmem:[%s0 + $0x14] sm:$0xf]
    %v170 = vld [vmem:[%s0 + $0x18] sm:$0xf]
    %v171 = vld [vmem:[%s0 + $0x1c] sm:$0xf]
    %v172 = vld [vmem:[%s0 + $0x20] sm:$0xf]
    %v173 = vld [vmem:[%s0 + $0x24] sm:$0xf]
    %v174 = vld [vmem:[%s0 + $0x28] sm:$0xf]
    %v175 = vld [vmem:[%s0 + $0x2c] sm:$0xf]
    %v176 = vld [vmem:[%s0 + $0x30] sm:$0xf]
    %v177 = vld [vmem:[%s0 + $0x34] sm:$0xf]
    %v178 = vld [vmem:[%s0 + $0x38] sm:$0xf]
    %v179 = vld [vmem:[%s0 + $0x3c] sm:$0xf]
    %v196 = vunpack.c.l.b16 %v164
    %v197 = vunpack.c.l.b16 %v165
    %v198 = vunpack.c.l.b16 %v166
    %v199 = vunpack.c.l.b16 %v167
    %v200 = vunpack.c.l.b16 %v168
    %v201 = vunpack.c.l.b16 %v169
    %v202 = vunpack.c.l.b16 %v170
    %v203 = vunpack.c.l.b16 %v171
    %v204 = vunpack.c.l.b16 %v172
    %v205 = vunpack.c.l.b16 %v173
    %v206 = vunpack.c.l.b16 %v174
    %v207 = vunpack.c.l.b16 %v175
    %v208 = vunpack.c.l.b16 %v176
    %v209 = vunpack.c.l.b16 %v177
    %v210 = vunpack.c.l.b16 %v178
    %v211 = vunpack.c.l.b16 %v179
    %v212 = vpack.c.b16 %v197, %v196
    %v213 = vpack.c.b16 %v199, %v198
    %v214 = vpack.c.b16 %v201, %v200
    %v215 = vpack.c.b16 %v203, %v202
    %v216 = vpack.c.b16 %v205, %v204
    %v217 = vpack.c.b16 %v207, %v206
    %v218 = vpack.c.b16 %v209, %v208
    %v219 = vpack.c.b16 %v211, %v210
    %v244 = vunpack.c.l.b16 %v116
    %v245 = vunpack.c.h.b16 %v116
    %v246 = vunpack.c.l.b16 %v117
    %v247 = vunpack.c.h.b16 %v117
    %v248 = vunpack.c.l.b16 %v118
    %v249 = vunpack.c.h.b16 %v118
    %v250 = vunpack.c.l.b16 %v119
    %v251 = vunpack.c.h.b16 %v119
    %v252 = vunpack.c.l.b16 %v120
    %v253 = vunpack.c.h.b16 %v120
    %v254 = vunpack.c.l.b16 %v121
    %v255 = vunpack.c.h.b16 %v121
    %v256 = vunpack.c.l.b16 %v122
    %v257 = vunpack.c.h.b16 %v122
    %v258 = vunpack.c.l.b16 %v123
    %v259 = vunpack.c.h.b16 %v123
    %v260 = vunpack.c.l.b16 %v124
    %v261 = vunpack.c.h.b16 %v124
    %v262 = vunpack.c.l.b16 %v125
    %v263 = vunpack.c.h.b16 %v125
    %v264 = vunpack.c.l.b16 %v126
    %v265 = vunpack.c.h.b16 %v126
    %v266 = vunpack.c.l.b16 %v127
    %v267 = vunpack.c.h.b16 %v127
    %v268 = vunpack.c.l.b16 %v128
    %v269 = vunpack.c.h.b16 %v128
    %v270 = vunpack.c.l.b16 %v129
    %v271 = vunpack.c.h.b16 %v129
    %v272 = vunpack.c.l.b16 %v130
    %v273 = vunpack.c.h.b16 %v130
    %v274 = vunpack.c.l.b16 %v131
    %v275 = vunpack.c.h.b16 %v131
    %v276 = vpack.c.b16 %v246, %v244
    %v277 = vpack.c.b16 %v247, %v245
    %v278 = vpack.c.b16 %v250, %v248
    %v279 = vpack.c.b16 %v251, %v249
    %v280 = vpack.c.b16 %v254, %v252
    %v281 = vpack.c.b16 %v255, %v253
    %v282 = vpack.c.b16 %v258, %v256
    %v283 = vpack.c.b16 %v259, %v257
    %v284 = vpack.c.b16 %v262, %v260
    %v285 = vpack.c.b16 %v263, %v261
    %v286 = vpack.c.b16 %v266, %v264
    %v287 = vpack.c.b16 %v267, %v265
    %v288 = vpack.c.b16 %v270, %v268
    %v289 = vpack.c.b16 %v271, %v269
    %v290 = vpack.c.b16 %v274, %v272
    %v291 = vpack.c.b16 %v275, %v273
    %308 = vmatprep.subr.bf16.mxu0 %v291
    %309 = vmatpush1.bf16.msra.mxu0 %v290
    %310 = vmatprep.subr.bf16.mxu0 %v289
    %311 = vmatpush1.bf16.msra.mxu0 %v288
    %312 = vmatprep.subr.bf16.mxu0 %v287
    %313 = vmatpush1.bf16.msra.mxu0 %v286
    %314 = vmatprep.subr.bf16.mxu0 %v285
    %315 = vmatpush1.bf16.msra.mxu0 %v284
    %316 = vmatprep.subr.bf16.mxu0 %v283
    %317 = vmatpush1.bf16.msra.mxu0 %v282
    %318 = vmatprep.subr.bf16.mxu0 %v281
    %319 = vmatpush1.bf16.msra.mxu0 %v280
    %320 = vmatprep.subr.bf16.mxu0 %v279
    %321 = vmatpush1.bf16.msra.mxu0 %v278
    %322 = vmatprep.subr.bf16.mxu0 %v277
    %323 = vmatpush1.bf16.msra.mxu0 %v276
    %324 = vmatprep.subr.bf16.mxu0 0
    %325 = vmatpush2.bf16.msra.mxu0 0
    %326 = vmatprep.subr.bf16.mxu0 0
    %327 = vmatpush2.bf16.msra.mxu0 0
    %328 = vmatprep.subr.bf16.mxu0 0
    %329 = vmatpush2.bf16.msra.mxu0 0
    %330 = vmatprep.subr.bf16.mxu0 0
    %331 = vmatpush2.bf16.msra.mxu0 0
    %332 = vmatprep.subr.bf16.mxu0 0
    %333 = vmatpush2.bf16.msra.mxu0 0
    %334 = vmatprep.subr.bf16.mxu0 0
    %335 = vmatpush2.bf16.msra.mxu0 0
    %336 = vmatprep.subr.bf16.mxu0 0
    %337 = vmatpush2.bf16.msra.mxu0 0
    %338 = vmatprep.subr.bf16.mxu0 0
    %339 = vmatpush2.bf16.msra.mxu0 0
    %340 = vmatprep.mubr.bf16.mxu0 0
    %341 = vmatmul.mubr.bf16.gmra.mxu0 %v212
    %v342 = vpop.f32.mrf.mxu0
    %v343 = vadd.f32 0.0, %v342
    %v344 = vpop.f32.mrf.mxu0
    %v345 = vadd.f32 0.0, %v344
    %v346 = vpop.f32.mrf.mxu0
    %v347 = vadd.f32 0.0, %v346
    %v348 = vpop.f32.mrf.mxu0
    %v349 = vadd.f32 0.0, %v348
    %350 = vmatprep.mubr.bf16.mxu0 0
    %351 = vmatmul.mubr.bf16.gmra.mxu0 %v213
    %v352 = vpop.f32.mrf.mxu0
    %v353 = vadd.f32 0.0, %v352
    %v354 = vpop.f32.mrf.mxu0
    %v355 = vadd.f32 0.0, %v354
    %v356 = vpop.f32.mrf.mxu0
    %v357 = vadd.f32 0.0, %v356
    %v358 = vpop.f32.mrf.mxu0
    %v359 = vadd.f32 0.0, %v358
    %360 = vmatprep.mubr.bf16.mxu0 0
    %361 = vmatmul.mubr.bf16.gmra.mxu0 %v214
    %v362 = vpop.f32.mrf.mxu0
    %v363 = vadd.f32 0.0, %v362
    %v364 = vpop.f32.mrf.mxu0
    %v365 = vadd.f32 0.0, %v364
    %v366 = vpop.f32.mrf.mxu0
    %v367 = vadd.f32 0.0, %v366
    %v368 = vpop.f32.mrf.mxu0
    %v369 = vadd.f32 0.0, %v368
    %370 = vmatprep.mubr.bf16.mxu0 0
    %371 = vmatmul.mubr.bf16.gmra.mxu0 %v215
    %v372 = vpop.f32.mrf.mxu0
    %v373 = vadd.f32 0.0, %v372
    %v374 = vpop.f32.mrf.mxu0
    %v375 = vadd.f32 0.0, %v374
    %v376 = vpop.f32.mrf.mxu0
    %v377 = vadd.f32 0.0, %v376
    %v378 = vpop.f32.mrf.mxu0
    %v379 = vadd.f32 0.0, %v378
    %380 = vmatprep.mubr.bf16.mxu0 0
    %381 = vmatmul.mubr.bf16.gmra.mxu0 %v216
    %v382 = vpop.f32.mrf.mxu0
    %v383 = vadd.f32 0.0, %v382
    %v384 = vpop.f32.mrf.mxu0
    %v385 = vadd.f32 0.0, %v384
    %v386 = vpop.f32.mrf.mxu0
    %v387 = vadd.f32 0.0, %v386
    %v388 = vpop.f32.mrf.mxu0
    %v389 = vadd.f32 0.0, %v388
    %390 = vmatprep.mubr.bf16.mxu0 0
    %391 = vmatmul.mubr.bf16.gmra.mxu0 %v217
    %v392 = vpop.f32.mrf.mxu0
    %v393 = vadd.f32 0.0, %v392
    %v394 = vpop.f32.mrf.mxu0
    %v395 = vadd.f32 0.0, %v394
    %v396 = vpop.f32.mrf.mxu0
    %v397 = vadd.f32 0.0, %v396
    %v398 = vpop.f32.mrf.mxu0
    %v399 = vadd.f32 0.0, %v398
    %400 = vmatprep.mubr.bf16.mxu0 0
    %401 = vmatmul.mubr.bf16.gmra.mxu0 %v218
    %v402 = vpop.f32.mrf.mxu0
    %v403 = vadd.f32 0.0, %v402
    %v404 = vpop.f32.mrf.mxu0
    %v405 = vadd.f32 0.0, %v404
    %v406 = vpop.f32.mrf.mxu0
    %v407 = vadd.f32 0.0, %v406
    %v408 = vpop.f32.mrf.mxu0
    %v409 = vadd.f32 0.0, %v408
    %410 = vmatprep.mubr.bf16.mxu0 0
    %411 = vmatmul.mubr.bf16.gmra.mxu0 %v219
    %v412 = vpop.f32.mrf.mxu0
    %v413 = vadd.f32 0.0, %v412
    %v414 = vpop.f32.mrf.mxu0
    %v415 = vadd.f32 0.0, %v414
    %v416 = vpop.f32.mrf.mxu0
    %v417 = vadd.f32 0.0, %v416
    %v418 = vpop.f32.mrf.mxu0
    %v419 = vadd.f32 0.0, %v418
    %420 = vdwg.mxu0
    %v421 = vadd.f32 %v132, %v343
    %v422 = vadd.f32 %v133, %v345
    %v423 = vadd.f32 %v134, %v347
    %v424 = vadd.f32 %v135, %v349
    %v425 = vadd.f32 %v136, %v353
    %v426 = vadd.f32 %v137, %v355
    %v427 = vadd.f32 %v138, %v357
    %v428 = vadd.f32 %v139, %v359
    %v429 = vadd.f32 %v140, %v363
    %v430 = vadd.f32 %v141, %v365
    %v431 = vadd.f32 %v142, %v367
    %v432 = vadd.f32 %v143, %v369
    %v433 = vadd.f32 %v144, %v373
    %v434 = vadd.f32 %v145, %v375
    %v435 = vadd.f32 %v146, %v377
    %v436 = vadd.f32 %v147, %v379
    %v437 = vadd.f32 %v148, %v383
    %v438 = vadd.f32 %v149, %v385
    %v439 = vadd.f32 %v150, %v387
    %v440 = vadd.f32 %v151, %v389
    %v441 = vadd.f32 %v152, %v393
    %v442 = vadd.f32 %v153, %v395
    %v443 = vadd.f32 %v154, %v397
    %v444 = vadd.f32 %v155, %v399
    %v445 = vadd.f32 %v156, %v403
    %v446 = vadd.f32 %v157, %v405
    %v447 = vadd.f32 %v158, %v407
    %v448 = vadd.f32 %v159, %v409
    %v449 = vadd.f32 %v160, %v413
    %v450 = vadd.f32 %v161, %v415
    %v451 = vadd.f32 %v162, %v417
    %v452 = vadd.f32 %v163, %v419
    %453 = vst [vmem:[#allocation2] sm:$0xff] %v421
    %454 = vst [vmem:[#allocation2 + $0x8] sm:$0xff] %v422
    %455 = vst [vmem:[#allocation2 + $0x10] sm:$0xff] %v423
    %456 = vst [vmem:[#allocation2 + $0x18] sm:$0xff] %v424
    %457 = vst [vmem:[#allocation2 + $0x20] sm:$0xff] %v425
    %458 = vst [vmem:[#allocation2 + $0x28] sm:$0xff] %v426
    %459 = vst [vmem:[#allocation2 + $0x30] sm:$0xff] %v427
    %460 = vst [vmem:[#allocation2 + $0x38] sm:$0xff] %v428
    %461 = vst [vmem:[#allocation2 + $0x40] sm:$0xff] %v429
    %462 = vst [vmem:[#allocation2 + $0x48] sm:$0xff] %v430
    %463 = vst [vmem:[#allocation2 + $0x50] sm:$0xff] %v431
    %464 = vst [vmem:[#allocation2 + $0x58] sm:$0xff] %v432
    %465 = vst [vmem:[#allocation2 + $0x60] sm:$0xff] %v433
    %466 = vst [vmem:[#allocation2 + $0x68] sm:$0xff] %v434
    %467 = vst [vmem:[#allocation2 + $0x70] sm:$0xff] %v435
    %468 = vst [vmem:[#allocation2 + $0x78] sm:$0xff] %v436
    %469 = vst [vmem:[#allocation2 + $0x80] sm:$0xff] %v437
    %470 = vst [vmem:[#allocation2 + $0x88] sm:$0xff] %v438
    %471 = vst [vmem:[#allocation2 + $0x90] sm:$0xff] %v439
    %472 = vst [vmem:[#allocation2 + $0x98] sm:$0xff] %v440
    %473 = vst [vmem:[#allocation2 + $0xa0] sm:$0xff] %v441
    %474 = vst [vmem:[#allocation2 + $0xa8] sm:$0xff] %v442
    %475 = vst [vmem:[#allocation2 + $0xb0] sm:$0xff] %v443
    %476 = vst [vmem:[#allocation2 + $0xb8] sm:$0xff] %v444
    %477 = vst [vmem:[#allocation2 + $0xc0] sm:$0xff] %v445
    %478 = vst [vmem:[#allocation2 + $0xc8] sm:$0xff] %v446
    %479 = vst [vmem:[#allocation2 + $0xd0] sm:$0xff] %v447
    %480 = vst [vmem:[#allocation2 + $0xd8] sm:$0xff] %v448
    %481 = vst [vmem:[#allocation2 + $0xe0] sm:$0xff] %v449
    %482 = vst [vmem:[#allocation2 + $0xe8] sm:$0xff] %v450
    %483 = vst [vmem:[#allocation2 + $0xf0] sm:$0xff] %v451
    %484 = vst [vmem:[#allocation2 + $0xf8] sm:$0xff] %v452
    %s485 = scalar_lea.vmem [#allocation2], 256
    %v486 = vld [vmem:[%s485] sm:$0xff]
    %v487 = vld [vmem:[%s485 + $0x8] sm:$0xff]
    %v488 = vld [vmem:[%s485 + $0x10] sm:$0xff]
    %v489 = vld [vmem:[%s485 + $0x18] sm:$0xff]
    %v490 = vld [vmem:[%s485 + $0x20] sm:$0xff]
    %v491 = vld [vmem:[%s485 + $0x28] sm:$0xff]
    %v492 = vld [vmem:[%s485 + $0x30] sm:$0xff]
    %v493 = vld [vmem:[%s485 + $0x38] sm:$0xff]
    %v494 = vld [vmem:[%s485 + $0x40] sm:$0xff]
    %v495 = vld [vmem:[%s485 + $0x48] sm:$0xff]
    %v496 = vld [vmem:[%s485 + $0x50] sm:$0xff]
    %v497 = vld [vmem:[%s485 + $0x58] sm:$0xff]
    %v498 = vld [vmem:[%s485 + $0x60] sm:$0xff]
    %v499 = vld [vmem:[%s485 + $0x68] sm:$0xff]
    %v500 = vld [vmem:[%s485 + $0x70] sm:$0xff]
    %v501 = vld [vmem:[%s485 + $0x78] sm:$0xff]
    %v502 = vld [vmem:[%s485 + $0x80] sm:$0xff]
    %v503 = vld [vmem:[%s485 + $0x88] sm:$0xff]
    %v504 = vld [vmem:[%s485 + $0x90] sm:$0xff]
    %v505 = vld [vmem:[%s485 + $0x98] sm:$0xff]
    %v506 = vld [vmem:[%s485 + $0xa0] sm:$0xff]
    %v507 = vld [vmem:[%s485 + $0xa8] sm:$0xff]
    %v508 = vld [vmem:[%s485 + $0xb0] sm:$0xff]
    %v509 = vld [vmem:[%s485 + $0xb8] sm:$0xff]
    %v510 = vld [vmem:[%s485 + $0xc0] sm:$0xff]
    %v511 = vld [vmem:[%s485 + $0xc8] sm:$0xff]
    %v512 = vld [vmem:[%s485 + $0xd0] sm:$0xff]
    %v513 = vld [vmem:[%s485 + $0xd8] sm:$0xff]
    %v514 = vld [vmem:[%s485 + $0xe0] sm:$0xff]
    %v515 = vld [vmem:[%s485 + $0xe8] sm:$0xff]
    %v516 = vld [vmem:[%s485 + $0xf0] sm:$0xff]
    %v517 = vld [vmem:[%s485 + $0xf8] sm:$0xff]
    %s518 = scalar_lea.vmem %s0, 64
    %v519 = vld [vmem:[%s518] sm:$0xf]
    %v520 = vld [vmem:[%s518 + $0x4] sm:$0xf]
    %v521 = vld [vmem:[%s518 + $0x8] sm:$0xf]
    %v522 = vld [vmem:[%s518 + $0xc] sm:$0xf]
    %v523 = vld [vmem:[%s518 + $0x10] sm:$0xf]
    %v524 = vld [vmem:[%s518 + $0x14] sm:$0xf]
    %v525 = vld [vmem:[%s518 + $0x18] sm:$0xf]
    %v526 = vld [vmem:[%s518 + $0x1c] sm:$0xf]
    %v527 = vld [vmem:[%s518 + $0x20] sm:$0xf]
    %v528 = vld [vmem:[%s518 + $0x24] sm:$0xf]
    %v529 = vld [vmem:[%s518 + $0x28] sm:$0xf]
    %v530 = vld [vmem:[%s518 + $0x2c] sm:$0xf]
    %v531 = vld [vmem:[%s518 + $0x30] sm:$0xf]
    %v532 = vld [vmem:[%s518 + $0x34] sm:$0xf]
    %v533 = vld [vmem:[%s518 + $0x38] sm:$0xf]
    %v534 = vld [vmem:[%s518 + $0x3c] sm:$0xf]
    %v551 = vunpack.c.l.b16 %v519
    %v552 = vunpack.c.l.b16 %v520
    %v553 = vunpack.c.l.b16 %v521
    %v554 = vunpack.c.l.b16 %v522
    %v555 = vunpack.c.l.b16 %v523
    %v556 = vunpack.c.l.b16 %v524
    %v557 = vunpack.c.l.b16 %v525
    %v558 = vunpack.c.l.b16 %v526
    %v559 = vunpack.c.l.b16 %v527
    %v560 = vunpack.c.l.b16 %v528
    %v561 = vunpack.c.l.b16 %v529
    %v562 = vunpack.c.l.b16 %v530
    %v563 = vunpack.c.l.b16 %v531
    %v564 = vunpack.c.l.b16 %v532
    %v565 = vunpack.c.l.b16 %v533
    %v566 = vunpack.c.l.b16 %v534
    %v567 = vpack.c.b16 %v552, %v551
    %v568 = vpack.c.b16 %v554, %v553
    %v569 = vpack.c.b16 %v556, %v555
    %v570 = vpack.c.b16 %v558, %v557
    %v571 = vpack.c.b16 %v560, %v559
    %v572 = vpack.c.b16 %v562, %v561
    %v573 = vpack.c.b16 %v564, %v563
    %v574 = vpack.c.b16 %v566, %v565
    %583 = vmatprep.subr.bf16.mxu0 %v291
    %584 = vmatpush1.bf16.msra.mxu0 %v290
    %585 = vmatprep.subr.bf16.mxu0 %v289
    %586 = vmatpush1.bf16.msra.mxu0 %v288
    %587 = vmatprep.subr.bf16.mxu0 %v287
    %588 = vmatpush1.bf16.msra.mxu0 %v286
    %589 = vmatprep.subr.bf16.mxu0 %v285
    %590 = vmatpush1.bf16.msra.mxu0 %v284
    %591 = vmatprep.subr.bf16.mxu0 %v283
    %592 = vmatpush1.bf16.msra.mxu0 %v282
    %593 = vmatprep.subr.bf16.mxu0 %v281
    %594 = vmatpush1.bf16.msra.mxu0 %v280
    %595 = vmatprep.subr.bf16.mxu0 %v279
    %596 = vmatpush1.bf16.msra.mxu0 %v278
    %597 = vmatprep.subr.bf16.mxu0 %v277
    %598 = vmatpush1.bf16.msra.mxu0 %v276
    %599 = vmatprep.subr.bf16.mxu0 0
    %600 = vmatpush2.bf16.msra.mxu0 0
    %601 = vmatprep.subr.bf16.mxu0 0
    %602 = vmatpush2.bf16.msra.mxu0 0
    %603 = vmatprep.subr.bf16.mxu0 0
    %604 = vmatpush2.bf16.msra.mxu0 0
    %605 = vmatprep.subr.bf16.mxu0 0
    %606 = vmatpush2.bf16.msra.mxu0 0
    %607 = vmatprep.subr.bf16.mxu0 0
    %608 = vmatpush2.bf16.msra.mxu0 0
    %609 = vmatprep.subr.bf16.mxu0 0
    %610 = vmatpush2.bf16.msra.mxu0 0
    %611 = vmatprep.subr.bf16.mxu0 0
    %612 = vmatpush2.bf16.msra.mxu0 0
    %613 = vmatprep.subr.bf16.mxu0 0
    %614 = vmatpush2.bf16.msra.mxu0 0
    %615 = vmatprep.mubr.bf16.mxu0 0
    %616 = vmatmul.mubr.bf16.gmra.mxu0 %v567
    %v617 = vpop.f32.mrf.mxu0
    %v618 = vadd.f32 0.0, %v617
    %v619 = vpop.f32.mrf.mxu0
    %v620 = vadd.f32 0.0, %v619
    %v621 = vpop.f32.mrf.mxu0
    %v622 = vadd.f32 0.0, %v621
    %v623 = vpop.f32.mrf.mxu0
    %v624 = vadd.f32 0.0, %v623
    %625 = vmatprep.mubr.bf16.mxu0 0
    %626 = vmatmul.mubr.bf16.gmra.mxu0 %v568
    %v627 = vpop.f32.mrf.mxu0
    %v628 = vadd.f32 0.0, %v627
    %v629 = vpop.f32.mrf.mxu0
    %v630 = vadd.f32 0.0, %v629
    %v631 = vpop.f32.mrf.mxu0
    %v632 = vadd.f32 0.0, %v631
    %v633 = vpop.f32.mrf.mxu0
    %v634 = vadd.f32 0.0, %v633
    %635 = vmatprep.mubr.bf16.mxu0 0
    %636 = vmatmul.mubr.bf16.gmra.mxu0 %v569
    %v637 = vpop.f32.mrf.mxu0
    %v638 = vadd.f32 0.0, %v637
    %v639 = vpop.f32.mrf.mxu0
    %v640 = vadd.f32 0.0, %v639
    %v641 = vpop.f32.mrf.mxu0
    %v642 = vadd.f32 0.0, %v641
    %v643 = vpop.f32.mrf.mxu0
    %v644 = vadd.f32 0.0, %v643
    %645 = vmatprep.mubr.bf16.mxu0 0
    %646 = vmatmul.mubr.bf16.gmra.mxu0 %v570
    %v647 = vpop.f32.mrf.mxu0
    %v648 = vadd.f32 0.0, %v647
    %v649 = vpop.f32.mrf.mxu0
    %v650 = vadd.f32 0.0, %v649
    %v651 = vpop.f32.mrf.mxu0
    %v652 = vadd.f32 0.0, %v651
    %v653 = vpop.f32.mrf.mxu0
    %v654 = vadd.f32 0.0, %v653
    %655 = vmatprep.mubr.bf16.mxu0 0
    %656 = vmatmul.mubr.bf16.gmra.mxu0 %v571
    %v657 = vpop.f32.mrf.mxu0
    %v658 = vadd.f32 0.0, %v657
    %v659 = vpop.f32.mrf.mxu0
    %v660 = vadd.f32 0.0, %v659
    %v661 = vpop.f32.mrf.mxu0
    %v662 = vadd.f32 0.0, %v661
    %v663 = vpop.f32.mrf.mxu0
    %v664 = vadd.f32 0.0, %v663
    %665 = vmatprep.mubr.bf16.mxu0 0
    %666 = vmatmul.mubr.bf16.gmra.mxu0 %v572
    %v667 = vpop.f32.mrf.mxu0
    %v668 = vadd.f32 0.0, %v667
    %v669 = vpop.f32.mrf.mxu0
    %v670 = vadd.f32 0.0, %v669
    %v671 = vpop.f32.mrf.mxu0
    %v672 = vadd.f32 0.0, %v671
    %v673 = vpop.f32.mrf.mxu0
    %v674 = vadd.f32 0.0, %v673
    %675 = vmatprep.mubr.bf16.mxu0 0
    %676 = vmatmul.mubr.bf16.gmra.mxu0 %v573
    %v677 = vpop.f32.mrf.mxu0
    %v678 = vadd.f32 0.0, %v677
    %v679 = vpop.f32.mrf.mxu0
    %v680 = vadd.f32 0.0, %v679
    %v681 = vpop.f32.mrf.mxu0
    %v682 = vadd.f32 0.0, %v681
    %v683 = vpop.f32.mrf.mxu0
    %v684 = vadd.f32 0.0, %v683
    %685 = vmatprep.mubr.bf16.mxu0 0
    %686 = vmatmul.mubr.bf16.gmra.mxu0 %v574
    %v687 = vpop.f32.mrf.mxu0
    %v688 = vadd.f32 0.0, %v687
    %v689 = vpop.f32.mrf.mxu0
    %v690 = vadd.f32 0.0, %v689
    %v691 = vpop.f32.mrf.mxu0
    %v692 = vadd.f32 0.0, %v691
    %v693 = vpop.f32.mrf.mxu0
    %v694 = vadd.f32 0.0, %v693
    %695 = vdwg.mxu0
    %v696 = vadd.f32 %v486, %v618
    %v697 = vadd.f32 %v487, %v620
    %v698 = vadd.f32 %v488, %v622
    %v699 = vadd.f32 %v489, %v624
    %v700 = vadd.f32 %v490, %v628
    %v701 = vadd.f32 %v491, %v630
    %v702 = vadd.f32 %v492, %v632
    %v703 = vadd.f32 %v493, %v634
    %v704 = vadd.f32 %v494, %v638
    %v705 = vadd.f32 %v495, %v640
    %v706 = vadd.f32 %v496, %v642
    %v707 = vadd.f32 %v497, %v644
    %v708 = vadd.f32 %v498, %v648
    %v709 = vadd.f32 %v499, %v650
    %v710 = vadd.f32 %v500, %v652
    %v711 = vadd.f32 %v501, %v654
    %v712 = vadd.f32 %v502, %v658
    %v713 = vadd.f32 %v503, %v660
    %v714 = vadd.f32 %v504, %v662
    %v715 = vadd.f32 %v505, %v664
    %v716 = vadd.f32 %v506, %v668
    %v717 = vadd.f32 %v507, %v670
    %v718 = vadd.f32 %v508, %v672
    %v719 = vadd.f32 %v509, %v674
    %v720 = vadd.f32 %v510, %v678
    %v721 = vadd.f32 %v511, %v680
    %v722 = vadd.f32 %v512, %v682
    %v723 = vadd.f32 %v513, %v684
    %v724 = vadd.f32 %v514, %v688
    %v725 = vadd.f32 %v515, %v690
    %v726 = vadd.f32 %v516, %v692
    %v727 = vadd.f32 %v517, %v694
    %728 = vst [vmem:[%s485] sm:$0xff] %v696
    %729 = vst [vmem:[%s485 + $0x8] sm:$0xff] %v697
    %730 = vst [vmem:[%s485 + $0x10] sm:$0xff] %v698
    %731 = vst [vmem:[%s485 + $0x18] sm:$0xff] %v699
    %732 = vst [vmem:[%s485 + $0x20] sm:$0xff] %v700
    %733 = vst [vmem:[%s485 + $0x28] sm:$0xff] %v701
    %734 = vst [vmem:[%s485 + $0x30] sm:$0xff] %v702
    %735 = vst [vmem:[%s485 + $0x38] sm:$0xff] %v703
    %736 = vst [vmem:[%s485 + $0x40] sm:$0xff] %v704
    %737 = vst [vmem:[%s485 + $0x48] sm:$0xff] %v705
    %738 = vst [vmem:[%s485 + $0x50] sm:$0xff] %v706
    %739 = vst [vmem:[%s485 + $0x58] sm:$0xff] %v707
    %740 = vst [vmem:[%s485 + $0x60] sm:$0xff] %v708
    %741 = vst [vmem:[%s485 + $0x68] sm:$0xff] %v709
    %742 = vst [vmem:[%s485 + $0x70] sm:$0xff] %v710
    %743 = vst [vmem:[%s485 + $0x78] sm:$0xff] %v711
    %744 = vst [vmem:[%s485 + $0x80] sm:$0xff] %v712
    %745 = vst [vmem:[%s485 + $0x88] sm:$0xff] %v713
    %746 = vst [vmem:[%s485 + $0x90] sm:$0xff] %v714
    %747 = vst [vmem:[%s485 + $0x98] sm:$0xff] %v715
    %748 = vst [vmem:[%s485 + $0xa0] sm:$0xff] %v716
    %749 = vst [vmem:[%s485 + $0xa8] sm:$0xff] %v717
    %750 = vst [vmem:[%s485 + $0xb0] sm:$0xff] %v718
    %751 = vst [vmem:[%s485 + $0xb8] sm:$0xff] %v719
    %752 = vst [vmem:[%s485 + $0xc0] sm:$0xff] %v720
    %753 = vst [vmem:[%s485 + $0xc8] sm:$0xff] %v721
    %754 = vst [vmem:[%s485 + $0xd0] sm:$0xff] %v722
    %755 = vst [vmem:[%s485 + $0xd8] sm:$0xff] %v723
    %756 = vst [vmem:[%s485 + $0xe0] sm:$0xff] %v724
    %757 = vst [vmem:[%s485 + $0xe8] sm:$0xff] %v725
    %758 = vst [vmem:[%s485 + $0xf0] sm:$0xff] %v726
    %759 = vst [vmem:[%s485 + $0xf8] sm:$0xff] %v727
    // Predicated region
    $region46: #{h2gcn_forward.5} parent=1 // pred_check
      %p760 = pneg %p48
    $region47: #{h2gcn_forward.5} parent=1 // pred_check_branch
      %762 = sbr.rel (%p760) target = $region49
    $region48: #{h2gcn_forward.5} parent=1 // pred_region
      %v763 = vld [vmem:[%s2] sm:$0xf]
      %v764 = vld [vmem:[%s2 + $0x4] sm:$0xf]
      %v765 = vld [vmem:[%s2 + $0x8] sm:$0xf]
      %v766 = vld [vmem:[%s2 + $0xc] sm:$0xf]
      %v767 = vld [vmem:[%s2 + $0x10] sm:$0xf]
      %v768 = vld [vmem:[%s2 + $0x14] sm:$0xf]
      %v769 = vld [vmem:[%s2 + $0x18] sm:$0xf]
      %v770 = vld [vmem:[%s2 + $0x1c] sm:$0xf]
      %v771 = vld [vmem:[%s2 + $0x20] sm:$0xf]
      %v772 = vld [vmem:[%s2 + $0x24] sm:$0xf]
      %v773 = vld [vmem:[%s2 + $0x28] sm:$0xf]
      %v774 = vld [vmem:[%s2 + $0x2c] sm:$0xf]
      %v775 = vld [vmem:[%s2 + $0x30] sm:$0xf]
      %v776 = vld [vmem:[%s2 + $0x34] sm:$0xf]
      %v777 = vld [vmem:[%s2 + $0x38] sm:$0xf]
      %v778 = vld [vmem:[%s2 + $0x3c] sm:$0xf]
      %v779 = vld [vmem:[#allocation3] sm:$0xf]
      %v780 = vld [vmem:[#allocation3 + $0x4] sm:$0xf]
      %v781 = vld [vmem:[#allocation3 + $0x8] sm:$0xf]
      %v782 = vld [vmem:[#allocation3 + $0xc] sm:$0xf]
      %v783 = vld [vmem:[#allocation3 + $0x10] sm:$0xf]
      %v784 = vld [vmem:[#allocation3 + $0x14] sm:$0xf]
      %v785 = vld [vmem:[#allocation3 + $0x18] sm:$0xf]
      %v786 = vld [vmem:[#allocation3 + $0x1c] sm:$0xf]
      %v787 = vld [vmem:[#allocation3 + $0x20] sm:$0xf]
      %v788 = vld [vmem:[#allocation3 + $0x24] sm:$0xf]
      %v789 = vld [vmem:[#allocation3 + $0x28] sm:$0xf]
      %v790 = vld [vmem:[#allocation3 + $0x2c] sm:$0xf]
      %v791 = vld [vmem:[#allocation3 + $0x30] sm:$0xf]
      %v792 = vld [vmem:[#allocation3 + $0x34] sm:$0xf]
      %v793 = vld [vmem:[#allocation3 + $0x38] sm:$0xf]
      %v794 = vld [vmem:[#allocation3 + $0x3c] sm:$0xf]
      %v795 = vld [vmem:[%s3] sm:$0xff]
      %v796 = vld [vmem:[%s3 + $0x8] sm:$0xff]
      %v797 = vld [vmem:[%s3 + $0x10] sm:$0xff]
      %v798 = vld [vmem:[%s3 + $0x18] sm:$0xff]
      %v799 = vld [vmem:[%s3 + $0x20] sm:$0xff]
      %v800 = vld [vmem:[%s3 + $0x28] sm:$0xff]
      %v801 = vld [vmem:[%s3 + $0x30] sm:$0xff]
      %v802 = vld [vmem:[%s3 + $0x38] sm:$0xff]
      %v803 = vld [vmem:[%s3 + $0x40] sm:$0xff]
      %v804 = vld [vmem:[%s3 + $0x48] sm:$0xff]
      %v805 = vld [vmem:[%s3 + $0x50] sm:$0xff]
      %v806 = vld [vmem:[%s3 + $0x58] sm:$0xff]
      %v807 = vld [vmem:[%s3 + $0x60] sm:$0xff]
      %v808 = vld [vmem:[%s3 + $0x68] sm:$0xff]
      %v809 = vld [vmem:[%s3 + $0x70] sm:$0xff]
      %v810 = vld [vmem:[%s3 + $0x78] sm:$0xff]
      %v811 = vld [vmem:[%s5] sm:$0xf]
      %v812 = vld [vmem:[%s5 + $0x4] sm:$0xf]
      %v813 = vld [vmem:[%s5 + $0x8] sm:$0xf]
      %v814 = vld [vmem:[%s5 + $0xc] sm:$0xf]
      %v815 = vld [vmem:[%s5 + $0x10] sm:$0xf]
      %v816 = vld [vmem:[%s5 + $0x14] sm:$0xf]
      %v817 = vld [vmem:[%s5 + $0x18] sm:$0xf]
      %v818 = vld [vmem:[%s5 + $0x1c] sm:$0xf]
      %v819 = vld [vmem:[%s5 + $0x20] sm:$0xf]
      %v820 = vld [vmem:[%s5 + $0x24] sm:$0xf]
      %v821 = vld [vmem:[%s5 + $0x28] sm:$0xf]
      %v822 = vld [vmem:[%s5 + $0x2c] sm:$0xf]
      %v823 = vld [vmem:[%s5 + $0x30] sm:$0xf]
      %v824 = vld [vmem:[%s5 + $0x34] sm:$0xf]
      %v825 = vld [vmem:[%s5 + $0x38] sm:$0xf]
      %v826 = vld [vmem:[%s5 + $0x3c] sm:$0xf]
      %v827 = vld [vmem:[%s5 + $0x40] sm:$0xf]
      %v828 = vld [vmem:[%s5 + $0x44] sm:$0xf]
      %v829 = vld [vmem:[%s5 + $0x48] sm:$0xf]
      %v830 = vld [vmem:[%s5 + $0x4c] sm:$0xf]
      %v831 = vld [vmem:[%s5 + $0x50] sm:$0xf]
      %v832 = vld [vmem:[%s5 + $0x54] sm:$0xf]
      %v833 = vld [vmem:[%s5 + $0x58] sm:$0xf]
      %v834 = vld [vmem:[%s5 + $0x5c] sm:$0xf]
      %v835 = vld [vmem:[%s5 + $0x60] sm:$0xf]
      %v836 = vld [vmem:[%s5 + $0x64] sm:$0xf]
      %v837 = vld [vmem:[%s5 + $0x68] sm:$0xf]
      %v838 = vld [vmem:[%s5 + $0x6c] sm:$0xf]
      %v839 = vld [vmem:[%s5 + $0x70] sm:$0xf]
      %v840 = vld [vmem:[%s5 + $0x74] sm:$0xf]
      %v841 = vld [vmem:[%s5 + $0x78] sm:$0xf]
      %v842 = vld [vmem:[%s5 + $0x7c] sm:$0xf]
      %v859 = vunpack.c.l.b16 %v795
      %v860 = vunpack.c.h.b16 %v795
      %v861 = vunpack.c.l.b16 %v796
      %v862 = vunpack.c.h.b16 %v796
      %v863 = vunpack.c.l.b16 %v797
      %v864 = vunpack.c.h.b16 %v797
      %v865 = vunpack.c.l.b16 %v798
      %v866 = vunpack.c.h.b16 %v798
      %v867 = vunpack.c.l.b16 %v799
      %v868 = vunpack.c.h.b16 %v799
      %v869 = vunpack.c.l.b16 %v800
      %v870 = vunpack.c.h.b16 %v800
      %v871 = vunpack.c.l.b16 %v801
      %v872 = vunpack.c.h.b16 %v801
      %v873 = vunpack.c.l.b16 %v802
      %v874 = vunpack.c.h.b16 %v802
      %v875 = vunpack.c.l.b16 %v803
      %v876 = vunpack.c.h.b16 %v803
      %v877 = vunpack.c.l.b16 %v804
      %v878 = vunpack.c.h.b16 %v804
      %v879 = vunpack.c.l.b16 %v805
      %v880 = vunpack.c.h.b16 %v805
      %v881 = vunpack.c.l.b16 %v806
      %v882 = vunpack.c.h.b16 %v806
      %v883 = vunpack.c.l.b16 %v807
      %v884 = vunpack.c.h.b16 %v807
      %v885 = vunpack.c.l.b16 %v808
      %v886 = vunpack.c.h.b16 %v808
      %v887 = vunpack.c.l.b16 %v809
      %v888 = vunpack.c.h.b16 %v809
      %v889 = vunpack.c.l.b16 %v810
      %v890 = vunpack.c.h.b16 %v810
      %v891 = vpack.c.b16 %v861, %v859
      %v892 = vpack.c.b16 %v862, %v860
      %v893 = vpack.c.b16 %v865, %v863
      %v894 = vpack.c.b16 %v866, %v864
      %v895 = vpack.c.b16 %v869, %v867
      %v896 = vpack.c.b16 %v870, %v868
      %v897 = vpack.c.b16 %v873, %v871
      %v898 = vpack.c.b16 %v874, %v872
      %v899 = vpack.c.b16 %v877, %v875
      %v900 = vpack.c.b16 %v878, %v876
      %v901 = vpack.c.b16 %v881, %v879
      %v902 = vpack.c.b16 %v882, %v880
      %v903 = vpack.c.b16 %v885, %v883
      %v904 = vpack.c.b16 %v886, %v884
      %v905 = vpack.c.b16 %v889, %v887
      %v906 = vpack.c.b16 %v890, %v888
      %v955 = vunpack.c.l.b16 %v811
      %v956 = vunpack.c.l.b16 %v812
      %v957 = vunpack.c.l.b16 %v813
      %v958 = vunpack.c.l.b16 %v814
      %v959 = vunpack.c.l.b16 %v815
      %v960 = vunpack.c.l.b16 %v816
      %v961 = vunpack.c.l.b16 %v817
      %v962 = vunpack.c.l.b16 %v818
      %v963 = vunpack.c.l.b16 %v819
      %v964 = vunpack.c.l.b16 %v820
      %v965 = vunpack.c.l.b16 %v821
      %v966 = vunpack.c.l.b16 %v822
      %v967 = vunpack.c.l.b16 %v823
      %v968 = vunpack.c.l.b16 %v824
      %v969 = vunpack.c.l.b16 %v825
      %v970 = vunpack.c.l.b16 %v826
      %v971 = vunpack.c.l.b16 %v827
      %v972 = vunpack.c.l.b16 %v828
      %v973 = vunpack.c.l.b16 %v829
      %v974 = vunpack.c.l.b16 %v830
      %v975 = vunpack.c.l.b16 %v831
      %v976 = vunpack.c.l.b16 %v832
      %v977 = vunpack.c.l.b16 %v833
      %v978 = vunpack.c.l.b16 %v834
      %v979 = vunpack.c.l.b16 %v835
      %v980 = vunpack.c.l.b16 %v836
      %v981 = vunpack.c.l.b16 %v837
      %v982 = vunpack.c.l.b16 %v838
      %v983 = vunpack.c.l.b16 %v839
      %v984 = vunpack.c.l.b16 %v840
      %v985 = vunpack.c.l.b16 %v841
      %v986 = vunpack.c.l.b16 %v842
      %v987 = vpack.c.b16 %v956, %v955
      %v988 = vpack.c.b16 %v958, %v957
      %v989 = vpack.c.b16 %v960, %v959
      %v990 = vpack.c.b16 %v962, %v961
      %v991 = vpack.c.b16 %v964, %v963
      %v992 = vpack.c.b16 %v966, %v965
      %v993 = vpack.c.b16 %v968, %v967
      %v994 = vpack.c.b16 %v970, %v969
      %v995 = vpack.c.b16 %v972, %v971
      %v996 = vpack.c.b16 %v974, %v973
      %v997 = vpack.c.b16 %v976, %v975
      %v998 = vpack.c.b16 %v978, %v977
      %v999 = vpack.c.b16 %v980, %v979
      %v1000 = vpack.c.b16 %v982, %v981
      %v1001 = vpack.c.b16 %v984, %v983
      %v1002 = vpack.c.b16 %v986, %v985
      %1019 = vmatprep.subr.bf16.mxu0 0
      %1020 = vmatpush1.bf16.msra.mxu0 %v994
      %1021 = vmatprep.subr.bf16.mxu0 0
      %1022 = vmatpush1.bf16.msra.mxu0 %v993
      %1023 = vmatprep.subr.bf16.mxu0 0
      %1024 = vmatpush1.bf16.msra.mxu0 %v992
      %1025 = vmatprep.subr.bf16.mxu0 0
      %1026 = vmatpush1.bf16.msra.mxu0 %v991
      %1027 = vmatprep.subr.bf16.mxu0 0
      %1028 = vmatpush1.bf16.msra.mxu0 %v990
      %1029 = vmatprep.subr.bf16.mxu0 0
      %1030 = vmatpush1.bf16.msra.mxu0 %v989
      %1031 = vmatprep.subr.bf16.mxu0 0
      %1032 = vmatpush1.bf16.msra.mxu0 %v988
      %1033 = vmatprep.subr.bf16.mxu0 0
      %1034 = vmatpush1.bf16.msra.mxu0 %v987
      %1035 = vmatprep.subr.bf16.mxu0 0
      %1036 = vmatpush2.bf16.msra.mxu0 %v1002
      %1037 = vmatprep.subr.bf16.mxu0 0
      %1038 = vmatpush2.bf16.msra.mxu0 %v1001
      %1039 = vmatprep.subr.bf16.mxu0 0
      %1040 = vmatpush2.bf16.msra.mxu0 %v1000
      %1041 = vmatprep.subr.bf16.mxu0 0
      %1042 = vmatpush2.bf16.msra.mxu0 %v999
      %1043 = vmatprep.subr.bf16.mxu0 0
      %1044 = vmatpush2.bf16.msra.mxu0 %v998
      %1045 = vmatprep.subr.bf16.mxu0 0
      %1046 = vmatpush2.bf16.msra.mxu0 %v997
      %1047 = vmatprep.subr.bf16.mxu0 0
      %1048 = vmatpush2.bf16.msra.mxu0 %v996
      %1049 = vmatprep.subr.bf16.mxu0 0
      %1050 = vmatpush2.bf16.msra.mxu0 %v995
      %1051 = vmatprep.mubr.bf16.mxu0 %v892
      %1052 = vmatmul.mubr.bf16.gmra.mxu0 %v891
      %v1053 = vpop.f32.mrf.mxu0
      %v1054 = vadd.f32 0.0, %v1053
      %v1055 = vpop.f32.mrf.mxu0
      %v1056 = vpop.f32.mrf.mxu0
      %v1057 = vadd.f32 0.0, %v1056
      %v1058 = vpop.f32.mrf.mxu0
      %1059 = vmatprep.mubr.bf16.mxu0 %v894
      %1060 = vmatmul.mubr.bf16.gmra.mxu0 %v893
      %v1061 = vpop.f32.mrf.mxu0
      %v1062 = vadd.f32 0.0, %v1061
      %v1063 = vpop.f32.mrf.mxu0
      %v1064 = vpop.f32.mrf.mxu0
      %v1065 = vadd.f32 0.0, %v1064
      %v1066 = vpop.f32.mrf.mxu0
      %1067 = vmatprep.mubr.bf16.mxu0 %v896
      %1068 = vmatmul.mubr.bf16.gmra.mxu0 %v895
      %v1069 = vpop.f32.mrf.mxu0
      %v1070 = vadd.f32 0.0, %v1069
      %v1071 = vpop.f32.mrf.mxu0
      %v1072 = vpop.f32.mrf.mxu0
      %v1073 = vadd.f32 0.0, %v1072
      %v1074 = vpop.f32.mrf.mxu0
      %1075 = vmatprep.mubr.bf16.mxu0 %v898
      %1076 = vmatmul.mubr.bf16.gmra.mxu0 %v897
      %v1077 = vpop.f32.mrf.mxu0
      %v1078 = vadd.f32 0.0, %v1077
      %v1079 = vpop.f32.mrf.mxu0
      %v1080 = vpop.f32.mrf.mxu0
      %v1081 = vadd.f32 0.0, %v1080
      %v1082 = vpop.f32.mrf.mxu0
      %1083 = vmatprep.mubr.bf16.mxu0 %v900
      %1084 = vmatmul.mubr.bf16.gmra.mxu0 %v899
      %v1085 = vpop.f32.mrf.mxu0
      %v1086 = vadd.f32 0.0, %v1085
      %v1087 = vpop.f32.mrf.mxu0
      %v1088 = vpop.f32.mrf.mxu0
      %v1089 = vadd.f32 0.0, %v1088
      %v1090 = vpop.f32.mrf.mxu0
      %1091 = vmatprep.mubr.bf16.mxu0 %v902
      %1092 = vmatmul.mubr.bf16.gmra.mxu0 %v901
      %v1093 = vpop.f32.mrf.mxu0
      %v1094 = vadd.f32 0.0, %v1093
      %v1095 = vpop.f32.mrf.mxu0
      %v1096 = vpop.f32.mrf.mxu0
      %v1097 = vadd.f32 0.0, %v1096
      %v1098 = vpop.f32.mrf.mxu0
      %1099 = vmatprep.mubr.bf16.mxu0 %v904
      %1100 = vmatmul.mubr.bf16.gmra.mxu0 %v903
      %v1101 = vpop.f32.mrf.mxu0
      %v1102 = vadd.f32 0.0, %v1101
      %v1103 = vpop.f32.mrf.mxu0
      %v1104 = vpop.f32.mrf.mxu0
      %v1105 = vadd.f32 0.0, %v1104
      %v1106 = vpop.f32.mrf.mxu0
      %1107 = vmatprep.mubr.bf16.mxu0 %v906
      %1108 = vmatmul.mubr.bf16.gmra.mxu0 %v905
      %v1109 = vpop.f32.mrf.mxu0
      %v1110 = vadd.f32 0.0, %v1109
      %v1111 = vpop.f32.mrf.mxu0
      %v1112 = vpop.f32.mrf.mxu0
      %v1113 = vadd.f32 0.0, %v1112
      %v1114 = vpop.f32.mrf.mxu0
      %1115 = vdwg.mxu0
      %v1132 = vunpack.c.l.b16 %v763
      %v1133 = vunpack.c.l.b16 %v764
      %v1134 = vunpack.c.l.b16 %v765
      %v1135 = vunpack.c.l.b16 %v766
      %v1136 = vunpack.c.l.b16 %v767
      %v1137 = vunpack.c.l.b16 %v768
      %v1138 = vunpack.c.l.b16 %v769
      %v1139 = vunpack.c.l.b16 %v770
      %v1140 = vunpack.c.l.b16 %v771
      %v1141 = vunpack.c.l.b16 %v772
      %v1142 = vunpack.c.l.b16 %v773
      %v1143 = vunpack.c.l.b16 %v774
      %v1144 = vunpack.c.l.b16 %v775
      %v1145 = vunpack.c.l.b16 %v776
      %v1146 = vunpack.c.l.b16 %v777
      %v1147 = vunpack.c.l.b16 %v778
      %v1148 = vpack.c.b16 %v1133, %v1132
      %v1149 = vpack.c.b16 %v1135, %v1134
      %v1150 = vpack.c.b16 %v1137, %v1136
      %v1151 = vpack.c.b16 %v1139, %v1138
      %v1152 = vpack.c.b16 %v1141, %v1140
      %v1153 = vpack.c.b16 %v1143, %v1142
      %v1154 = vpack.c.b16 %v1145, %v1144
      %v1155 = vpack.c.b16 %v1147, %v1146
      %v1180 = vunpack.c.l.b16 %v779
      %v1181 = vunpack.c.l.b16 %v780
      %v1182 = vunpack.c.l.b16 %v781
      %v1183 = vunpack.c.l.b16 %v782
      %v1184 = vunpack.c.l.b16 %v783
      %v1185 = vunpack.c.l.b16 %v784
      %v1186 = vunpack.c.l.b16 %v785
      %v1187 = vunpack.c.l.b16 %v786
      %v1188 = vunpack.c.l.b16 %v787
      %v1189 = vunpack.c.l.b16 %v788
      %v1190 = vunpack.c.l.b16 %v789
      %v1191 = vunpack.c.l.b16 %v790
      %v1192 = vunpack.c.l.b16 %v791
      %v1193 = vunpack.c.l.b16 %v792
      %v1194 = vunpack.c.l.b16 %v793
      %v1195 = vunpack.c.l.b16 %v794
      %v1196 = vpack.c.b16 %v1181, %v1180
      %v1197 = vpack.c.b16 %v1183, %v1182
      %v1198 = vpack.c.b16 %v1185, %v1184
      %v1199 = vpack.c.b16 %v1187, %v1186
      %v1200 = vpack.c.b16 %v1189, %v1188
      %v1201 = vpack.c.b16 %v1191, %v1190
      %v1202 = vpack.c.b16 %v1193, %v1192
      %v1203 = vpack.c.b16 %v1195, %v1194
      %1212 = vmatprep.subr.bf16.mxu0 0
      %1213 = vmatpush1.bf16.msra.mxu0 %v1203
      %1214 = vmatprep.subr.bf16.mxu0 0
      %1215 = vmatpush1.bf16.msra.mxu0 %v1202
      %1216 = vmatprep.subr.bf16.mxu0 0
      %1217 = vmatpush1.bf16.msra.mxu0 %v1201
      %1218 = vmatprep.subr.bf16.mxu0 0
      %1219 = vmatpush1.bf16.msra.mxu0 %v1200
      %1220 = vmatprep.subr.bf16.mxu0 0
      %1221 = vmatpush1.bf16.msra.mxu0 %v1199
      %1222 = vmatprep.subr.bf16.mxu0 0
      %1223 = vmatpush1.bf16.msra.mxu0 %v1198
      %1224 = vmatprep.subr.bf16.mxu0 0
      %1225 = vmatpush1.bf16.msra.mxu0 %v1197
      %1226 = vmatprep.subr.bf16.mxu0 0
      %1227 = vmatpush1.bf16.msra.mxu0 %v1196
      %1228 = vmatprep.subr.bf16.mxu0 0
      %1229 = vmatpush2.bf16.msra.mxu0 0
      %1230 = vmatprep.subr.bf16.mxu0 0
      %1231 = vmatpush2.bf16.msra.mxu0 0
      %1232 = vmatprep.subr.bf16.mxu0 0
      %1233 = vmatpush2.bf16.msra.mxu0 0
      %1234 = vmatprep.subr.bf16.mxu0 0
      %1235 = vmatpush2.bf16.msra.mxu0 0
      %1236 = vmatprep.subr.bf16.mxu0 0
      %1237 = vmatpush2.bf16.msra.mxu0 0
      %1238 = vmatprep.subr.bf16.mxu0 0
      %1239 = vmatpush2.bf16.msra.mxu0 0
      %1240 = vmatprep.subr.bf16.mxu0 0
      %1241 = vmatpush2.bf16.msra.mxu0 0
      %1242 = vmatprep.subr.bf16.mxu0 0
      %1243 = vmatpush2.bf16.msra.mxu0 0
      %1244 = vmatprep.mubr.bf16.mxu0 0
      %1245 = vmatmul.mubr.bf16.gmra.mxu0 %v1148
      %v1246 = vpop.f32.mrf.mxu0
      %v1247 = vadd.f32 %v1054, %v1246
      %v1248 = vpop.f32.mrf.mxu0
      %v1249 = vpop.f32.mrf.mxu0
      %v1250 = vadd.f32 %v1057, %v1249
      %v1251 = vpop.f32.mrf.mxu0
      %1252 = vmatprep.mubr.bf16.mxu0 0
      %1253 = vmatmul.mubr.bf16.gmra.mxu0 %v1149
      %v1254 = vpop.f32.mrf.mxu0
      %v1255 = vadd.f32 %v1062, %v1254
      %v1256 = vpop.f32.mrf.mxu0
      %v1257 = vpop.f32.mrf.mxu0
      %v1258 = vadd.f32 %v1065, %v1257
      %v1259 = vpop.f32.mrf.mxu0
      %1260 = vmatprep.mubr.bf16.mxu0 0
      %1261 = vmatmul.mubr.bf16.gmra.mxu0 %v1150
      %v1262 = vpop.f32.mrf.mxu0
      %v1263 = vadd.f32 %v1070, %v1262
      %v1264 = vpop.f32.mrf.mxu0
      %v1265 = vpop.f32.mrf.mxu0
      %v1266 = vadd.f32 %v1073, %v1265
      %v1267 = vpop.f32.mrf.mxu0
      %1268 = vmatprep.mubr.bf16.mxu0 0
      %1269 = vmatmul.mubr.bf16.gmra.mxu0 %v1151
      %v1270 = vpop.f32.mrf.mxu0
      %v1271 = vadd.f32 %v1078, %v1270
      %v1272 = vpop.f32.mrf.mxu0
      %v1273 = vpop.f32.mrf.mxu0
      %v1274 = vadd.f32 %v1081, %v1273
      %v1275 = vpop.f32.mrf.mxu0
      %1276 = vmatprep.mubr.bf16.mxu0 0
      %1277 = vmatmul.mubr.bf16.gmra.mxu0 %v1152
      %v1278 = vpop.f32.mrf.mxu0
      %v1279 = vadd.f32 %v1086, %v1278
      %v1280 = vpop.f32.mrf.mxu0
      %v1281 = vpop.f32.mrf.mxu0
      %v1282 = vadd.f32 %v1089, %v1281
      %v1283 = vpop.f32.mrf.mxu0
      %1284 = vmatprep.mubr.bf16.mxu0 0
      %1285 = vmatmul.mubr.bf16.gmra.mxu0 %v1153
      %v1286 = vpop.f32.mrf.mxu0
      %v1287 = vadd.f32 %v1094, %v1286
      %v1288 = vpop.f32.mrf.mxu0
      %v1289 = vpop.f32.mrf.mxu0
      %v1290 = vadd.f32 %v1097, %v1289
      %v1291 = vpop.f32.mrf.mxu0
      %1292 = vmatprep.mubr.bf16.mxu0 0
      %1293 = vmatmul.mubr.bf16.gmra.mxu0 %v1154
      %v1294 = vpop.f32.mrf.mxu0
      %v1295 = vadd.f32 %v1102, %v1294
      %v1296 = vpop.f32.mrf.mxu0
      %v1297 = vpop.f32.mrf.mxu0
      %v1298 = vadd.f32 %v1105, %v1297
      %v1299 = vpop.f32.mrf.mxu0
      %1300 = vmatprep.mubr.bf16.mxu0 0
      %1301 = vmatmul.mubr.bf16.gmra.mxu0 %v1155
      %v1302 = vpop.f32.mrf.mxu0
      %v1303 = vadd.f32 %v1110, %v1302
      %v1304 = vpop.f32.mrf.mxu0
      %v1305 = vpop.f32.mrf.mxu0
      %v1306 = vadd.f32 %v1113, %v1305
      %v1307 = vpop.f32.mrf.mxu0
      %1308 = vdwg.mxu0
      %v1309 = vld [vmem:[#allocation2] sm:$0xff]
      %v1310 = vld [vmem:[#allocation2 + $0x8] sm:$0xff]
      %v1311 = vld [vmem:[#allocation2 + $0x10] sm:$0xff]
      %v1312 = vld [vmem:[#allocation2 + $0x18] sm:$0xff]
      %v1313 = vld [vmem:[#allocation2 + $0x20] sm:$0xff]
      %v1314 = vld [vmem:[#allocation2 + $0x28] sm:$0xff]
      %v1315 = vld [vmem:[#allocation2 + $0x30] sm:$0xff]
      %v1316 = vld [vmem:[#allocation2 + $0x38] sm:$0xff]
      %v1317 = vld [vmem:[#allocation2 + $0x40] sm:$0xff]
      %v1318 = vld [vmem:[#allocation2 + $0x48] sm:$0xff]
      %v1319 = vld [vmem:[#allocation2 + $0x50] sm:$0xff]
      %v1320 = vld [vmem:[#allocation2 + $0x58] sm:$0xff]
      %v1321 = vld [vmem:[#allocation2 + $0x60] sm:$0xff]
      %v1322 = vld [vmem:[#allocation2 + $0x68] sm:$0xff]
      %v1323 = vld [vmem:[#allocation2 + $0x70] sm:$0xff]
      %v1324 = vld [vmem:[#allocation2 + $0x78] sm:$0xff]
      %v1325 = vld [vmem:[#allocation2 + $0x80] sm:$0xff]
      %v1326 = vld [vmem:[#allocation2 + $0x88] sm:$0xff]
      %v1327 = vld [vmem:[#allocation2 + $0x90] sm:$0xff]
      %v1328 = vld [vmem:[#allocation2 + $0x98] sm:$0xff]
      %v1329 = vld [vmem:[#allocation2 + $0xa0] sm:$0xff]
      %v1330 = vld [vmem:[#allocation2 + $0xa8] sm:$0xff]
      %v1331 = vld [vmem:[#allocation2 + $0xb0] sm:$0xff]
      %v1332 = vld [vmem:[#allocation2 + $0xb8] sm:$0xff]
      %v1333 = vld [vmem:[#allocation2 + $0xc0] sm:$0xff]
      %v1334 = vld [vmem:[#allocation2 + $0xc8] sm:$0xff]
      %v1335 = vld [vmem:[#allocation2 + $0xd0] sm:$0xff]
      %v1336 = vld [vmem:[#allocation2 + $0xd8] sm:$0xff]
      %v1337 = vld [vmem:[#allocation2 + $0xe0] sm:$0xff]
      %v1338 = vld [vmem:[#allocation2 + $0xe8] sm:$0xff]
      %v1339 = vld [vmem:[#allocation2 + $0xf0] sm:$0xff]
      %v1340 = vld [vmem:[#allocation2 + $0xf8] sm:$0xff]
      %v1341 = vpack.c.bf16 %v1311, %v1309
      %v1342 = vpack.c.bf16 %v1312, %v1310
      %v1343 = vpack.c.bf16 %v1315, %v1313
      %v1344 = vpack.c.bf16 %v1316, %v1314
      %v1345 = vpack.c.bf16 %v1319, %v1317
      %v1346 = vpack.c.bf16 %v1320, %v1318
      %v1347 = vpack.c.bf16 %v1323, %v1321
      %v1348 = vpack.c.bf16 %v1324, %v1322
      %v1349 = vpack.c.bf16 %v1327, %v1325
      %v1350 = vpack.c.bf16 %v1328, %v1326
      %v1351 = vpack.c.bf16 %v1331, %v1329
      %v1352 = vpack.c.bf16 %v1332, %v1330
      %v1353 = vpack.c.bf16 %v1335, %v1333
      %v1354 = vpack.c.bf16 %v1336, %v1334
      %v1355 = vpack.c.bf16 %v1339, %v1337
      %v1356 = vpack.c.bf16 %v1340, %v1338
      %v1357 = vld [vmem:[%s6] sm:$0xf]
      %v1358 = vld [vmem:[%s6 + $0x4] sm:$0xf]
      %v1359 = vld [vmem:[%s6 + $0x8] sm:$0xf]
      %v1360 = vld [vmem:[%s6 + $0xc] sm:$0xf]
      %v1361 = vld [vmem:[%s6 + $0x10] sm:$0xf]
      %v1362 = vld [vmem:[%s6 + $0x14] sm:$0xf]
      %v1363 = vld [vmem:[%s6 + $0x18] sm:$0xf]
      %v1364 = vld [vmem:[%s6 + $0x1c] sm:$0xf]
      %v1365 = vld [vmem:[%s6 + $0x20] sm:$0xf]
      %v1366 = vld [vmem:[%s6 + $0x24] sm:$0xf]
      %v1367 = vld [vmem:[%s6 + $0x28] sm:$0xf]
      %v1368 = vld [vmem:[%s6 + $0x2c] sm:$0xf]
      %v1369 = vld [vmem:[%s6 + $0x30] sm:$0xf]
      %v1370 = vld [vmem:[%s6 + $0x34] sm:$0xf]
      %v1371 = vld [vmem:[%s6 + $0x38] sm:$0xf]
      %v1372 = vld [vmem:[%s6 + $0x3c] sm:$0xf]
      %v1373 = vld [vmem:[%s6 + $0x40] sm:$0xf]
      %v1374 = vld [vmem:[%s6 + $0x44] sm:$0xf]
      %v1375 = vld [vmem:[%s6 + $0x48] sm:$0xf]
      %v1376 = vld [vmem:[%s6 + $0x4c] sm:$0xf]
      %v1377 = vld [vmem:[%s6 + $0x50] sm:$0xf]
      %v1378 = vld [vmem:[%s6 + $0x54] sm:$0xf]
      %v1379 = vld [vmem:[%s6 + $0x58] sm:$0xf]
      %v1380 = vld [vmem:[%s6 + $0x5c] sm:$0xf]
      %v1381 = vld [vmem:[%s6 + $0x60] sm:$0xf]
      %v1382 = vld [vmem:[%s6 + $0x64] sm:$0xf]
      %v1383 = vld [vmem:[%s6 + $0x68] sm:$0xf]
      %v1384 = vld [vmem:[%s6 + $0x6c] sm:$0xf]
      %v1385 = vld [vmem:[%s6 + $0x70] sm:$0xf]
      %v1386 = vld [vmem:[%s6 + $0x74] sm:$0xf]
      %v1387 = vld [vmem:[%s6 + $0x78] sm:$0xf]
      %v1388 = vld [vmem:[%s6 + $0x7c] sm:$0xf]
      %v1421 = vunpack.c.l.b16 %v1357
      %v1422 = vunpack.c.l.b16 %v1358
      %v1423 = vunpack.c.l.b16 %v1359
      %v1424 = vunpack.c.l.b16 %v1360
      %v1425 = vunpack.c.l.b16 %v1361
      %v1426 = vunpack.c.l.b16 %v1362
      %v1427 = vunpack.c.l.b16 %v1363
      %v1428 = vunpack.c.l.b16 %v1364
      %v1429 = vunpack.c.l.b16 %v1365
      %v1430 = vunpack.c.l.b16 %v1366
      %v1431 = vunpack.c.l.b16 %v1367
      %v1432 = vunpack.c.l.b16 %v1368
      %v1433 = vunpack.c.l.b16 %v1369
      %v1434 = vunpack.c.l.b16 %v1370
      %v1435 = vunpack.c.l.b16 %v1371
      %v1436 = vunpack.c.l.b16 %v1372
      %v1437 = vunpack.c.l.b16 %v1373
      %v1438 = vunpack.c.l.b16 %v1374
      %v1439 = vunpack.c.l.b16 %v1375
      %v1440 = vunpack.c.l.b16 %v1376
      %v1441 = vunpack.c.l.b16 %v1377
      %v1442 = vunpack.c.l.b16 %v1378
      %v1443 = vunpack.c.l.b16 %v1379
      %v1444 = vunpack.c.l.b16 %v1380
      %v1445 = vunpack.c.l.b16 %v1381
      %v1446 = vunpack.c.l.b16 %v1382
      %v1447 = vunpack.c.l.b16 %v1383
      %v1448 = vunpack.c.l.b16 %v1384
      %v1449 = vunpack.c.l.b16 %v1385
      %v1450 = vunpack.c.l.b16 %v1386
      %v1451 = vunpack.c.l.b16 %v1387
      %v1452 = vunpack.c.l.b16 %v1388
      %v1453 = vpack.c.b16 %v1422, %v1421
      %v1454 = vpack.c.b16 %v1424, %v1423
      %v1455 = vpack.c.b16 %v1426, %v1425
      %v1456 = vpack.c.b16 %v1428, %v1427
      %v1457 = vpack.c.b16 %v1430, %v1429
      %v1458 = vpack.c.b16 %v1432, %v1431
      %v1459 = vpack.c.b16 %v1434, %v1433
      %v1460 = vpack.c.b16 %v1436, %v1435
      %v1461 = vpack.c.b16 %v1438, %v1437
      %v1462 = vpack.c.b16 %v1440, %v1439
      %v1463 = vpack.c.b16 %v1442, %v1441
      %v1464 = vpack.c.b16 %v1444, %v1443
      %v1465 = vpack.c.b16 %v1446, %v1445
      %v1466 = vpack.c.b16 %v1448, %v1447
      %v1467 = vpack.c.b16 %v1450, %v1449
      %v1468 = vpack.c.b16 %v1452, %v1451
      %1485 = vmatprep.subr.bf16.mxu0 0
      %1486 = vmatpush1.bf16.msra.mxu0 %v1460
      %1487 = vmatprep.subr.bf16.mxu0 0
      %1488 = vmatpush1.bf16.msra.mxu0 %v1459
      %1489 = vmatprep.subr.bf16.mxu0 0
      %1490 = vmatpush1.bf16.msra.mxu0 %v1458
      %1491 = vmatprep.subr.bf16.mxu0 0
      %1492 = vmatpush1.bf16.msra.mxu0 %v1457
      %1493 = vmatprep.subr.bf16.mxu0 0
      %1494 = vmatpush1.bf16.msra.mxu0 %v1456
      %1495 = vmatprep.subr.bf16.mxu0 0
      %1496 = vmatpush1.bf16.msra.mxu0 %v1455
      %1497 = vmatprep.subr.bf16.mxu0 0
      %1498 = vmatpush1.bf16.msra.mxu0 %v1454
      %1499 = vmatprep.subr.bf16.mxu0 0
      %1500 = vmatpush1.bf16.msra.mxu0 %v1453
      %1501 = vmatprep.subr.bf16.mxu0 0
      %1502 = vmatpush2.bf16.msra.mxu0 %v1468
      %1503 = vmatprep.subr.bf16.mxu0 0
      %1504 = vmatpush2.bf16.msra.mxu0 %v1467
      %1505 = vmatprep.subr.bf16.mxu0 0
      %1506 = vmatpush2.bf16.msra.mxu0 %v1466
      %1507 = vmatprep.subr.bf16.mxu0 0
      %1508 = vmatpush2.bf16.msra.mxu0 %v1465
      %1509 = vmatprep.subr.bf16.mxu0 0
      %1510 = vmatpush2.bf16.msra.mxu0 %v1464
      %1511 = vmatprep.subr.bf16.mxu0 0
      %1512 = vmatpush2.bf16.msra.mxu0 %v1463
      %1513 = vmatprep.subr.bf16.mxu0 0
      %1514 = vmatpush2.bf16.msra.mxu0 %v1462
      %1515 = vmatprep.subr.bf16.mxu0 0
      %1516 = vmatpush2.bf16.msra.mxu0 %v1461
      %1517 = vmatprep.mubr.bf16.mxu0 %v1342
      %1518 = vmatmul.mubr.bf16.gmra.mxu0 %v1341
      %v1519 = vpop.f32.mrf.mxu0
      %v1520 = vadd.f32 0.0, %v1519
      %v1521 = vpop.f32.mrf.mxu0
      %v1522 = vpop.f32.mrf.mxu0
      %v1523 = vadd.f32 0.0, %v1522
      %v1524 = vpop.f32.mrf.mxu0
      %1525 = vmatprep.mubr.bf16.mxu0 %v1344
      %1526 = vmatmul.mubr.bf16.gmra.mxu0 %v1343
      %v1527 = vpop.f32.mrf.mxu0
      %v1528 = vadd.f32 0.0, %v1527
      %v1529 = vpop.f32.mrf.mxu0
      %v1530 = vpop.f32.mrf.mxu0
      %v1531 = vadd.f32 0.0, %v1530
      %v1532 = vpop.f32.mrf.mxu0
      %1533 = vmatprep.mubr.bf16.mxu0 %v1346
      %1534 = vmatmul.mubr.bf16.gmra.mxu0 %v1345
      %v1535 = vpop.f32.mrf.mxu0
      %v1536 = vadd.f32 0.0, %v1535
      %v1537 = vpop.f32.mrf.mxu0
      %v1538 = vpop.f32.mrf.mxu0
      %v1539 = vadd.f32 0.0, %v1538
      %v1540 = vpop.f32.mrf.mxu0
      %1541 = vmatprep.mubr.bf16.mxu0 %v1348
      %1542 = vmatmul.mubr.bf16.gmra.mxu0 %v1347
      %v1543 = vpop.f32.mrf.mxu0
      %v1544 = vadd.f32 0.0, %v1543
      %v1545 = vpop.f32.mrf.mxu0
      %v1546 = vpop.f32.mrf.mxu0
      %v1547 = vadd.f32 0.0, %v1546
      %v1548 = vpop.f32.mrf.mxu0
      %1549 = vmatprep.mubr.bf16.mxu0 %v1350
      %1550 = vmatmul.mubr.bf16.gmra.mxu0 %v1349
      %v1551 = vpop.f32.mrf.mxu0
      %v1552 = vadd.f32 0.0, %v1551
      %v1553 = vpop.f32.mrf.mxu0
      %v1554 = vpop.f32.mrf.mxu0
      %v1555 = vadd.f32 0.0, %v1554
      %v1556 = vpop.f32.mrf.mxu0
      %1557 = vmatprep.mubr.bf16.mxu0 %v1352
      %1558 = vmatmul.mubr.bf16.gmra.mxu0 %v1351
      %v1559 = vpop.f32.mrf.mxu0
      %v1560 = vadd.f32 0.0, %v1559
      %v1561 = vpop.f32.mrf.mxu0
      %v1562 = vpop.f32.mrf.mxu0
      %v1563 = vadd.f32 0.0, %v1562
      %v1564 = vpop.f32.mrf.mxu0
      %1565 = vmatprep.mubr.bf16.mxu0 %v1354
      %1566 = vmatmul.mubr.bf16.gmra.mxu0 %v1353
      %v1567 = vpop.f32.mrf.mxu0
      %v1568 = vadd.f32 0.0, %v1567
      %v1569 = vpop.f32.mrf.mxu0
      %v1570 = vpop.f32.mrf.mxu0
      %v1571 = vadd.f32 0.0, %v1570
      %v1572 = vpop.f32.mrf.mxu0
      %1573 = vmatprep.mubr.bf16.mxu0 %v1356
      %1574 = vmatmul.mubr.bf16.gmra.mxu0 %v1355
      %v1575 = vpop.f32.mrf.mxu0
      %v1576 = vadd.f32 0.0, %v1575
      %v1577 = vpop.f32.mrf.mxu0
      %v1578 = vpop.f32.mrf.mxu0
      %v1579 = vadd.f32 0.0, %v1578
      %v1580 = vpop.f32.mrf.mxu0
      %1581 = vdwg.mxu0
      %v1582 = vadd.f32 %v1247, %v1520
      %v1583 = vadd.f32 %v1250, %v1523
      %v1584 = vadd.f32 %v1255, %v1528
      %v1585 = vadd.f32 %v1258, %v1531
      %v1586 = vadd.f32 %v1263, %v1536
      %v1587 = vadd.f32 %v1266, %v1539
      %v1588 = vadd.f32 %v1271, %v1544
      %v1589 = vadd.f32 %v1274, %v1547
      %v1590 = vadd.f32 %v1279, %v1552
      %v1591 = vadd.f32 %v1282, %v1555
      %v1592 = vadd.f32 %v1287, %v1560
      %v1593 = vadd.f32 %v1290, %v1563
      %v1594 = vadd.f32 %v1295, %v1568
      %v1595 = vadd.f32 %v1298, %v1571
      %v1596 = vadd.f32 %v1303, %v1576
      %v1597 = vadd.f32 %v1306, %v1579
      %v1598 = vld [vmem:[%s485] sm:$0xff]
      %v1599 = vld [vmem:[%s485 + $0x8] sm:$0xff]
      %v1600 = vld [vmem:[%s485 + $0x10] sm:$0xff]
      %v1601 = vld [vmem:[%s485 + $0x18] sm:$0xff]
      %v1602 = vld [vmem:[%s485 + $0x20] sm:$0xff]
      %v1603 = vld [vmem:[%s485 + $0x28] sm:$0xff]
      %v1604 = vld [vmem:[%s485 + $0x30] sm:$0xff]
      %v1605 = vld [vmem:[%s485 + $0x38] sm:$0xff]
      %v1606 = vld [vmem:[%s485 + $0x40] sm:$0xff]
      %v1607 = vld [vmem:[%s485 + $0x48] sm:$0xff]
      %v1608 = vld [vmem:[%s485 + $0x50] sm:$0xff]
      %v1609 = vld [vmem:[%s485 + $0x58] sm:$0xff]
      %v1610 = vld [vmem:[%s485 + $0x60] sm:$0xff]
      %v1611 = vld [vmem:[%s485 + $0x68] sm:$0xff]
      %v1612 = vld [vmem:[%s485 + $0x70] sm:$0xff]
      %v1613 = vld [vmem:[%s485 + $0x78] sm:$0xff]
      %v1614 = vld [vmem:[%s485 + $0x80] sm:$0xff]
      %v1615 = vld [vmem:[%s485 + $0x88] sm:$0xff]
      %v1616 = vld [vmem:[%s485 + $0x90] sm:$0xff]
      %v1617 = vld [vmem:[%s485 + $0x98] sm:$0xff]
      %v1618 = vld [vmem:[%s485 + $0xa0] sm:$0xff]
      %v1619 = vld [vmem:[%s485 + $0xa8] sm:$0xff]
      %v1620 = vld [vmem:[%s485 + $0xb0] sm:$0xff]
      %v1621 = vld [vmem:[%s485 + $0xb8] sm:$0xff]
      %v1622 = vld [vmem:[%s485 + $0xc0] sm:$0xff]
      %v1623 = vld [vmem:[%s485 + $0xc8] sm:$0xff]
      %v1624 = vld [vmem:[%s485 + $0xd0] sm:$0xff]
      %v1625 = vld [vmem:[%s485 + $0xd8] sm:$0xff]
      %v1626 = vld [vmem:[%s485 + $0xe0] sm:$0xff]
      %v1627 = vld [vmem:[%s485 + $0xe8] sm:$0xff]
      %v1628 = vld [vmem:[%s485 + $0xf0] sm:$0xff]
      %v1629 = vld [vmem:[%s485 + $0xf8] sm:$0xff]
      %v1630 = vpack.c.bf16 %v1600, %v1598
      %v1631 = vpack.c.bf16 %v1601, %v1599
      %v1632 = vpack.c.bf16 %v1604, %v1602
      %v1633 = vpack.c.bf16 %v1605, %v1603
      %v1634 = vpack.c.bf16 %v1608, %v1606
      %v1635 = vpack.c.bf16 %v1609, %v1607
      %v1636 = vpack.c.bf16 %v1612, %v1610
      %v1637 = vpack.c.bf16 %v1613, %v1611
      %v1638 = vpack.c.bf16 %v1616, %v1614
      %v1639 = vpack.c.bf16 %v1617, %v1615
      %v1640 = vpack.c.bf16 %v1620, %v1618
      %v1641 = vpack.c.bf16 %v1621, %v1619
      %v1642 = vpack.c.bf16 %v1624, %v1622
      %v1643 = vpack.c.bf16 %v1625, %v1623
      %v1644 = vpack.c.bf16 %v1628, %v1626
      %v1645 = vpack.c.bf16 %v1629, %v1627
      %v1646 = vld [vmem:[%s7] sm:$0xf]
      %v1647 = vld [vmem:[%s7 + $0x4] sm:$0xf]
      %v1648 = vld [vmem:[%s7 + $0x8] sm:$0xf]
      %v1649 = vld [vmem:[%s7 + $0xc] sm:$0xf]
      %v1650 = vld [vmem:[%s7 + $0x10] sm:$0xf]
      %v1651 = vld [vmem:[%s7 + $0x14] sm:$0xf]
      %v1652 = vld [vmem:[%s7 + $0x18] sm:$0xf]
      %v1653 = vld [vmem:[%s7 + $0x1c] sm:$0xf]
      %v1654 = vld [vmem:[%s7 + $0x20] sm:$0xf]
      %v1655 = vld [vmem:[%s7 + $0x24] sm:$0xf]
      %v1656 = vld [vmem:[%s7 + $0x28] sm:$0xf]
      %v1657 = vld [vmem:[%s7 + $0x2c] sm:$0xf]
      %v1658 = vld [vmem:[%s7 + $0x30] sm:$0xf]
      %v1659 = vld [vmem:[%s7 + $0x34] sm:$0xf]
      %v1660 = vld [vmem:[%s7 + $0x38] sm:$0xf]
      %v1661 = vld [vmem:[%s7 + $0x3c] sm:$0xf]
      %v1662 = vld [vmem:[%s7 + $0x40] sm:$0xf]
      %v1663 = vld [vmem:[%s7 + $0x44] sm:$0xf]
      %v1664 = vld [vmem:[%s7 + $0x48] sm:$0xf]
      %v1665 = vld [vmem:[%s7 + $0x4c] sm:$0xf]
      %v1666 = vld [vmem:[%s7 + $0x50] sm:$0xf]
      %v1667 = vld [vmem:[%s7 + $0x54] sm:$0xf]
      %v1668 = vld [vmem:[%s7 + $0x58] sm:$0xf]
      %v1669 = vld [vmem:[%s7 + $0x5c] sm:$0xf]
      %v1670 = vld [vmem:[%s7 + $0x60] sm:$0xf]
      %v1671 = vld [vmem:[%s7 + $0x64] sm:$0xf]
      %v1672 = vld [vmem:[%s7 + $0x68] sm:$0xf]
      %v1673 = vld [vmem:[%s7 + $0x6c] sm:$0xf]
      %v1674 = vld [vmem:[%s7 + $0x70] sm:$0xf]
      %v1675 = vld [vmem:[%s7 + $0x74] sm:$0xf]
      %v1676 = vld [vmem:[%s7 + $0x78] sm:$0xf]
      %v1677 = vld [vmem:[%s7 + $0x7c] sm:$0xf]
      %v1710 = vunpack.c.l.b16 %v1646
      %v1711 = vunpack.c.l.b16 %v1647
      %v1712 = vunpack.c.l.b16 %v1648
      %v1713 = vunpack.c.l.b16 %v1649
      %v1714 = vunpack.c.l.b16 %v1650
      %v1715 = vunpack.c.l.b16 %v1651
      %v1716 = vunpack.c.l.b16 %v1652
      %v1717 = vunpack.c.l.b16 %v1653
      %v1718 = vunpack.c.l.b16 %v1654
      %v1719 = vunpack.c.l.b16 %v1655
      %v1720 = vunpack.c.l.b16 %v1656
      %v1721 = vunpack.c.l.b16 %v1657
      %v1722 = vunpack.c.l.b16 %v1658
      %v1723 = vunpack.c.l.b16 %v1659
      %v1724 = vunpack.c.l.b16 %v1660
      %v1725 = vunpack.c.l.b16 %v1661
      %v1726 = vunpack.c.l.b16 %v1662
      %v1727 = vunpack.c.l.b16 %v1663
      %v1728 = vunpack.c.l.b16 %v1664
      %v1729 = vunpack.c.l.b16 %v1665
      %v1730 = vunpack.c.l.b16 %v1666
      %v1731 = vunpack.c.l.b16 %v1667
      %v1732 = vunpack.c.l.b16 %v1668
      %v1733 = vunpack.c.l.b16 %v1669
      %v1734 = vunpack.c.l.b16 %v1670
      %v1735 = vunpack.c.l.b16 %v1671
      %v1736 = vunpack.c.l.b16 %v1672
      %v1737 = vunpack.c.l.b16 %v1673
      %v1738 = vunpack.c.l.b16 %v1674
      %v1739 = vunpack.c.l.b16 %v1675
      %v1740 = vunpack.c.l.b16 %v1676
      %v1741 = vunpack.c.l.b16 %v1677
      %v1742 = vpack.c.b16 %v1711, %v1710
      %v1743 = vpack.c.b16 %v1713, %v1712
      %v1744 = vpack.c.b16 %v1715, %v1714
      %v1745 = vpack.c.b16 %v1717, %v1716
      %v1746 = vpack.c.b16 %v1719, %v1718
      %v1747 = vpack.c.b16 %v1721, %v1720
      %v1748 = vpack.c.b16 %v1723, %v1722
      %v1749 = vpack.c.b16 %v1725, %v1724
      %v1750 = vpack.c.b16 %v1727, %v1726
      %v1751 = vpack.c.b16 %v1729, %v1728
      %v1752 = vpack.c.b16 %v1731, %v1730
      %v1753 = vpack.c.b16 %v1733, %v1732
      %v1754 = vpack.c.b16 %v1735, %v1734
      %v1755 = vpack.c.b16 %v1737, %v1736
      %v1756 = vpack.c.b16 %v1739, %v1738
      %v1757 = vpack.c.b16 %v1741, %v1740
      %1774 = vmatprep.subr.bf16.mxu0 0
      %1775 = vmatpush1.bf16.msra.mxu0 %v1749
      %1776 = vmatprep.subr.bf16.mxu0 0
      %1777 = vmatpush1.bf16.msra.mxu0 %v1748
      %1778 = vmatprep.subr.bf16.mxu0 0
      %1779 = vmatpush1.bf16.msra.mxu0 %v1747
      %1780 = vmatprep.subr.bf16.mxu0 0
      %1781 = vmatpush1.bf16.msra.mxu0 %v1746
      %1782 = vmatprep.subr.bf16.mxu0 0
      %1783 = vmatpush1.bf16.msra.mxu0 %v1745
      %1784 = vmatprep.subr.bf16.mxu0 0
      %1785 = vmatpush1.bf16.msra.mxu0 %v1744
      %1786 = vmatprep.subr.bf16.mxu0 0
      %1787 = vmatpush1.bf16.msra.mxu0 %v1743
      %1788 = vmatprep.subr.bf16.mxu0 0
      %1789 = vmatpush1.bf16.msra.mxu0 %v1742
      %1790 = vmatprep.subr.bf16.mxu0 0
      %1791 = vmatpush2.bf16.msra.mxu0 %v1757
      %1792 = vmatprep.subr.bf16.mxu0 0
      %1793 = vmatpush2.bf16.msra.mxu0 %v1756
      %1794 = vmatprep.subr.bf16.mxu0 0
      %1795 = vmatpush2.bf16.msra.mxu0 %v1755
      %1796 = vmatprep.subr.bf16.mxu0 0
      %1797 = vmatpush2.bf16.msra.mxu0 %v1754
      %1798 = vmatprep.subr.bf16.mxu0 0
      %1799 = vmatpush2.bf16.msra.mxu0 %v1753
      %1800 = vmatprep.subr.bf16.mxu0 0
      %1801 = vmatpush2.bf16.msra.mxu0 %v1752
      %1802 = vmatprep.subr.bf16.mxu0 0
      %1803 = vmatpush2.bf16.msra.mxu0 %v1751
      %1804 = vmatprep.subr.bf16.mxu0 0
      %1805 = vmatpush2.bf16.msra.mxu0 %v1750
      %1806 = vmatprep.mubr.bf16.mxu0 %v1631
      %1807 = vmatmul.mubr.bf16.gmra.mxu0 %v1630
      %v1808 = vpop.f32.mrf.mxu0
      %v1809 = vadd.f32 0.0, %v1808
      %v1810 = vpop.f32.mrf.mxu0
      %v1811 = vpop.f32.mrf.mxu0
      %v1812 = vadd.f32 0.0, %v1811
      %v1813 = vpop.f32.mrf.mxu0
      %1814 = vmatprep.mubr.bf16.mxu0 %v1633
      %1815 = vmatmul.mubr.bf16.gmra.mxu0 %v1632
      %v1816 = vpop.f32.mrf.mxu0
      %v1817 = vadd.f32 0.0, %v1816
      %v1818 = vpop.f32.mrf.mxu0
      %v1819 = vpop.f32.mrf.mxu0
      %v1820 = vadd.f32 0.0, %v1819
      %v1821 = vpop.f32.mrf.mxu0
      %1822 = vmatprep.mubr.bf16.mxu0 %v1635
      %1823 = vmatmul.mubr.bf16.gmra.mxu0 %v1634
      %v1824 = vpop.f32.mrf.mxu0
      %v1825 = vadd.f32 0.0, %v1824
      %v1826 = vpop.f32.mrf.mxu0
      %v1827 = vpop.f32.mrf.mxu0
      %v1828 = vadd.f32 0.0, %v1827
      %v1829 = vpop.f32.mrf.mxu0
      %1830 = vmatprep.mubr.bf16.mxu0 %v1637
      %1831 = vmatmul.mubr.bf16.gmra.mxu0 %v1636
      %v1832 = vpop.f32.mrf.mxu0
      %v1833 = vadd.f32 0.0, %v1832
      %v1834 = vpop.f32.mrf.mxu0
      %v1835 = vpop.f32.mrf.mxu0
      %v1836 = vadd.f32 0.0, %v1835
      %v1837 = vpop.f32.mrf.mxu0
      %1838 = vmatprep.mubr.bf16.mxu0 %v1639
      %1839 = vmatmul.mubr.bf16.gmra.mxu0 %v1638
      %v1840 = vpop.f32.mrf.mxu0
      %v1841 = vadd.f32 0.0, %v1840
      %v1842 = vpop.f32.mrf.mxu0
      %v1843 = vpop.f32.mrf.mxu0
      %v1844 = vadd.f32 0.0, %v1843
      %v1845 = vpop.f32.mrf.mxu0
      %1846 = vmatprep.mubr.bf16.mxu0 %v1641
      %1847 = vmatmul.mubr.bf16.gmra.mxu0 %v1640
      %v1848 = vpop.f32.mrf.mxu0
      %v1849 = vadd.f32 0.0, %v1848
      %v1850 = vpop.f32.mrf.mxu0
      %v1851 = vpop.f32.mrf.mxu0
      %v1852 = vadd.f32 0.0, %v1851
      %v1853 = vpop.f32.mrf.mxu0
      %1854 = vmatprep.mubr.bf16.mxu0 %v1643
      %1855 = vmatmul.mubr.bf16.gmra.mxu0 %v1642
      %v1856 = vpop.f32.mrf.mxu0
      %v1857 = vadd.f32 0.0, %v1856
      %v1858 = vpop.f32.mrf.mxu0
      %v1859 = vpop.f32.mrf.mxu0
      %v1860 = vadd.f32 0.0, %v1859
      %v1861 = vpop.f32.mrf.mxu0
      %1862 = vmatprep.mubr.bf16.mxu0 %v1645
      %1863 = vmatmul.mubr.bf16.gmra.mxu0 %v1644
      %v1864 = vpop.f32.mrf.mxu0
      %v1865 = vadd.f32 0.0, %v1864
      %v1866 = vpop.f32.mrf.mxu0
      %v1867 = vpop.f32.mrf.mxu0
      %v1868 = vadd.f32 0.0, %v1867
      %v1869 = vpop.f32.mrf.mxu0
      %1870 = vdwg.mxu0
      %v1871 = vadd.f32 %v1582, %v1809
      %v1872 = vadd.f32 %v1583, %v1812
      %v1873 = vadd.f32 %v1584, %v1817
      %v1874 = vadd.f32 %v1585, %v1820
      %v1875 = vadd.f32 %v1586, %v1825
      %v1876 = vadd.f32 %v1587, %v1828
      %v1877 = vadd.f32 %v1588, %v1833
      %v1878 = vadd.f32 %v1589, %v1836
      %v1879 = vadd.f32 %v1590, %v1841
      %v1880 = vadd.f32 %v1591, %v1844
      %v1881 = vadd.f32 %v1592, %v1849
      %v1882 = vadd.f32 %v1593, %v1852
      %v1883 = vadd.f32 %v1594, %v1857
      %v1884 = vadd.f32 %v1595, %v1860
      %v1885 = vadd.f32 %v1596, %v1865
      %v1886 = vadd.f32 %v1597, %v1868
      %v1887 = vld [vmem:[%s8] sm:$0x1]
      %v1889 = vlaneseq
      %v1890 = vshrl.u32 %v1889, 7
      %v1891 = vsub.s32 0, %v1890
      %v1892 = vrot.slane %v1887, %v1891
      %v1894 = vadd.f32 %v1871, %v1892
      %v1895 = vadd.f32 %v1872, %v1892
      %v1896 = vadd.f32 %v1873, %v1892
      %v1897 = vadd.f32 %v1874, %v1892
      %v1898 = vadd.f32 %v1875, %v1892
      %v1899 = vadd.f32 %v1876, %v1892
      %v1900 = vadd.f32 %v1877, %v1892
      %v1901 = vadd.f32 %v1878, %v1892
      %v1902 = vadd.f32 %v1879, %v1892
      %v1903 = vadd.f32 %v1880, %v1892
      %v1904 = vadd.f32 %v1881, %v1892
      %v1905 = vadd.f32 %v1882, %v1892
      %v1906 = vadd.f32 %v1883, %v1892
      %v1907 = vadd.f32 %v1884, %v1892
      %v1908 = vadd.f32 %v1885, %v1892
      %v1909 = vadd.f32 %v1886, %v1892
      %1910 = vst [vmem:[#allocation6] sm:$0xff] %v1894
      %1911 = vst [vmem:[#allocation6 + $0x8] sm:$0xff] %v1895
      %1912 = vst [vmem:[#allocation6 + $0x10] sm:$0xff] %v1896
      %1913 = vst [vmem:[#allocation6 + $0x18] sm:$0xff] %v1897
      %1914 = vst [vmem:[#allocation6 + $0x20] sm:$0xff] %v1898
      %1915 = vst [vmem:[#allocation6 + $0x28] sm:$0xff] %v1899
      %1916 = vst [vmem:[#allocation6 + $0x30] sm:$0xff] %v1900
      %1917 = vst [vmem:[#allocation6 + $0x38] sm:$0xff] %v1901
      %1918 = vst [vmem:[#allocation6 + $0x40] sm:$0xff] %v1902
      %1919 = vst [vmem:[#allocation6 + $0x48] sm:$0xff] %v1903
      %1920 = vst [vmem:[#allocation6 + $0x50] sm:$0xff] %v1904
      %1921 = vst [vmem:[#allocation6 + $0x58] sm:$0xff] %v1905
      %1922 = vst [vmem:[#allocation6 + $0x60] sm:$0xff] %v1906
      %1923 = vst [vmem:[#allocation6 + $0x68] sm:$0xff] %v1907
      %1924 = vst [vmem:[#allocation6 + $0x70] sm:$0xff] %v1908
      %1925 = vst [vmem:[#allocation6 + $0x78] sm:$0xff] %v1909
    $region49: #{h2gcn_forward.5} parent=1 // pred_fallthru
      _
    // Predicated region
    $region50: #{h2gcn_forward.5} parent=1 // pred_check
      _
    $region51: #{h2gcn_forward.5} parent=1 // pred_check_branch
      %1927 = sbr.rel (0) target = $region53
    $region52: #{h2gcn_forward.5} parent=1 // pred_region
      %s1929 = ssub.s32 2048, 2048
      %1930 = vsyncadd [#allocation5], %s1929
      %s1931 = sshll.u32 [#allocation6], 4
      %s1932 = int_to_ptr.vmem [resolvable:$true] %s1931
      %1937 = dma.vmem_to_hbm [thread:$0]  %s1932, 2048, %s9, [#allocation5], 128, 128, 8
    $region53: #{h2gcn_forward.5} parent=1 // pred_fallthru
      _
    // Predicated region
    $region54: #{h2gcn_forward.5} parent=1 // pred_check
      _
    $region55: #{h2gcn_forward.5} parent=1 // pred_check_branch
      %1939 = sbr.rel (0) target = $region57
    $region56: #{h2gcn_forward.5} parent=1 // pred_region
      %1940 = dma.done [#allocation5], 2048
    $region57: #{h2gcn_forward.5} parent=1 // pred_fallthru
      _
    %1941 = vsyncpa [#allocation4], 1
    %1942 = vsyncpa [#allocation5], 1

</llo_original>
